<compile_context>
chip_gen: v6e
topology: v6e:2x2x1
jax: 0.10.0
libtpu: 0.0.40
codegen_flags: <defaults>
</compile_context>

<pallas_src>
import functools

import jax
import jax.numpy as jnp
from jax.experimental import pallas as pl
from jax.experimental.pallas import tpu as pltpu


def _upblock_final_kernel(x1_ref, x2_ref, w1_ref, b1_ref, w2_ref, b2_ref,
                          o_ref, zpad_ref, patch1_ref, y1p_ref, patch2_ref,
                          *, k1, k2):
    # x1_ref: (1, H, W, C1)   inputs1 (also the residual)
    # x2_ref: (1, H, W, C2)   inputs2 (u-connection)
    # w1_ref: (k1*k1*Cin, Chid)   conv1 weights, tap-major / channel-fastest
    # b1_ref: (1, Chid)
    # w2_ref: (k2*k2*Chid, Cout)  conv2 weights
    # b2_ref: (1, Cout)
    # o_ref : (1, H, W, Cout)
    _, H, W, C1 = x1_ref.shape
    C2 = x2_ref.shape[-1]
    Cin = C1 + C2
    Chid = b1_ref.shape[-1]
    Cout = o_ref.shape[-1]
    cdt = patch1_ref.dtype  # matmul operand dtype (f32 or bf16)

    x1v = x1_ref[0]  # load once; reused for ReLU input and the residual add

    # ---- Stage 1: ReLU + channel concat + reflect-pad(1,1,1,1) into scratch.
    # Pad width is 1 so reflection is a plain slice copy (row/col index 1).
    zpad_ref[1:H + 1, 1:W + 1, 0:C1] = jnp.maximum(x1v, 0.0)
    zpad_ref[1:H + 1, 1:W + 1, C1:Cin] = jnp.maximum(x2_ref[0], 0.0)
    # top / bottom rows (interior columns), then left / right columns
    # (reading the already-reflected rows gives the correct corner values).
    zpad_ref[0:1, 1:W + 1, :] = zpad_ref[2:3, 1:W + 1, :]
    zpad_ref[H + 1:H + 2, 1:W + 1, :] = zpad_ref[H - 1:H, 1:W + 1, :]
    zpad_ref[:, 0:1, :] = zpad_ref[:, 2:3, :]
    zpad_ref[:, W + 1:W + 2, :] = zpad_ref[:, W - 1:W, :]

    # ---- Stage 2: im2col (H*W, k1*k1*Cin) then ONE deep-K matmul + bias + ReLU.
    for i in range(k1):
        for j in range(k1):
            t = i * k1 + j
            tap = zpad_ref[i:i + H, j:j + W, :].reshape(H * W, Cin)
            patch1_ref[:, t * Cin:(t + 1) * Cin] = tap.astype(cdt)
    h1 = jnp.dot(patch1_ref[...], w1_ref[...],
                 preferred_element_type=jnp.float32)
    h1 = jnp.maximum(h1 + b1_ref[...], 0.0)  # (H*W, Chid), f32

    # ---- Stage 3: reflect-pad(left=1, right=0, top=1, bottom=0) for k=2 conv.
    y1 = h1.reshape(H, W, Chid)
    y1p_ref[1:H + 1, 1:W + 1, :] = y1
    y1p_ref[0:1, 1:W + 1, :] = y1p_ref[2:3, 1:W + 1, :]
    y1p_ref[:, 0:1, :] = y1p_ref[:, 2:3, :]

    # ---- Stage 4: im2col for the 2x2 conv -> ONE matmul, bias, residual add.
    for i in range(k2):
        for j in range(k2):
            t = i * k2 + j
            tap = y1p_ref[i:i + H, j:j + W, :].reshape(H * W, Chid)
            patch2_ref[:, t * Chid:(t + 1) * Chid] = tap.astype(cdt)
    h2 = jnp.dot(patch2_ref[...], w2_ref[...],
                 preferred_element_type=jnp.float32)
    h2 = h2 + b2_ref[...] + x1v.reshape(H * W, Cout)
    o_ref[...] = h2.reshape(1, H, W, Cout).astype(o_ref.dtype)


def upblock_final_layer(x1_nchw, x2_nchw, w1_oihw, b1, w2_oihw, b2,
                        *, compute_dtype=jnp.float32):
    """Fused UpBlock_FinalLayer forward.

    x1_nchw: (N, C1, H, W)  inputs1 (previous UpBlock), also the residual.
    x2_nchw: (N, C2, H, W)  inputs2 (u-connection).
    w1_oihw: (Chid, C1+C2, 3, 3), b1: (Chid,)   -- ConvSamePad2d(k=3)
    w2_oihw: (Cout, Chid, 2, 2),  b2: (Cout,)   -- ConvSamePad2d(k=2)
    Returns (N, Cout, H, W) with Cout == C1.
    """
    N, C1, H, W = x1_nchw.shape
    C2 = x2_nchw.shape[1]
    Cin = C1 + C2
    Chid = w1_oihw.shape[0]
    Cout = w2_oihw.shape[0]
    k1 = w1_oihw.shape[-1]
    k2 = w2_oihw.shape[-1]
    assert Cout == C1, "residual add requires out_channels == inputs1 channels"
    assert w1_oihw.shape[1] == Cin and w2_oihw.shape[1] == Chid

    # NCHW -> NHWC only at the boundary; the fused chain stays NHWC in VMEM.
    x1 = jnp.transpose(x1_nchw, (0, 2, 3, 1))
    x2 = jnp.transpose(x2_nchw, (0, 2, 3, 1))

    # OIHW -> (kh*kw*Cin, Cout), tap-major / channel-fastest (matches im2col).
    w1r = jnp.transpose(w1_oihw, (2, 3, 1, 0)).reshape(k1 * k1 * Cin, Chid)
    w2r = jnp.transpose(w2_oihw, (2, 3, 1, 0)).reshape(k2 * k2 * Chid, Cout)
    w1r = w1r.astype(compute_dtype)
    w2r = w2r.astype(compute_dtype)
    b1r = b1.reshape(1, Chid).astype(jnp.float32)
    b2r = b2.reshape(1, Cout).astype(jnp.float32)

    kernel = functools.partial(_upblock_final_kernel, k1=k1, k2=k2)

    itemsize = jnp.dtype(compute_dtype).itemsize
    flops = 2 * N * H * W * (k1 * k1 * Cin * Chid + k2 * k2 * Chid * Cout)
    bytes_accessed = (
        4 * (x1.size + x2.size + N * H * W * Cout)
        + itemsize * (w1r.size + w2r.size)
        + 4 * (b1r.size + b2r.size))

    out_nhwc = pl.pallas_call(
        kernel,
        out_shape=jax.ShapeDtypeStruct((N, H, W, Cout), x1.dtype),
        grid_spec=pltpu.PrefetchScalarGridSpec(
            num_scalar_prefetch=0,
            grid=(N,),  # one grid step per batch element
            in_specs=[
                pl.BlockSpec((1, H, W, C1), lambda n: (n, 0, 0, 0)),
                pl.BlockSpec((1, H, W, C2), lambda n: (n, 0, 0, 0)),
                pl.BlockSpec((k1 * k1 * Cin, Chid), lambda n: (0, 0)),
                pl.BlockSpec((1, Chid), lambda n: (0, 0)),
                pl.BlockSpec((k2 * k2 * Chid, Cout), lambda n: (0, 0)),
                pl.BlockSpec((1, Cout), lambda n: (0, 0)),
            ],
            out_specs=pl.BlockSpec((1, H, W, Cout), lambda n: (n, 0, 0, 0)),
            scratch_shapes=[
                pltpu.VMEM((H + 2, W + 2, Cin), jnp.float32),        # zpad
                pltpu.VMEM((H * W, k1 * k1 * Cin), compute_dtype),   # im2col 1
                pltpu.VMEM((H + 1, W + 1, Chid), jnp.float32),       # y1 padded
                pltpu.VMEM((H * W, k2 * k2 * Chid), compute_dtype),  # im2col 2
            ]),
        compiler_params=pltpu.CompilerParams(
            dimension_semantics=("parallel",),
            vmem_limit_bytes=32 * 1024 * 1024),
        cost_estimate=pl.CostEstimate(
            flops=flops, transcendentals=0, bytes_accessed=bytes_accessed),
    )(x1, x2, w1r, b1r, w2r, b2r)

    return jnp.transpose(out_nhwc, (0, 3, 1, 2))  # back to NCHW


if __name__ == "__main__":
    N, C1, C2, Chid, H, W = 2, 4, 4, 16, 16, 16
    Cin, Cout = C1 + C2, C1
    K1, K2 = 3, 2

    key = jax.random.PRNGKey(0)
    kx1, kx2, kw1, kb1, kw2, kb2 = jax.random.split(key, 6)
    x1 = jax.random.normal(kx1, (N, C1, H, W), dtype=jnp.float32)
    x2 = jax.random.normal(kx2, (N, C2, H, W), dtype=jnp.float32)
    w1 = 0.1 * jax.random.normal(kw1, (Chid, Cin, K1, K1), dtype=jnp.float32)
    b1 = 0.1 * jax.random.normal(kb1, (Chid,), dtype=jnp.float32)
    w2 = 0.1 * jax.random.normal(kw2, (Cout, Chid, K2, K2), dtype=jnp.float32)
    b2 = 0.1 * jax.random.normal(kb2, (Cout,), dtype=jnp.float32)

    out = upblock_final_layer(x1, x2, w1, b1, w2, b2)
    out = jax.block_until_ready(out)
    assert out.shape == (N, Cout, H, W)

    # Pure-JAX reference of the PyTorch forward (concat -> ReLU -> reflect-pad
    # + conv3x3 -> ReLU -> reflect-pad(left/top only) + conv2x2 -> +inputs1).
    def ref_fwd(a, b):
        z = jnp.maximum(jnp.concatenate([a, b], axis=1), 0.0)
        zp = jnp.pad(z, ((0, 0), (0, 0), (1, 1), (1, 1)), mode="reflect")
        y = jax.lax.conv_general_dilated(
            zp, w1, (1, 1), "VALID",
            dimension_numbers=("NCHW", "OIHW", "NCHW")) + b1[None, :, None, None]
        y = jnp.maximum(y, 0.0)
        yp = jnp.pad(y, ((0, 0), (0, 0), (1, 0), (1, 0)), mode="reflect")
        o = jax.lax.conv_general_dilated(
            yp, w2, (1, 1), "VALID",
            dimension_numbers=("NCHW", "OIHW", "NCHW")) + b2[None, :, None, None]
        return o + a

    ref = ref_fwd(x1, x2)
    assert jnp.allclose(out, ref, atol=1e-4, rtol=1e-4), "mismatch vs reference"

    print("KERNEL_OK")
</pallas_src>

<mosaic_0001>
module attributes {stable_mosaic.version = 11 : i64} {
  func.func @_upblock_final_kernel(%arg0: i32, %arg1: memref<1x16x16x4xf32, #tpu.memory_space<vmem>>, %arg2: memref<1x16x16x4xf32, #tpu.memory_space<vmem>>, %arg3: memref<72x16xf32, #tpu.memory_space<vmem>>, %arg4: memref<1x16xf32, #tpu.memory_space<vmem>>, %arg5: memref<64x4xf32, #tpu.memory_space<vmem>>, %arg6: memref<1x4xf32, #tpu.memory_space<vmem>>, %arg7: memref<1x16x16x4xf32, #tpu.memory_space<vmem>>, %arg8: memref<18x18x8xf32, #tpu.memory_space<vmem>>, %arg9: memref<256x72xf32, #tpu.memory_space<vmem>>, %arg10: memref<17x17x16xf32, #tpu.memory_space<vmem>>, %arg11: memref<256x64xf32, #tpu.memory_space<vmem>>) attributes {dimension_semantics = [#tpu.dimension_semantics<parallel>], iteration_bounds = array<i64: 2>, scalar_prefetch = 0 : i64, scratch_operands = 4 : i64, tpu.core_type = #tpu.core_type<tc>, window_params = [{transform_indices = @transform_0, window_bounds = array<i64: 1, 16, 16, 4>}, {transform_indices = @transform_1, window_bounds = array<i64: 1, 16, 16, 4>}, {pipeline_mode = #tpu.pipeline_mode<synchronous>, transform_indices = @transform_2, window_bounds = array<i64: 72, 16>}, {pipeline_mode = #tpu.pipeline_mode<synchronous>, transform_indices = @transform_3, window_bounds = array<i64: 1, 16>}, {pipeline_mode = #tpu.pipeline_mode<synchronous>, transform_indices = @transform_4, window_bounds = array<i64: 64, 4>}, {pipeline_mode = #tpu.pipeline_mode<synchronous>, transform_indices = @transform_5, window_bounds = array<i64: 1, 4>}, {transform_indices = @transform_6, window_bounds = array<i64: 1, 16, 16, 4>}]} {
    %c0 = arith.constant 0 : index
    %c0_0 = arith.constant 0 : index
    %c0_1 = arith.constant 0 : index
    %c0_2 = arith.constant 0 : index
    %0 = vector.load %arg1[%c0, %c0_0, %c0_1, %c0_2] : memref<1x16x16x4xf32, #tpu.memory_space<vmem>>, vector<1x16x16x4xf32>
    %1 = vector.shape_cast %0 : vector<1x16x16x4xf32> to vector<16x16x4xf32>
    %cst = arith.constant 0.000000e+00 : f32
    %2 = vector.broadcast %cst : f32 to vector<16x16x4xf32>
    %3 = arith.maximumf %1, %2 : vector<16x16x4xf32>
    %c1 = arith.constant 1 : index
    %c1_3 = arith.constant 1 : index
    %c0_4 = arith.constant 0 : index
    %4 = vector.load %arg8[%c1, %c1_3, %c0_4] : memref<18x18x8xf32, #tpu.memory_space<vmem>>, vector<16x16x4xf32>
    tpu.vector_store %arg8[%c1, %c1_3, %c0_4], %3 {strides = array<i32>} : memref<18x18x8xf32, #tpu.memory_space<vmem>>, vector<16x16x4xf32>,
    %c0_5 = arith.constant 0 : index
    %c0_6 = arith.constant 0 : index
    %c0_7 = arith.constant 0 : index
    %c0_8 = arith.constant 0 : index
    %5 = vector.load %arg2[%c0_5, %c0_6, %c0_7, %c0_8] : memref<1x16x16x4xf32, #tpu.memory_space<vmem>>, vector<1x16x16x4xf32>
    %6 = vector.shape_cast %5 : vector<1x16x16x4xf32> to vector<16x16x4xf32>
    %cst_9 = arith.constant 0.000000e+00 : f32
    %7 = vector.broadcast %cst_9 : f32 to vector<16x16x4xf32>
    %8 = arith.maximumf %6, %7 : vector<16x16x4xf32>
    %c1_10 = arith.constant 1 : index
    %c1_11 = arith.constant 1 : index
    %c4 = arith.constant 4 : index
    %9 = vector.load %arg8[%c1_10, %c1_11, %c4] : memref<18x18x8xf32, #tpu.memory_space<vmem>>, vector<16x16x4xf32>
    tpu.vector_store %arg8[%c1_10, %c1_11, %c4], %8 {strides = array<i32>} : memref<18x18x8xf32, #tpu.memory_space<vmem>>, vector<16x16x4xf32>,
    %c2 = arith.constant 2 : index
    %c1_12 = arith.constant 1 : index
    %c0_13 = arith.constant 0 : index
    %10 = vector.load %arg8[%c2, %c1_12, %c0_13] : memref<18x18x8xf32, #tpu.memory_space<vmem>>, vector<1x16x8xf32>
    %c0_14 = arith.constant 0 : index
    %c1_15 = arith.constant 1 : index
    %c0_16 = arith.constant 0 : index
    %11 = vector.load %arg8[%c0_14, %c1_15, %c0_16] : memref<18x18x8xf32, #tpu.memory_space<vmem>>, vector<1x16x8xf32>
    tpu.vector_store %arg8[%c0_14, %c1_15, %c0_16], %10 {strides = array<i32>} : memref<18x18x8xf32, #tpu.memory_space<vmem>>, vector<1x16x8xf32>,
    %c15 = arith.constant 15 : index
    %c1_17 = arith.constant 1 : index
    %c0_18 = arith.constant 0 : index
    %12 = vector.load %arg8[%c15, %c1_17, %c0_18] : memref<18x18x8xf32, #tpu.memory_space<vmem>>, vector<1x16x8xf32>
    %c17 = arith.constant 17 : index
    %c1_19 = arith.constant 1 : index
    %c0_20 = arith.constant 0 : index
    %13 = vector.load %arg8[%c17, %c1_19, %c0_20] : memref<18x18x8xf32, #tpu.memory_space<vmem>>, vector<1x16x8xf32>
    tpu.vector_store %arg8[%c17, %c1_19, %c0_20], %12 {strides = array<i32>} : memref<18x18x8xf32, #tpu.memory_space<vmem>>, vector<1x16x8xf32>,
    %c0_21 = arith.constant 0 : index
    %c2_22 = arith.constant 2 : index
    %c0_23 = arith.constant 0 : index
    %14 = vector.load %arg8[%c0_21, %c2_22, %c0_23] : memref<18x18x8xf32, #tpu.memory_space<vmem>>, vector<18x1x8xf32>
    %c0_24 = arith.constant 0 : index
    %c0_25 = arith.constant 0 : index
    %c0_26 = arith.constant 0 : index
    %15 = vector.load %arg8[%c0_24, %c0_25, %c0_26] : memref<18x18x8xf32, #tpu.memory_space<vmem>>, vector<18x1x8xf32>
    tpu.vector_store %arg8[%c0_24, %c0_25, %c0_26], %14 {strides = array<i32>} : memref<18x18x8xf32, #tpu.memory_space<vmem>>, vector<18x1x8xf32>,
    %c0_27 = arith.constant 0 : index
    %c15_28 = arith.constant 15 : index
    %c0_29 = arith.constant 0 : index
    %16 = vector.load %arg8[%c0_27, %c15_28, %c0_29] : memref<18x18x8xf32, #tpu.memory_space<vmem>>, vector<18x1x8xf32>
    %c0_30 = arith.constant 0 : index
    %c17_31 = arith.constant 17 : index
    %c0_32 = arith.constant 0 : index
    %17 = vector.load %arg8[%c0_30, %c17_31, %c0_32] : memref<18x18x8xf32, #tpu.memory_space<vmem>>, vector<18x1x8xf32>
    tpu.vector_store %arg8[%c0_30, %c17_31, %c0_32], %16 {strides = array<i32>} : memref<18x18x8xf32, #tpu.memory_space<vmem>>, vector<18x1x8xf32>,
    %c0_33 = arith.constant 0 : index
    %c0_34 = arith.constant 0 : index
    %c0_35 = arith.constant 0 : index
    %18 = vector.load %arg8[%c0_33, %c0_34, %c0_35] : memref<18x18x8xf32, #tpu.memory_space<vmem>>, vector<16x16x8xf32>
    %19 = vector.shape_cast %18 : vector<16x16x8xf32> to vector<256x8xf32>
    %c0_36 = arith.constant 0 : index
    %c0_37 = arith.constant 0 : index
    %20 = vector.load %arg9[%c0_36, %c0_37] : memref<256x72xf32, #tpu.memory_space<vmem>>, vector<256x8xf32>
    tpu.vector_store %arg9[%c0_36, %c0_37], %19 {strides = array<i32>} : memref<256x72xf32, #tpu.memory_space<vmem>>, vector<256x8xf32>,
    %c0_38 = arith.constant 0 : index
    %c1_39 = arith.constant 1 : index
    %c0_40 = arith.constant 0 : index
    %21 = vector.load %arg8[%c0_38, %c1_39, %c0_40] : memref<18x18x8xf32, #tpu.memory_space<vmem>>, vector<16x16x8xf32>
    %22 = vector.shape_cast %21 : vector<16x16x8xf32> to vector<256x8xf32>
    %c0_41 = arith.constant 0 : index
    %c8 = arith.constant 8 : index
    %23 = vector.load %arg9[%c0_41, %c8] : memref<256x72xf32, #tpu.memory_space<vmem>>, vector<256x8xf32>
    tpu.vector_store %arg9[%c0_41, %c8], %22 {strides = array<i32>} : memref<256x72xf32, #tpu.memory_space<vmem>>, vector<256x8xf32>,
    %c0_42 = arith.constant 0 : index
    %c2_43 = arith.constant 2 : index
    %c0_44 = arith.constant 0 : index
    %24 = vector.load %arg8[%c0_42, %c2_43, %c0_44] : memref<18x18x8xf32, #tpu.memory_space<vmem>>, vector<16x16x8xf32>
    %25 = vector.shape_cast %24 : vector<16x16x8xf32> to vector<256x8xf32>
    %c0_45 = arith.constant 0 : index
    %c16 = arith.constant 16 : index
    %26 = vector.load %arg9[%c0_45, %c16] : memref<256x72xf32, #tpu.memory_space<vmem>>, vector<256x8xf32>
    tpu.vector_store %arg9[%c0_45, %c16], %25 {strides = array<i32>} : memref<256x72xf32, #tpu.memory_space<vmem>>, vector<256x8xf32>,
    %c1_46 = arith.constant 1 : index
    %c0_47 = arith.constant 0 : index
    %c0_48 = arith.constant 0 : index
    %27 = vector.load %arg8[%c1_46, %c0_47, %c0_48] : memref<18x18x8xf32, #tpu.memory_space<vmem>>, vector<16x16x8xf32>
    %28 = vector.shape_cast %27 : vector<16x16x8xf32> to vector<256x8xf32>
    %c0_49 = arith.constant 0 : index
    %c24 = arith.constant 24 : index
    %29 = vector.load %arg9[%c0_49, %c24] : memref<256x72xf32, #tpu.memory_space<vmem>>, vector<256x8xf32>
    tpu.vector_store %arg9[%c0_49, %c24], %28 {strides = array<i32>} : memref<256x72xf32, #tpu.memory_space<vmem>>, vector<256x8xf32>,
    %c1_50 = arith.constant 1 : index
    %c1_51 = arith.constant 1 : index
    %c0_52 = arith.constant 0 : index
    %30 = vector.load %arg8[%c1_50, %c1_51, %c0_52] : memref<18x18x8xf32, #tpu.memory_space<vmem>>, vector<16x16x8xf32>
    %31 = vector.shape_cast %30 : vector<16x16x8xf32> to vector<256x8xf32>
    %c0_53 = arith.constant 0 : index
    %c32 = arith.constant 32 : index
    %32 = vector.load %arg9[%c0_53, %c32] : memref<256x72xf32, #tpu.memory_space<vmem>>, vector<256x8xf32>
    tpu.vector_store %arg9[%c0_53, %c32], %31 {strides = array<i32>} : memref<256x72xf32, #tpu.memory_space<vmem>>, vector<256x8xf32>,
    %c1_54 = arith.constant 1 : index
    %c2_55 = arith.constant 2 : index
    %c0_56 = arith.constant 0 : index
    %33 = vector.load %arg8[%c1_54, %c2_55, %c0_56] : memref<18x18x8xf32, #tpu.memory_space<vmem>>, vector<16x16x8xf32>
    %34 = vector.shape_cast %33 : vector<16x16x8xf32> to vector<256x8xf32>
    %c0_57 = arith.constant 0 : index
    %c40 = arith.constant 40 : index
    %35 = vector.load %arg9[%c0_57, %c40] : memref<256x72xf32, #tpu.memory_space<vmem>>, vector<256x8xf32>
    tpu.vector_store %arg9[%c0_57, %c40], %34 {strides = array<i32>} : memref<256x72xf32, #tpu.memory_space<vmem>>, vector<256x8xf32>,
    %c2_58 = arith.constant 2 : index
    %c0_59 = arith.constant 0 : index
    %c0_60 = arith.constant 0 : index
    %36 = vector.load %arg8[%c2_58, %c0_59, %c0_60] : memref<18x18x8xf32, #tpu.memory_space<vmem>>, vector<16x16x8xf32>
    %37 = vector.shape_cast %36 : vector<16x16x8xf32> to vector<256x8xf32>
    %c0_61 = arith.constant 0 : index
    %c48 = arith.constant 48 : index
    %38 = vector.load %arg9[%c0_61, %c48] : memref<256x72xf32, #tpu.memory_space<vmem>>, vector<256x8xf32>
    tpu.vector_store %arg9[%c0_61, %c48], %37 {strides = array<i32>} : memref<256x72xf32, #tpu.memory_space<vmem>>, vector<256x8xf32>,
    %c2_62 = arith.constant 2 : index
    %c1_63 = arith.constant 1 : index
    %c0_64 = arith.constant 0 : index
    %39 = vector.load %arg8[%c2_62, %c1_63, %c0_64] : memref<18x18x8xf32, #tpu.memory_space<vmem>>, vector<16x16x8xf32>
    %40 = vector.shape_cast %39 : vector<16x16x8xf32> to vector<256x8xf32>
    %c0_65 = arith.constant 0 : index
    %c56 = arith.constant 56 : index
    %41 = vector.load %arg9[%c0_65, %c56] : memref<256x72xf32, #tpu.memory_space<vmem>>, vector<256x8xf32>
    tpu.vector_store %arg9[%c0_65, %c56], %40 {strides = array<i32>} : memref<256x72xf32, #tpu.memory_space<vmem>>, vector<256x8xf32>,
    %c2_66 = arith.constant 2 : index
    %c2_67 = arith.constant 2 : index
    %c0_68 = arith.constant 0 : index
    %42 = vector.load %arg8[%c2_66, %c2_67, %c0_68] : memref<18x18x8xf32, #tpu.memory_space<vmem>>, vector<16x16x8xf32>
    %43 = vector.shape_cast %42 : vector<16x16x8xf32> to vector<256x8xf32>
    %c0_69 = arith.constant 0 : index
    %c64 = arith.constant 64 : index
    %44 = vector.load %arg9[%c0_69, %c64] : memref<256x72xf32, #tpu.memory_space<vmem>>, vector<256x8xf32>
    tpu.vector_store %arg9[%c0_69, %c64], %43 {strides = array<i32>} : memref<256x72xf32, #tpu.memory_space<vmem>>, vector<256x8xf32>,
    %c0_70 = arith.constant 0 : index
    %c0_71 = arith.constant 0 : index
    %45 = vector.load %arg9[%c0_70, %c0_71] : memref<256x72xf32, #tpu.memory_space<vmem>>, vector<256x72xf32>
    %c0_72 = arith.constant 0 : index
    %c0_73 = arith.constant 0 : index
    %46 = vector.load %arg3[%c0_72, %c0_73] : memref<72x16xf32, #tpu.memory_space<vmem>>, vector<72x16xf32>
    %cst_74 = arith.constant dense<0.000000e+00> : vector<256x16xf32>
    %47 = tpu.matmul %45, %46, %cst_74 {dimension_numbers = #tpu.dot_dimension_numbers<[1], [0], [0], [1], [0, 0, 1, 1], [], []>} : vector<256x72xf32>, vector<72x16xf32>, vector<256x16xf32> -> vector<256x16xf32>
    %c0_75 = arith.constant 0 : index
    %c0_76 = arith.constant 0 : index
    %48 = vector.load %arg4[%c0_75, %c0_76] : memref<1x16xf32, #tpu.memory_space<vmem>>, vector<1x16xf32>
    %49 = vector.broadcast %48 : vector<1x16xf32> to vector<256x16xf32>
    %50 = arith.addf %47, %49 : vector<256x16xf32>
    %cst_77 = arith.constant 0.000000e+00 : f32
    %51 = vector.broadcast %cst_77 : f32 to vector<256x16xf32>
    %52 = arith.maximumf %50, %51 : vector<256x16xf32>
    %53 = vector.shape_cast %52 : vector<256x16xf32> to vector<16x16x16xf32>
    %c1_78 = arith.constant 1 : index
    %c1_79 = arith.constant 1 : index
    %c0_80 = arith.constant 0 : index
    %54 = vector.load %arg10[%c1_78, %c1_79, %c0_80] : memref<17x17x16xf32, #tpu.memory_space<vmem>>, vector<16x16x16xf32>
    tpu.vector_store %arg10[%c1_78, %c1_79, %c0_80], %53 {strides = array<i32>} : memref<17x17x16xf32, #tpu.memory_space<vmem>>, vector<16x16x16xf32>,
    %c2_81 = arith.constant 2 : index
    %c1_82 = arith.constant 1 : index
    %c0_83 = arith.constant 0 : index
    %55 = vector.load %arg10[%c2_81, %c1_82, %c0_83] : memref<17x17x16xf32, #tpu.memory_space<vmem>>, vector<1x16x16xf32>
    %c0_84 = arith.constant 0 : index
    %c1_85 = arith.constant 1 : index
    %c0_86 = arith.constant 0 : index
    %56 = vector.load %arg10[%c0_84, %c1_85, %c0_86] : memref<17x17x16xf32, #tpu.memory_space<vmem>>, vector<1x16x16xf32>
    tpu.vector_store %arg10[%c0_84, %c1_85, %c0_86], %55 {strides = array<i32>} : memref<17x17x16xf32, #tpu.memory_space<vmem>>, vector<1x16x16xf32>,
    %c0_87 = arith.constant 0 : index
    %c2_88 = arith.constant 2 : index
    %c0_89 = arith.constant 0 : index
    %57 = vector.load %arg10[%c0_87, %c2_88, %c0_89] : memref<17x17x16xf32, #tpu.memory_space<vmem>>, vector<17x1x16xf32>
    %c0_90 = arith.constant 0 : index
    %c0_91 = arith.constant 0 : index
    %c0_92 = arith.constant 0 : index
    %58 = vector.load %arg10[%c0_90, %c0_91, %c0_92] : memref<17x17x16xf32, #tpu.memory_space<vmem>>, vector<17x1x16xf32>
    tpu.vector_store %arg10[%c0_90, %c0_91, %c0_92], %57 {strides = array<i32>} : memref<17x17x16xf32, #tpu.memory_space<vmem>>, vector<17x1x16xf32>,
    %c0_93 = arith.constant 0 : index
    %c0_94 = arith.constant 0 : index
    %c0_95 = arith.constant 0 : index
    %59 = vector.load %arg10[%c0_93, %c0_94, %c0_95] : memref<17x17x16xf32, #tpu.memory_space<vmem>>, vector<16x16x16xf32>
    %60 = vector.shape_cast %59 : vector<16x16x16xf32> to vector<256x16xf32>
    %c0_96 = arith.constant 0 : index
    %c0_97 = arith.constant 0 : index
    %61 = vector.load %arg11[%c0_96, %c0_97] : memref<256x64xf32, #tpu.memory_space<vmem>>, vector<256x16xf32>
    tpu.vector_store %arg11[%c0_96, %c0_97], %60 {strides = array<i32>} : memref<256x64xf32, #tpu.memory_space<vmem>>, vector<256x16xf32>,
    %c0_98 = arith.constant 0 : index
    %c1_99 = arith.constant 1 : index
    %c0_100 = arith.constant 0 : index
    %62 = vector.load %arg10[%c0_98, %c1_99, %c0_100] : memref<17x17x16xf32, #tpu.memory_space<vmem>>, vector<16x16x16xf32>
    %63 = vector.shape_cast %62 : vector<16x16x16xf32> to vector<256x16xf32>
    %c0_101 = arith.constant 0 : index
    %c16_102 = arith.constant 16 : index
    %64 = vector.load %arg11[%c0_101, %c16_102] : memref<256x64xf32, #tpu.memory_space<vmem>>, vector<256x16xf32>
    tpu.vector_store %arg11[%c0_101, %c16_102], %63 {strides = array<i32>} : memref<256x64xf32, #tpu.memory_space<vmem>>, vector<256x16xf32>,
    %c1_103 = arith.constant 1 : index
    %c0_104 = arith.constant 0 : index
    %c0_105 = arith.constant 0 : index
    %65 = vector.load %arg10[%c1_103, %c0_104, %c0_105] : memref<17x17x16xf32, #tpu.memory_space<vmem>>, vector<16x16x16xf32>
    %66 = vector.shape_cast %65 : vector<16x16x16xf32> to vector<256x16xf32>
    %c0_106 = arith.constant 0 : index
    %c32_107 = arith.constant 32 : index
    %67 = vector.load %arg11[%c0_106, %c32_107] : memref<256x64xf32, #tpu.memory_space<vmem>>, vector<256x16xf32>
    tpu.vector_store %arg11[%c0_106, %c32_107], %66 {strides = array<i32>} : memref<256x64xf32, #tpu.memory_space<vmem>>, vector<256x16xf32>,
    %c1_108 = arith.constant 1 : index
    %c1_109 = arith.constant 1 : index
    %c0_110 = arith.constant 0 : index
    %68 = vector.load %arg10[%c1_108, %c1_109, %c0_110] : memref<17x17x16xf32, #tpu.memory_space<vmem>>, vector<16x16x16xf32>
    %69 = vector.shape_cast %68 : vector<16x16x16xf32> to vector<256x16xf32>
    %c0_111 = arith.constant 0 : index
    %c48_112 = arith.constant 48 : index
    %70 = vector.load %arg11[%c0_111, %c48_112] : memref<256x64xf32, #tpu.memory_space<vmem>>, vector<256x16xf32>
    tpu.vector_store %arg11[%c0_111, %c48_112], %69 {strides = array<i32>} : memref<256x64xf32, #tpu.memory_space<vmem>>, vector<256x16xf32>,
    %c0_113 = arith.constant 0 : index
    %c0_114 = arith.constant 0 : index
    %71 = vector.load %arg11[%c0_113, %c0_114] : memref<256x64xf32, #tpu.memory_space<vmem>>, vector<256x64xf32>
    %c0_115 = arith.constant 0 : index
    %c0_116 = arith.constant 0 : index
    %72 = vector.load %arg5[%c0_115, %c0_116] : memref<64x4xf32, #tpu.memory_space<vmem>>, vector<64x4xf32>
    %cst_117 = arith.constant dense<0.000000e+00> : vector<256x4xf32>
    %73 = tpu.matmul %71, %72, %cst_117 {dimension_numbers = #tpu.dot_dimension_numbers<[1], [0], [0], [1], [0, 0, 1, 1], [], []>} : vector<256x64xf32>, vector<64x4xf32>, vector<256x4xf32> -> vector<256x4xf32>
    %c0_118 = arith.constant 0 : index
    %c0_119 = arith.constant 0 : index
    %74 = vector.load %arg6[%c0_118, %c0_119] : memref<1x4xf32, #tpu.memory_space<vmem>>, vector<1x4xf32>
    %75 = vector.broadcast %74 : vector<1x4xf32> to vector<256x4xf32>
    %76 = arith.addf %73, %75 : vector<256x4xf32>
    %77 = vector.shape_cast %1 : vector<16x16x4xf32> to vector<256x4xf32>
    %78 = arith.addf %76, %77 : vector<256x4xf32>
    %79 = vector.shape_cast %78 : vector<256x4xf32> to vector<1x16x16x4xf32>
    %c0_120 = arith.constant 0 : index
    %c0_121 = arith.constant 0 : index
    %c0_122 = arith.constant 0 : index
    %c0_123 = arith.constant 0 : index
    %80 = vector.load %arg7[%c0_120, %c0_121, %c0_122, %c0_123] : memref<1x16x16x4xf32, #tpu.memory_space<vmem>>, vector<1x16x16x4xf32>
    tpu.vector_store %arg7[%c0_120, %c0_121, %c0_122, %c0_123], %79 {strides = array<i32>} : memref<1x16x16x4xf32, #tpu.memory_space<vmem>>, vector<1x16x16x4xf32>,
    return
  }
  func.func @transform_0(%arg0: i32) -> (i32, i32, i32, i32) {
    %c0_i32 = arith.constant 0 : i32
    %c0_i32_0 = arith.constant 0 : i32
    %c0_i32_1 = arith.constant 0 : i32
    %c0_i32_2 = arith.constant 0 : i32
    return %arg0, %c0_i32, %c0_i32_0, %c0_i32_1 : i32, i32, i32, i32
  }
  func.func @transform_1(%arg0: i32) -> (i32, i32, i32, i32) {
    %c0_i32 = arith.constant 0 : i32
    %c0_i32_0 = arith.constant 0 : i32
    %c0_i32_1 = arith.constant 0 : i32
    %c0_i32_2 = arith.constant 0 : i32
    return %arg0, %c0_i32, %c0_i32_0, %c0_i32_1 : i32, i32, i32, i32
  }
  func.func @transform_2(%arg0: i32) -> (i32, i32) {
    %c0_i32 = arith.constant 0 : i32
    %c0_i32_0 = arith.constant 0 : i32
    %c0_i32_1 = arith.constant 0 : i32
    return %c0_i32, %c0_i32_0 : i32, i32
  }
  func.func @transform_3(%arg0: i32) -> (i32, i32) {
    %c0_i32 = arith.constant 0 : i32
    %c0_i32_0 = arith.constant 0 : i32
    %c0_i32_1 = arith.constant 0 : i32
    return %c0_i32, %c0_i32_0 : i32, i32
  }
  func.func @transform_4(%arg0: i32) -> (i32, i32) {
    %c0_i32 = arith.constant 0 : i32
    %c0_i32_0 = arith.constant 0 : i32
    %c0_i32_1 = arith.constant 0 : i32
    return %c0_i32, %c0_i32_0 : i32, i32
  }
  func.func @transform_5(%arg0: i32) -> (i32, i32) {
    %c0_i32 = arith.constant 0 : i32
    %c0_i32_0 = arith.constant 0 : i32
    %c0_i32_1 = arith.constant 0 : i32
    return %c0_i32, %c0_i32_0 : i32, i32
  }
  func.func @transform_6(%arg0: i32) -> (i32, i32, i32, i32) {
    %c0_i32 = arith.constant 0 : i32
    %c0_i32_0 = arith.constant 0 : i32
    %c0_i32_1 = arith.constant 0 : i32
    %c0_i32_2 = arith.constant 0 : i32
    return %arg0, %c0_i32, %c0_i32_0, %c0_i32_1 : i32, i32, i32, i32
  }
}

</mosaic_0001>

<llo_original>
// kernel: tpu_custom_call.1
$region0: #{tpu_custom_call.1}
  #allocation0 [shape = 'u32[]', space=smem, size = 0x4, offset = 0x4, fixed_abs, tag = 'smem constant byte address 0x4 - core index']
  #allocation1 [shape = 'u32[144,128]{1,0:T(1,128)}', space=vmem, size = 0x12000, scoped, tag = 'internal scratch']
  #allocation2 [shape = 'f32[18,18,8]{2,1,0:T(8,128)}', space=vmem, size = 0x36000, scoped, tag = 'scratch operand']
  #allocation3 [shape = 'f32[256,72]{1,0:T(8,128)}', space=vmem, size = 0x20000, scoped, tag = 'scratch operand']
  #allocation4 [shape = 'f32[17,17,16]{2,1,0:T(8,128)}', space=vmem, size = 0x33000, scoped, tag = 'scratch operand']
  #allocation5 [shape = 'f32[256,64]{1,0:T(8,128)}', space=vmem, size = 0x20000, scoped, tag = 'scratch operand']
  %s0 = inlined_call_operand.vmem [shape: f32[2,16,16,4], index: 0, kind: input, shape index: {}]
  %s1 = inlined_call_operand.vmem [shape: f32[2,16,16,4], index: 1, kind: input, shape index: {}]
  %s2 = inlined_call_operand.vmem [shape: f32[72,16], index: 2, kind: input, shape index: {}]
  %s3 = inlined_call_operand.vmem [shape: f32[1,16], index: 3, kind: input, shape index: {}]
  %s4 = inlined_call_operand.vmem [shape: f32[64,4], index: 4, kind: input, shape index: {}]
  %s5 = inlined_call_operand.vmem [shape: f32[1,4], index: 5, kind: input, shape index: {}]
  %s6 = inlined_call_operand.vmem [shape: f32[2,16,16,4], index: 6, kind: output, shape index: {}]
  %s7 = sld [smem:[#allocation0]]
  $region57: #{tpu_custom_call.1} parent=0
    _
  %s9 = ssub.s32 1, %s7
  %s10 = scalar_select 0, %s9, %s7
  loop: start=0, step=1, limit=4
  $region2: #{tpu_custom_call.1} parent=0 // loop_pre_header
    _
  $region3: #{tpu_custom_call.1} parent=0 // loop_header
    %s12 = sphi 0, %s16
    %p13 = scmp.ge.s32.totalorder %s12, 4
    %s22 = sphi 0, %s24
    %s25 = sphi 0, %s22
    %s26 = sphi 0, %s25
    %s42 = sphi 0, %s26
    %s48 = sphi 0, %s50
    %s51 = sphi 0, %s48
    %s52 = sphi 0, %s51
    %s68 = sphi 0, %s52
    %s72 = sphi 0, %s72
    %s74 = sphi 0, %s72
    %s75 = sphi 0, %s74
    %s89 = sphi 0, %s75
    %s93 = sphi 0, %s93
    %s95 = sphi 0, %s93
    %s96 = sphi 0, %s95
    %s110 = sphi 0, %s96
    %s114 = sphi 0, %s114
    %s116 = sphi 0, %s114
    %s117 = sphi 0, %s116
    %s131 = sphi 0, %s117
    %s135 = sphi 0, %s135
    %s137 = sphi 0, %s135
    %s138 = sphi 0, %s137
    %s152 = sphi 0, %s138
    %s158 = sphi 0, %s160
    %s161 = sphi 0, %s158
    %s162 = sphi 0, %s161
    %s178 = sphi 0, %s162
  $region4: #{tpu_custom_call.1} parent=0 // loop_header_branch
    %15 = sbr.rel (%p13) target = $region8
  $region5: #{tpu_custom_call.1} parent=0 // loop_body
    %s17 = ssub.s32 %s12, 1
    %s18 = ssub.s32 %s12, 2
    %s19 = sadd.s32 %s12, 1
    %s20 = ssub.s32 %s12, %s19
    %p21 = scmp.eq.s32.totalorder %s20, 0
    %s23 = sadd.s32 %s22, 1
    %s24 = scalar_select %p21, %s22, %s23
    %p27 = pneg %p21
    %p28 = scmp.eq.s32.totalorder %s12, 1
    %p29 = por %p27, %p28
    %p30 = scmp.ne.s32.totalorder %s22, %s25
    %p31 = scmp.eq.s32.totalorder %s12, 0
    %p32 = por %p30, %p31
    %p33 = scmp.ne.s32.totalorder %s22, %s25
    %p34 = scmp.eq.s32.totalorder %s17, 1
    %p35 = por %p33, %p34
    %p36 = scmp.ne.s32.totalorder %s25, %s26
    %p37 = scmp.eq.s32.totalorder %s17, 0
    %p38 = por %p36, %p37
    %p39 = scmp.ne.s32.totalorder %s25, %s26
    %p40 = scmp.eq.s32.totalorder %s18, 1
    %p41 = por %p39, %p40
    %p43 = scmp.ne.s32.totalorder %s26, %s42
    %p44 = scmp.eq.s32.totalorder %s18, 0
    %p45 = por %p43, %p44
    %s46 = ssub.s32 %s12, %s19
    %p47 = scmp.eq.s32.totalorder %s46, 0
    %s49 = sadd.s32 %s48, 1
    %s50 = scalar_select %p47, %s48, %s49
    %p53 = pneg %p47
    %p54 = scmp.eq.s32.totalorder %s12, 1
    %p55 = por %p53, %p54
    %p56 = scmp.ne.s32.totalorder %s48, %s51
    %p57 = scmp.eq.s32.totalorder %s12, 0
    %p58 = por %p56, %p57
    %p59 = scmp.ne.s32.totalorder %s48, %s51
    %p60 = scmp.eq.s32.totalorder %s17, 1
    %p61 = por %p59, %p60
    %p62 = scmp.ne.s32.totalorder %s51, %s52
    %p63 = scmp.eq.s32.totalorder %s17, 0
    %p64 = por %p62, %p63
    %p65 = scmp.ne.s32.totalorder %s51, %s52
    %p66 = scmp.eq.s32.totalorder %s18, 1
    %p67 = por %p65, %p66
    %p69 = scmp.ne.s32.totalorder %s52, %s68
    %p70 = scmp.eq.s32.totalorder %s18, 0
    %p71 = por %p69, %p70
    %s73 = sadd.s32 %s72, 1
    %p76 = scmp.eq.s32.totalorder %s12, 1
    %p77 = scmp.ne.s32.totalorder %s72, %s74
    %p78 = scmp.eq.s32.totalorder %s12, 0
    %p79 = por %p77, %p78
    %p80 = scmp.ne.s32.totalorder %s72, %s74
    %p81 = scmp.eq.s32.totalorder %s17, 1
    %p82 = por %p80, %p81
    %p83 = scmp.ne.s32.totalorder %s74, %s75
    %p84 = scmp.eq.s32.totalorder %s17, 0
    %p85 = por %p83, %p84
    %p86 = scmp.ne.s32.totalorder %s74, %s75
    %p87 = scmp.eq.s32.totalorder %s18, 1
    %p88 = por %p86, %p87
    %p90 = scmp.ne.s32.totalorder %s75, %s89
    %p91 = scmp.eq.s32.totalorder %s18, 0
    %p92 = por %p90, %p91
    %s94 = sadd.s32 %s93, 1
    %p97 = scmp.eq.s32.totalorder %s12, 1
    %p98 = scmp.ne.s32.totalorder %s93, %s95
    %p99 = scmp.eq.s32.totalorder %s12, 0
    %p100 = por %p98, %p99
    %p101 = scmp.ne.s32.totalorder %s93, %s95
    %p102 = scmp.eq.s32.totalorder %s17, 1
    %p103 = por %p101, %p102
    %p104 = scmp.ne.s32.totalorder %s95, %s96
    %p105 = scmp.eq.s32.totalorder %s17, 0
    %p106 = por %p104, %p105
    %p107 = scmp.ne.s32.totalorder %s95, %s96
    %p108 = scmp.eq.s32.totalorder %s18, 1
    %p109 = por %p107, %p108
    %p111 = scmp.ne.s32.totalorder %s96, %s110
    %p112 = scmp.eq.s32.totalorder %s18, 0
    %p113 = por %p111, %p112
    %s115 = sadd.s32 %s114, 1
    %p118 = scmp.eq.s32.totalorder %s12, 1
    %p119 = scmp.ne.s32.totalorder %s114, %s116
    %p120 = scmp.eq.s32.totalorder %s12, 0
    %p121 = por %p119, %p120
    %p122 = scmp.ne.s32.totalorder %s114, %s116
    %p123 = scmp.eq.s32.totalorder %s17, 1
    %p124 = por %p122, %p123
    %p125 = scmp.ne.s32.totalorder %s116, %s117
    %p126 = scmp.eq.s32.totalorder %s17, 0
    %p127 = por %p125, %p126
    %p128 = scmp.ne.s32.totalorder %s116, %s117
    %p129 = scmp.eq.s32.totalorder %s18, 1
    %p130 = por %p128, %p129
    %p132 = scmp.ne.s32.totalorder %s117, %s131
    %p133 = scmp.eq.s32.totalorder %s18, 0
    %p134 = por %p132, %p133
    %s136 = sadd.s32 %s135, 1
    %p139 = scmp.eq.s32.totalorder %s12, 1
    %p140 = scmp.ne.s32.totalorder %s135, %s137
    %p141 = scmp.eq.s32.totalorder %s12, 0
    %p142 = por %p140, %p141
    %p143 = scmp.ne.s32.totalorder %s135, %s137
    %p144 = scmp.eq.s32.totalorder %s17, 1
    %p145 = por %p143, %p144
    %p146 = scmp.ne.s32.totalorder %s137, %s138
    %p147 = scmp.eq.s32.totalorder %s17, 0
    %p148 = por %p146, %p147
    %p149 = scmp.ne.s32.totalorder %s137, %s138
    %p150 = scmp.eq.s32.totalorder %s18, 1
    %p151 = por %p149, %p150
    %p153 = scmp.ne.s32.totalorder %s138, %s152
    %p154 = scmp.eq.s32.totalorder %s18, 0
    %p155 = por %p153, %p154
    %s156 = ssub.s32 %s12, %s19
    %p157 = scmp.eq.s32.totalorder %s156, 0
    %s159 = sadd.s32 %s158, 1
    %s160 = scalar_select %p157, %s158, %s159
    %p163 = pneg %p157
    %p164 = scmp.eq.s32.totalorder %s12, 1
    %p165 = por %p163, %p164
    %p166 = scmp.ne.s32.totalorder %s158, %s161
    %p167 = scmp.eq.s32.totalorder %s12, 0
    %p168 = por %p166, %p167
    %p169 = scmp.ne.s32.totalorder %s158, %s161
    %p170 = scmp.eq.s32.totalorder %s17, 1
    %p171 = por %p169, %p170
    %p172 = scmp.ne.s32.totalorder %s161, %s162
    %p173 = scmp.eq.s32.totalorder %s17, 0
    %p174 = por %p172, %p173
    %p175 = scmp.ne.s32.totalorder %s161, %s162
    %p176 = scmp.eq.s32.totalorder %s18, 1
    %p177 = por %p175, %p176
    %p179 = scmp.ne.s32.totalorder %s162, %s178
    %p180 = scmp.eq.s32.totalorder %s18, 0
    %p181 = por %p179, %p180
    %p182 = scmp.le.s32.totalorder 1, %s12
    %p183 = scmp.lt.s32.totalorder %s12, 3
    %p184 = pnand %p182, %p183
    %p185 = pneg %p184
    // Predicated region
    $region9: #{tpu_custom_call.1} parent=5 // pred_check
      _
    $region10: #{tpu_custom_call.1} parent=5 // pred_check_branch
      %187 = sbr.rel (%p184) target = $region12
    $region11: #{tpu_custom_call.1} parent=5 // pred_region
      %s188 = ssub.s32 %s12, 1
      // Predicated region
      $region13: #{tpu_custom_call.1} parent=11 // pred_check
        %p189 = pneg %p85
      $region14: #{tpu_custom_call.1} parent=11 // pred_check_branch
        %191 = sbr.rel (%p189) target = $region16
      $region15: #{tpu_custom_call.1} parent=11 // pred_region
        _
      $region16: #{tpu_custom_call.1} parent=11 // pred_fallthru
        _
      // Predicated region
      $region17: #{tpu_custom_call.1} parent=11 // pred_check
        %p192 = pneg %p106
      $region18: #{tpu_custom_call.1} parent=11 // pred_check_branch
        %194 = sbr.rel (%p192) target = $region20
      $region19: #{tpu_custom_call.1} parent=11 // pred_region
        _
      $region20: #{tpu_custom_call.1} parent=11 // pred_fallthru
        _
      // Predicated region
      $region21: #{tpu_custom_call.1} parent=11 // pred_check
        %p195 = pneg %p127
      $region22: #{tpu_custom_call.1} parent=11 // pred_check_branch
        %197 = sbr.rel (%p195) target = $region24
      $region23: #{tpu_custom_call.1} parent=11 // pred_region
        _
      $region24: #{tpu_custom_call.1} parent=11 // pred_fallthru
        _
      // Predicated region
      $region25: #{tpu_custom_call.1} parent=11 // pred_check
        %p198 = pneg %p148
      $region26: #{tpu_custom_call.1} parent=11 // pred_check_branch
        %200 = sbr.rel (%p198) target = $region28
      $region27: #{tpu_custom_call.1} parent=11 // pred_region
        _
      $region28: #{tpu_custom_call.1} parent=11 // pred_fallthru
        _
    $region12: #{tpu_custom_call.1} parent=5 // pred_fallthru
      _
    %p201 = scmp.lt.s32.totalorder %s12, 2
    // Predicated region
    $region29: #{tpu_custom_call.1} parent=5 // pred_check
      %p202 = pneg %p201
    $region30: #{tpu_custom_call.1} parent=5 // pred_check_branch
      %204 = sbr.rel (%p202) target = $region32
    $region31: #{tpu_custom_call.1} parent=5 // pred_region
      // Predicated region
      $region33: #{tpu_custom_call.1} parent=31 // pred_check
        %p205 = pneg %p32
      $region34: #{tpu_custom_call.1} parent=31 // pred_check_branch
        %207 = sbr.rel (%p205) target = $region36
      $region35: #{tpu_custom_call.1} parent=31 // pred_region
        %p208 = scmp.lt.s32.totalorder %s12, 1
        %s209 = scalar_select %p208, %s12, 1
        %s210 = smul.addr %s209, 32
        %s211 = smul.addr %s210, 8
        %s212 = scalar_lea.vmem %s0, %s211
      $region36: #{tpu_custom_call.1} parent=31 // pred_fallthru
        _
      // Predicated region
      $region37: #{tpu_custom_call.1} parent=31 // pred_check
        %p213 = pneg %p58
      $region38: #{tpu_custom_call.1} parent=31 // pred_check_branch
        %215 = sbr.rel (%p213) target = $region40
      $region39: #{tpu_custom_call.1} parent=31 // pred_region
        %p216 = scmp.lt.s32.totalorder %s12, 1
        %s217 = scalar_select %p216, %s12, 1
        %s218 = smul.addr %s217, 32
        %s219 = smul.addr %s218, 8
        %s220 = scalar_lea.vmem %s1, %s219
      $region40: #{tpu_custom_call.1} parent=31 // pred_fallthru
        _
    $region32: #{tpu_custom_call.1} parent=5 // pred_fallthru
      _
    %p221 = scmp.le.s32.totalorder 1, %s12
    %p222 = scmp.lt.s32.totalorder %s12, 3
    %p223 = pnand %p221, %p222
    %p224 = pneg %p223
    // Predicated region
    $region41: #{tpu_custom_call.1} parent=5 // pred_check
      _
    $region42: #{tpu_custom_call.1} parent=5 // pred_check_branch
      %226 = sbr.rel (%p223) target = $region44
    $region43: #{tpu_custom_call.1} parent=5 // pred_region
      %s227 = ssub.s32 %s12, 1
      %p228 = scmp.lt.s32.totalorder %s17, 1
      %s229 = scalar_select %p228, %s17, 1
      %s230 = smul.addr %s229, 32
      %s231 = smul.addr %s230, 8
      %s232 = scalar_lea.vmem %s0, %s231
      %p233 = pneg %p38
      %p234 = pneg %p35
      %p235 = scmp.lt.s32.totalorder %s17, 1
      %s236 = scalar_select %p235, %s17, 1
      %s237 = smul.addr %s236, 32
      %s238 = smul.addr %s237, 8
      %s239 = scalar_lea.vmem %s1, %s238
      %p240 = pneg %p64
      %p241 = pneg %p61
      %p242 = pneg %p85
      %p243 = pneg %p82
      %p244 = pneg %p106
      %p245 = pneg %p103
      %p246 = pneg %p127
      %p247 = pneg %p124
      %p248 = pneg %p148
      %p249 = pneg %p145
      %p250 = pneg %p174
      %p251 = pneg %p171
      %p252 = scmp.lt.s32.totalorder %s17, 1
      %s253 = scalar_select %p252, %s17, 1
      %s254 = smul.addr %s253, 32
      %s255 = smul.addr %s254, 8
      %s256 = scalar_lea.vmem %s6, %s255
      %p257 = scmp.lt.s32.totalorder %s17, 1
      %s258 = scalar_select %p257, %s17, 1
      %s259 = smul.addr %s258, 32
      %s260 = smul.addr %s259, 8
      %s261 = scalar_lea.vmem %s0, %s260
      %p262 = scmp.lt.s32.totalorder %s17, 1
      %s263 = scalar_select %p262, %s17, 1
      %s264 = smul.addr %s263, 32
      %s265 = smul.addr %s264, 8
      %s266 = scalar_lea.vmem %s1, %s265
      %p267 = scmp.lt.s32.totalorder %s17, 1
      %s268 = scalar_select %p267, %s17, 1
      %s269 = smul.addr %s268, 32
      %s270 = smul.addr %s269, 8
      %s271 = scalar_lea.vmem %s6, %s270
      %v272 = vld [vmem:[%s261] sm:$0xff]
      %v273 = vld [vmem:[%s261 + $0x8] sm:$0xff]
      %v274 = vld [vmem:[%s261 + $0x10] sm:$0xff]
      %v275 = vld [vmem:[%s261 + $0x18] sm:$0xff]
      %v276 = vld [vmem:[%s261 + $0x20] sm:$0xff]
      %v277 = vld [vmem:[%s261 + $0x28] sm:$0xff]
      %v278 = vld [vmem:[%s261 + $0x30] sm:$0xff]
      %v279 = vld [vmem:[%s261 + $0x38] sm:$0xff]
      %v280 = vld [vmem:[%s261 + $0x40] sm:$0xff]
      %v281 = vld [vmem:[%s261 + $0x48] sm:$0xff]
      %v282 = vld [vmem:[%s261 + $0x50] sm:$0xff]
      %v283 = vld [vmem:[%s261 + $0x58] sm:$0xff]
      %v284 = vld [vmem:[%s261 + $0x60] sm:$0xff]
      %v285 = vld [vmem:[%s261 + $0x68] sm:$0xff]
      %v286 = vld [vmem:[%s261 + $0x70] sm:$0xff]
      %v287 = vld [vmem:[%s261 + $0x78] sm:$0xff]
      %v288 = vld [vmem:[%s261 + $0x80] sm:$0xff]
      %v289 = vld [vmem:[%s261 + $0x88] sm:$0xff]
      %v290 = vld [vmem:[%s261 + $0x90] sm:$0xff]
      %v291 = vld [vmem:[%s261 + $0x98] sm:$0xff]
      %v292 = vld [vmem:[%s261 + $0xa0] sm:$0xff]
      %v293 = vld [vmem:[%s261 + $0xa8] sm:$0xff]
      %v294 = vld [vmem:[%s261 + $0xb0] sm:$0xff]
      %v295 = vld [vmem:[%s261 + $0xb8] sm:$0xff]
      %v296 = vld [vmem:[%s261 + $0xc0] sm:$0xff]
      %v297 = vld [vmem:[%s261 + $0xc8] sm:$0xff]
      %v298 = vld [vmem:[%s261 + $0xd0] sm:$0xff]
      %v299 = vld [vmem:[%s261 + $0xd8] sm:$0xff]
      %v300 = vld [vmem:[%s261 + $0xe0] sm:$0xff]
      %v301 = vld [vmem:[%s261 + $0xe8] sm:$0xff]
      %v302 = vld [vmem:[%s261 + $0xf0] sm:$0xff]
      %v303 = vld [vmem:[%s261 + $0xf8] sm:$0xff]
      %v304 = vmax.f32 %v272, 0.0
      %v305 = vmax.f32 %v273, 0.0
      %v306 = vmax.f32 %v274, 0.0
      %v307 = vmax.f32 %v275, 0.0
      %v308 = vmax.f32 %v276, 0.0
      %v309 = vmax.f32 %v277, 0.0
      %v310 = vmax.f32 %v278, 0.0
      %v311 = vmax.f32 %v279, 0.0
      %v312 = vmax.f32 %v280, 0.0
      %v313 = vmax.f32 %v281, 0.0
      %v314 = vmax.f32 %v282, 0.0
      %v315 = vmax.f32 %v283, 0.0
      %v316 = vmax.f32 %v284, 0.0
      %v317 = vmax.f32 %v285, 0.0
      %v318 = vmax.f32 %v286, 0.0
      %v319 = vmax.f32 %v287, 0.0
      %v320 = vmax.f32 %v288, 0.0
      %v321 = vmax.f32 %v289, 0.0
      %v322 = vmax.f32 %v290, 0.0
      %v323 = vmax.f32 %v291, 0.0
      %v324 = vmax.f32 %v292, 0.0
      %v325 = vmax.f32 %v293, 0.0
      %v326 = vmax.f32 %v294, 0.0
      %v327 = vmax.f32 %v295, 0.0
      %v328 = vmax.f32 %v296, 0.0
      %v329 = vmax.f32 %v297, 0.0
      %v330 = vmax.f32 %v298, 0.0
      %v331 = vmax.f32 %v299, 0.0
      %v332 = vmax.f32 %v300, 0.0
      %v333 = vmax.f32 %v301, 0.0
      %v334 = vmax.f32 %v302, 0.0
      %v335 = vmax.f32 %v303, 0.0
      %s336 = scalar_lea.vmem [#allocation2], 24
      %vm337 = vcmask 31744
      %338 = vst.msk [vmem:[%s336 + $0x1] sm:$0xff] %vm337, %v304
      %339 = vst.msk [vmem:[%s336 + $0x9] sm:$0xff] %vm337, %v305
      %340 = vst.msk [vmem:[%s336 + $0x19] sm:$0xff] %vm337, %v306
      %341 = vst.msk [vmem:[%s336 + $0x21] sm:$0xff] %vm337, %v307
      %342 = vst.msk [vmem:[%s336 + $0x31] sm:$0xff] %vm337, %v308
      %343 = vst.msk [vmem:[%s336 + $0x39] sm:$0xff] %vm337, %v309
      %344 = vst.msk [vmem:[%s336 + $0x49] sm:$0xff] %vm337, %v310
      %345 = vst.msk [vmem:[%s336 + $0x51] sm:$0xff] %vm337, %v311
      %346 = vst.msk [vmem:[%s336 + $0x61] sm:$0xff] %vm337, %v312
      %347 = vst.msk [vmem:[%s336 + $0x69] sm:$0xff] %vm337, %v313
      %348 = vst.msk [vmem:[%s336 + $0x79] sm:$0xff] %vm337, %v314
      %349 = vst.msk [vmem:[%s336 + $0x81] sm:$0xff] %vm337, %v315
      %350 = vst.msk [vmem:[%s336 + $0x91] sm:$0xff] %vm337, %v316
      %351 = vst.msk [vmem:[%s336 + $0x99] sm:$0xff] %vm337, %v317
      %352 = vst.msk [vmem:[%s336 + $0xa9] sm:$0xff] %vm337, %v318
      %353 = vst.msk [vmem:[%s336 + $0xb1] sm:$0xff] %vm337, %v319
      %354 = vst.msk [vmem:[%s336 + $0xc1] sm:$0xff] %vm337, %v320
      %355 = vst.msk [vmem:[%s336 + $0xc9] sm:$0xff] %vm337, %v321
      %356 = vst.msk [vmem:[%s336 + $0xd9] sm:$0xff] %vm337, %v322
      %357 = vst.msk [vmem:[%s336 + $0xe1] sm:$0xff] %vm337, %v323
      %358 = vst.msk [vmem:[%s336 + $0xf1] sm:$0xff] %vm337, %v324
      %359 = vst.msk [vmem:[%s336 + $0xf9] sm:$0xff] %vm337, %v325
      %360 = vst.msk [vmem:[%s336 + $0x109] sm:$0xff] %vm337, %v326
      %361 = vst.msk [vmem:[%s336 + $0x111] sm:$0xff] %vm337, %v327
      %362 = vst.msk [vmem:[%s336 + $0x121] sm:$0xff] %vm337, %v328
      %363 = vst.msk [vmem:[%s336 + $0x129] sm:$0xff] %vm337, %v329
      %364 = vst.msk [vmem:[%s336 + $0x139] sm:$0xff] %vm337, %v330
      %365 = vst.msk [vmem:[%s336 + $0x141] sm:$0xff] %vm337, %v331
      %366 = vst.msk [vmem:[%s336 + $0x151] sm:$0xff] %vm337, %v332
      %367 = vst.msk [vmem:[%s336 + $0x159] sm:$0xff] %vm337, %v333
      %368 = vst.msk [vmem:[%s336 + $0x169] sm:$0xff] %vm337, %v334
      %369 = vst.msk [vmem:[%s336 + $0x171] sm:$0xff] %vm337, %v335
      %v370 = vld [vmem:[%s266] sm:$0xff]
      %v371 = vld [vmem:[%s266 + $0x8] sm:$0xff]
      %v372 = vld [vmem:[%s266 + $0x10] sm:$0xff]
      %v373 = vld [vmem:[%s266 + $0x18] sm:$0xff]
      %v374 = vld [vmem:[%s266 + $0x20] sm:$0xff]
      %v375 = vld [vmem:[%s266 + $0x28] sm:$0xff]
      %v376 = vld [vmem:[%s266 + $0x30] sm:$0xff]
      %v377 = vld [vmem:[%s266 + $0x38] sm:$0xff]
      %v378 = vld [vmem:[%s266 + $0x40] sm:$0xff]
      %v379 = vld [vmem:[%s266 + $0x48] sm:$0xff]
      %v380 = vld [vmem:[%s266 + $0x50] sm:$0xff]
      %v381 = vld [vmem:[%s266 + $0x58] sm:$0xff]
      %v382 = vld [vmem:[%s266 + $0x60] sm:$0xff]
      %v383 = vld [vmem:[%s266 + $0x68] sm:$0xff]
      %v384 = vld [vmem:[%s266 + $0x70] sm:$0xff]
      %v385 = vld [vmem:[%s266 + $0x78] sm:$0xff]
      %v386 = vld [vmem:[%s266 + $0x80] sm:$0xff]
      %v387 = vld [vmem:[%s266 + $0x88] sm:$0xff]
      %v388 = vld [vmem:[%s266 + $0x90] sm:$0xff]
      %v389 = vld [vmem:[%s266 + $0x98] sm:$0xff]
      %v390 = vld [vmem:[%s266 + $0xa0] sm:$0xff]
      %v391 = vld [vmem:[%s266 + $0xa8] sm:$0xff]
      %v392 = vld [vmem:[%s266 + $0xb0] sm:$0xff]
      %v393 = vld [vmem:[%s266 + $0xb8] sm:$0xff]
      %v394 = vld [vmem:[%s266 + $0xc0] sm:$0xff]
      %v395 = vld [vmem:[%s266 + $0xc8] sm:$0xff]
      %v396 = vld [vmem:[%s266 + $0xd0] sm:$0xff]
      %v397 = vld [vmem:[%s266 + $0xd8] sm:$0xff]
      %v398 = vld [vmem:[%s266 + $0xe0] sm:$0xff]
      %v399 = vld [vmem:[%s266 + $0xe8] sm:$0xff]
      %v400 = vld [vmem:[%s266 + $0xf0] sm:$0xff]
      %v401 = vld [vmem:[%s266 + $0xf8] sm:$0xff]
      %v402 = vmax.f32 %v370, 0.0
      %v403 = vmax.f32 %v371, 0.0
      %v404 = vmax.f32 %v372, 0.0
      %v405 = vmax.f32 %v373, 0.0
      %v406 = vmax.f32 %v374, 0.0
      %v407 = vmax.f32 %v375, 0.0
      %v408 = vmax.f32 %v376, 0.0
      %v409 = vmax.f32 %v377, 0.0
      %v410 = vmax.f32 %v378, 0.0
      %v411 = vmax.f32 %v379, 0.0
      %v412 = vmax.f32 %v380, 0.0
      %v413 = vmax.f32 %v381, 0.0
      %v414 = vmax.f32 %v382, 0.0
      %v415 = vmax.f32 %v383, 0.0
      %v416 = vmax.f32 %v384, 0.0
      %v417 = vmax.f32 %v385, 0.0
      %v418 = vmax.f32 %v386, 0.0
      %v419 = vmax.f32 %v387, 0.0
      %v420 = vmax.f32 %v388, 0.0
      %v421 = vmax.f32 %v389, 0.0
      %v422 = vmax.f32 %v390, 0.0
      %v423 = vmax.f32 %v391, 0.0
      %v424 = vmax.f32 %v392, 0.0
      %v425 = vmax.f32 %v393, 0.0
      %v426 = vmax.f32 %v394, 0.0
      %v427 = vmax.f32 %v395, 0.0
      %v428 = vmax.f32 %v396, 0.0
      %v429 = vmax.f32 %v397, 0.0
      %v430 = vmax.f32 %v398, 0.0
      %v431 = vmax.f32 %v399, 0.0
      %v432 = vmax.f32 %v400, 0.0
      %v433 = vmax.f32 %v401, 0.0
      %466 = vrot.lane.b32.xlu0 %v402, 4
      %v467 = vpop.permute.xlu0 %466
      %468 = vrot.lane.b32.xlu0 %v403, 4
      %v469 = vpop.permute.xlu0 %468
      %470 = vrot.lane.b32.xlu0 %v404, 4
      %v471 = vpop.permute.xlu0 %470
      %472 = vrot.lane.b32.xlu0 %v405, 4
      %v473 = vpop.permute.xlu0 %472
      %474 = vrot.lane.b32.xlu0 %v406, 4
      %v475 = vpop.permute.xlu0 %474
      %476 = vrot.lane.b32.xlu0 %v407, 4
      %v477 = vpop.permute.xlu0 %476
      %478 = vrot.lane.b32.xlu0 %v408, 4
      %v479 = vpop.permute.xlu0 %478
      %480 = vrot.lane.b32.xlu0 %v409, 4
      %v481 = vpop.permute.xlu0 %480
      %482 = vrot.lane.b32.xlu0 %v410, 4
      %v483 = vpop.permute.xlu0 %482
      %484 = vrot.lane.b32.xlu0 %v411, 4
      %v485 = vpop.permute.xlu0 %484
      %486 = vrot.lane.b32.xlu0 %v412, 4
      %v487 = vpop.permute.xlu0 %486
      %488 = vrot.lane.b32.xlu0 %v413, 4
      %v489 = vpop.permute.xlu0 %488
      %490 = vrot.lane.b32.xlu0 %v414, 4
      %v491 = vpop.permute.xlu0 %490
      %492 = vrot.lane.b32.xlu0 %v415, 4
      %v493 = vpop.permute.xlu0 %492
      %494 = vrot.lane.b32.xlu0 %v416, 4
      %v495 = vpop.permute.xlu0 %494
      %496 = vrot.lane.b32.xlu0 %v417, 4
      %v497 = vpop.permute.xlu0 %496
      %498 = vrot.lane.b32.xlu0 %v418, 4
      %v499 = vpop.permute.xlu0 %498
      %500 = vrot.lane.b32.xlu0 %v419, 4
      %v501 = vpop.permute.xlu0 %500
      %502 = vrot.lane.b32.xlu0 %v420, 4
      %v503 = vpop.permute.xlu0 %502
      %504 = vrot.lane.b32.xlu0 %v421, 4
      %v505 = vpop.permute.xlu0 %504
      %506 = vrot.lane.b32.xlu0 %v422, 4
      %v507 = vpop.permute.xlu0 %506
      %508 = vrot.lane.b32.xlu0 %v423, 4
      %v509 = vpop.permute.xlu0 %508
      %510 = vrot.lane.b32.xlu0 %v424, 4
      %v511 = vpop.permute.xlu0 %510
      %512 = vrot.lane.b32.xlu0 %v425, 4
      %v513 = vpop.permute.xlu0 %512
      %514 = vrot.lane.b32.xlu0 %v426, 4
      %v515 = vpop.permute.xlu0 %514
      %516 = vrot.lane.b32.xlu0 %v427, 4
      %v517 = vpop.permute.xlu0 %516
      %518 = vrot.lane.b32.xlu0 %v428, 4
      %v519 = vpop.permute.xlu0 %518
      %520 = vrot.lane.b32.xlu0 %v429, 4
      %v521 = vpop.permute.xlu0 %520
      %522 = vrot.lane.b32.xlu0 %v430, 4
      %v523 = vpop.permute.xlu0 %522
      %524 = vrot.lane.b32.xlu0 %v431, 4
      %v525 = vpop.permute.xlu0 %524
      %526 = vrot.lane.b32.xlu0 %v432, 4
      %v527 = vpop.permute.xlu0 %526
      %528 = vrot.lane.b32.xlu0 %v433, 4
      %v529 = vpop.permute.xlu0 %528
      %vm562 = vcmask 64544
      %563 = vst.msk [vmem:[%s336 + $0x1] sm:$0xff] %vm562, %v467
      %564 = vst.msk [vmem:[%s336 + $0x9] sm:$0xff] %vm562, %v469
      %565 = vst.msk [vmem:[%s336 + $0x19] sm:$0xff] %vm562, %v471
      %566 = vst.msk [vmem:[%s336 + $0x21] sm:$0xff] %vm562, %v473
      %567 = vst.msk [vmem:[%s336 + $0x31] sm:$0xff] %vm562, %v475
      %568 = vst.msk [vmem:[%s336 + $0x39] sm:$0xff] %vm562, %v477
      %569 = vst.msk [vmem:[%s336 + $0x49] sm:$0xff] %vm562, %v479
      %570 = vst.msk [vmem:[%s336 + $0x51] sm:$0xff] %vm562, %v481
      %571 = vst.msk [vmem:[%s336 + $0x61] sm:$0xff] %vm562, %v483
      %572 = vst.msk [vmem:[%s336 + $0x69] sm:$0xff] %vm562, %v485
      %573 = vst.msk [vmem:[%s336 + $0x79] sm:$0xff] %vm562, %v487
      %574 = vst.msk [vmem:[%s336 + $0x81] sm:$0xff] %vm562, %v489
      %575 = vst.msk [vmem:[%s336 + $0x91] sm:$0xff] %vm562, %v491
      %576 = vst.msk [vmem:[%s336 + $0x99] sm:$0xff] %vm562, %v493
      %577 = vst.msk [vmem:[%s336 + $0xa9] sm:$0xff] %vm562, %v495
      %578 = vst.msk [vmem:[%s336 + $0xb1] sm:$0xff] %vm562, %v497
      %579 = vst.msk [vmem:[%s336 + $0xc1] sm:$0xff] %vm562, %v499
      %580 = vst.msk [vmem:[%s336 + $0xc9] sm:$0xff] %vm562, %v501
      %581 = vst.msk [vmem:[%s336 + $0xd9] sm:$0xff] %vm562, %v503
      %582 = vst.msk [vmem:[%s336 + $0xe1] sm:$0xff] %vm562, %v505
      %583 = vst.msk [vmem:[%s336 + $0xf1] sm:$0xff] %vm562, %v507
      %584 = vst.msk [vmem:[%s336 + $0xf9] sm:$0xff] %vm562, %v509
      %585 = vst.msk [vmem:[%s336 + $0x109] sm:$0xff] %vm562, %v511
      %586 = vst.msk [vmem:[%s336 + $0x111] sm:$0xff] %vm562, %v513
      %587 = vst.msk [vmem:[%s336 + $0x121] sm:$0xff] %vm562, %v515
      %588 = vst.msk [vmem:[%s336 + $0x129] sm:$0xff] %vm562, %v517
      %589 = vst.msk [vmem:[%s336 + $0x139] sm:$0xff] %vm562, %v519
      %590 = vst.msk [vmem:[%s336 + $0x141] sm:$0xff] %vm562, %v521
      %591 = vst.msk [vmem:[%s336 + $0x151] sm:$0xff] %vm562, %v523
      %592 = vst.msk [vmem:[%s336 + $0x159] sm:$0xff] %vm562, %v525
      %593 = vst.msk [vmem:[%s336 + $0x169] sm:$0xff] %vm562, %v527
      %594 = vst.msk [vmem:[%s336 + $0x171] sm:$0xff] %vm562, %v529
      %s595 = scalar_lea.vmem [#allocation2], 48
      %v596 = vld [vmem:[%s595 + $0x1] sm:$0xff]
      %v597 = vld [vmem:[%s595 + $0x9] sm:$0xff]
      %vm598 = vcmask 64512
      %599 = vst.msk [vmem:[#allocation2 + $0x1] sm:$0xff] %vm598, %v596
      %600 = vst.msk [vmem:[#allocation2 + $0x9] sm:$0xff] %vm598, %v597
      %s601 = scalar_lea.vmem [#allocation2], 360
      %v602 = vld [vmem:[%s601 + $0x1] sm:$0xff]
      %v603 = vld [vmem:[%s601 + $0x9] sm:$0xff]
      %s604 = scalar_lea.vmem [#allocation2], 408
      %605 = vst.msk [vmem:[%s604 + $0x1] sm:$0xff] %vm598, %v602
      %606 = vst.msk [vmem:[%s604 + $0x9] sm:$0xff] %vm598, %v603
      %v607 = vld [vmem:[#allocation2 + $0x2] sm:$0x1]
      %v608 = vld [vmem:[#allocation2 + $0x1a] sm:$0x1]
      %v609 = vld [vmem:[#allocation2 + $0x32] sm:$0x1]
      %v610 = vld [vmem:[#allocation2 + $0x4a] sm:$0x1]
      %v611 = vld [vmem:[#allocation2 + $0x62] sm:$0x1]
      %v612 = vld [vmem:[#allocation2 + $0x7a] sm:$0x1]
      %v613 = vld [vmem:[#allocation2 + $0x92] sm:$0x1]
      %v614 = vld [vmem:[#allocation2 + $0xaa] sm:$0x1]
      %v615 = vld [vmem:[#allocation2 + $0xc2] sm:$0x1]
      %v616 = vld [vmem:[#allocation2 + $0xda] sm:$0x1]
      %v617 = vld [vmem:[#allocation2 + $0xf2] sm:$0x1]
      %v618 = vld [vmem:[#allocation2 + $0x10a] sm:$0x1]
      %v619 = vld [vmem:[#allocation2 + $0x122] sm:$0x1]
      %v620 = vld [vmem:[#allocation2 + $0x13a] sm:$0x1]
      %v621 = vld [vmem:[#allocation2 + $0x152] sm:$0x1]
      %v622 = vld [vmem:[#allocation2 + $0x16a] sm:$0x1]
      %v623 = vld [vmem:[#allocation2 + $0x182] sm:$0x1]
      %v624 = vld [vmem:[#allocation2 + $0x19a] sm:$0x1]
      %vm625 = vcmask 57344
      %626 = vst.msk [vmem:[#allocation2] sm:$0x1] %vm625, %v607
      %627 = vst.msk [vmem:[#allocation2 + $0x18] sm:$0x1] %vm625, %v608
      %628 = vst.msk [vmem:[#allocation2 + $0x30] sm:$0x1] %vm625, %v609
      %629 = vst.msk [vmem:[#allocation2 + $0x48] sm:$0x1] %vm625, %v610
      %630 = vst.msk [vmem:[#allocation2 + $0x60] sm:$0x1] %vm625, %v611
      %631 = vst.msk [vmem:[#allocation2 + $0x78] sm:$0x1] %vm625, %v612
      %632 = vst.msk [vmem:[#allocation2 + $0x90] sm:$0x1] %vm625, %v613
      %633 = vst.msk [vmem:[#allocation2 + $0xa8] sm:$0x1] %vm625, %v614
      %634 = vst.msk [vmem:[#allocation2 + $0xc0] sm:$0x1] %vm625, %v615
      %635 = vst.msk [vmem:[#allocation2 + $0xd8] sm:$0x1] %vm625, %v616
      %636 = vst.msk [vmem:[#allocation2 + $0xf0] sm:$0x1] %vm625, %v617
      %637 = vst.msk [vmem:[#allocation2 + $0x108] sm:$0x1] %vm625, %v618
      %638 = vst.msk [vmem:[#allocation2 + $0x120] sm:$0x1] %vm625, %v619
      %639 = vst.msk [vmem:[#allocation2 + $0x138] sm:$0x1] %vm625, %v620
      %640 = vst.msk [vmem:[#allocation2 + $0x150] sm:$0x1] %vm625, %v621
      %641 = vst.msk [vmem:[#allocation2 + $0x168] sm:$0x1] %vm625, %v622
      %642 = vst.msk [vmem:[#allocation2 + $0x180] sm:$0x1] %vm625, %v623
      %643 = vst.msk [vmem:[#allocation2 + $0x198] sm:$0x1] %vm625, %v624
      %v644 = vld [vmem:[#allocation2 + $0xf] sm:$0x1]
      %v645 = vld [vmem:[#allocation2 + $0x27] sm:$0x1]
      %v646 = vld [vmem:[#allocation2 + $0x3f] sm:$0x1]
      %v647 = vld [vmem:[#allocation2 + $0x57] sm:$0x1]
      %v648 = vld [vmem:[#allocation2 + $0x6f] sm:$0x1]
      %v649 = vld [vmem:[#allocation2 + $0x87] sm:$0x1]
      %v650 = vld [vmem:[#allocation2 + $0x9f] sm:$0x1]
      %v651 = vld [vmem:[#allocation2 + $0xb7] sm:$0x1]
      %v652 = vld [vmem:[#allocation2 + $0xcf] sm:$0x1]
      %v653 = vld [vmem:[#allocation2 + $0xe7] sm:$0x1]
      %v654 = vld [vmem:[#allocation2 + $0xff] sm:$0x1]
      %v655 = vld [vmem:[#allocation2 + $0x117] sm:$0x1]
      %v656 = vld [vmem:[#allocation2 + $0x12f] sm:$0x1]
      %v657 = vld [vmem:[#allocation2 + $0x147] sm:$0x1]
      %v658 = vld [vmem:[#allocation2 + $0x15f] sm:$0x1]
      %v659 = vld [vmem:[#allocation2 + $0x177] sm:$0x1]
      %v660 = vld [vmem:[#allocation2 + $0x18f] sm:$0x1]
      %v661 = vld [vmem:[#allocation2 + $0x1a7] sm:$0x1]
      %662 = vst.msk [vmem:[#allocation2 + $0x11] sm:$0x1] %vm625, %v644
      %663 = vst.msk [vmem:[#allocation2 + $0x29] sm:$0x1] %vm625, %v645
      %664 = vst.msk [vmem:[#allocation2 + $0x41] sm:$0x1] %vm625, %v646
      %665 = vst.msk [vmem:[#allocation2 + $0x59] sm:$0x1] %vm625, %v647
      %666 = vst.msk [vmem:[#allocation2 + $0x71] sm:$0x1] %vm625, %v648
      %667 = vst.msk [vmem:[#allocation2 + $0x89] sm:$0x1] %vm625, %v649
      %668 = vst.msk [vmem:[#allocation2 + $0xa1] sm:$0x1] %vm625, %v650
      %669 = vst.msk [vmem:[#allocation2 + $0xb9] sm:$0x1] %vm625, %v651
      %670 = vst.msk [vmem:[#allocation2 + $0xd1] sm:$0x1] %vm625, %v652
      %671 = vst.msk [vmem:[#allocation2 + $0xe9] sm:$0x1] %vm625, %v653
      %672 = vst.msk [vmem:[#allocation2 + $0x101] sm:$0x1] %vm625, %v654
      %673 = vst.msk [vmem:[#allocation2 + $0x119] sm:$0x1] %vm625, %v655
      %674 = vst.msk [vmem:[#allocation2 + $0x131] sm:$0x1] %vm625, %v656
      %675 = vst.msk [vmem:[#allocation2 + $0x149] sm:$0x1] %vm625, %v657
      %676 = vst.msk [vmem:[#allocation2 + $0x161] sm:$0x1] %vm625, %v658
      %677 = vst.msk [vmem:[#allocation2 + $0x179] sm:$0x1] %vm625, %v659
      %678 = vst.msk [vmem:[#allocation2 + $0x191] sm:$0x1] %vm625, %v660
      %679 = vst.msk [vmem:[#allocation2 + $0x1a9] sm:$0x1] %vm625, %v661
      %v680 = vld [vmem:[#allocation2] sm:$0xff]
      %v681 = vld [vmem:[#allocation2 + $0x8] sm:$0xff]
      %v682 = vld [vmem:[#allocation2 + $0x18] sm:$0xff]
      %v683 = vld [vmem:[#allocation2 + $0x20] sm:$0xff]
      %v684 = vld [vmem:[#allocation2 + $0x30] sm:$0xff]
      %v685 = vld [vmem:[#allocation2 + $0x38] sm:$0xff]
      %v686 = vld [vmem:[#allocation2 + $0x48] sm:$0xff]
      %v687 = vld [vmem:[#allocation2 + $0x50] sm:$0xff]
      %v688 = vld [vmem:[#allocation2 + $0x60] sm:$0xff]
      %v689 = vld [vmem:[#allocation2 + $0x68] sm:$0xff]
      %v690 = vld [vmem:[#allocation2 + $0x78] sm:$0xff]
      %v691 = vld [vmem:[#allocation2 + $0x80] sm:$0xff]
      %v692 = vld [vmem:[#allocation2 + $0x90] sm:$0xff]
      %v693 = vld [vmem:[#allocation2 + $0x98] sm:$0xff]
      %v694 = vld [vmem:[#allocation2 + $0xa8] sm:$0xff]
      %v695 = vld [vmem:[#allocation2 + $0xb0] sm:$0xff]
      %v696 = vld [vmem:[#allocation2 + $0xc0] sm:$0xff]
      %v697 = vld [vmem:[#allocation2 + $0xc8] sm:$0xff]
      %v698 = vld [vmem:[#allocation2 + $0xd8] sm:$0xff]
      %v699 = vld [vmem:[#allocation2 + $0xe0] sm:$0xff]
      %v700 = vld [vmem:[#allocation2 + $0xf0] sm:$0xff]
      %v701 = vld [vmem:[#allocation2 + $0xf8] sm:$0xff]
      %v702 = vld [vmem:[#allocation2 + $0x108] sm:$0xff]
      %v703 = vld [vmem:[#allocation2 + $0x110] sm:$0xff]
      %v704 = vld [vmem:[#allocation2 + $0x120] sm:$0xff]
      %v705 = vld [vmem:[#allocation2 + $0x128] sm:$0xff]
      %v706 = vld [vmem:[#allocation2 + $0x138] sm:$0xff]
      %v707 = vld [vmem:[#allocation2 + $0x140] sm:$0xff]
      %v708 = vld [vmem:[#allocation2 + $0x150] sm:$0xff]
      %v709 = vld [vmem:[#allocation2 + $0x158] sm:$0xff]
      %v710 = vld [vmem:[#allocation2 + $0x168] sm:$0xff]
      %v711 = vld [vmem:[#allocation2 + $0x170] sm:$0xff]
      %712 = vst.msk [vmem:[#allocation3] sm:$0xff] %vm598, %v680
      %713 = vst.msk [vmem:[#allocation3 + $0x8] sm:$0xff] %vm598, %v681
      %714 = vst.msk [vmem:[#allocation3 + $0x10] sm:$0xff] %vm598, %v682
      %715 = vst.msk [vmem:[#allocation3 + $0x18] sm:$0xff] %vm598, %v683
      %716 = vst.msk [vmem:[#allocation3 + $0x20] sm:$0xff] %vm598, %v684
      %717 = vst.msk [vmem:[#allocation3 + $0x28] sm:$0xff] %vm598, %v685
      %718 = vst.msk [vmem:[#allocation3 + $0x30] sm:$0xff] %vm598, %v686
      %719 = vst.msk [vmem:[#allocation3 + $0x38] sm:$0xff] %vm598, %v687
      %720 = vst.msk [vmem:[#allocation3 + $0x40] sm:$0xff] %vm598, %v688
      %721 = vst.msk [vmem:[#allocation3 + $0x48] sm:$0xff] %vm598, %v689
      %722 = vst.msk [vmem:[#allocation3 + $0x50] sm:$0xff] %vm598, %v690
      %723 = vst.msk [vmem:[#allocation3 + $0x58] sm:$0xff] %vm598, %v691
      %724 = vst.msk [vmem:[#allocation3 + $0x60] sm:$0xff] %vm598, %v692
      %725 = vst.msk [vmem:[#allocation3 + $0x68] sm:$0xff] %vm598, %v693
      %726 = vst.msk [vmem:[#allocation3 + $0x70] sm:$0xff] %vm598, %v694
      %727 = vst.msk [vmem:[#allocation3 + $0x78] sm:$0xff] %vm598, %v695
      %728 = vst.msk [vmem:[#allocation3 + $0x80] sm:$0xff] %vm598, %v696
      %729 = vst.msk [vmem:[#allocation3 + $0x88] sm:$0xff] %vm598, %v697
      %730 = vst.msk [vmem:[#allocation3 + $0x90] sm:$0xff] %vm598, %v698
      %731 = vst.msk [vmem:[#allocation3 + $0x98] sm:$0xff] %vm598, %v699
      %732 = vst.msk [vmem:[#allocation3 + $0xa0] sm:$0xff] %vm598, %v700
      %733 = vst.msk [vmem:[#allocation3 + $0xa8] sm:$0xff] %vm598, %v701
      %734 = vst.msk [vmem:[#allocation3 + $0xb0] sm:$0xff] %vm598, %v702
      %735 = vst.msk [vmem:[#allocation3 + $0xb8] sm:$0xff] %vm598, %v703
      %736 = vst.msk [vmem:[#allocation3 + $0xc0] sm:$0xff] %vm598, %v704
      %737 = vst.msk [vmem:[#allocation3 + $0xc8] sm:$0xff] %vm598, %v705
      %738 = vst.msk [vmem:[#allocation3 + $0xd0] sm:$0xff] %vm598, %v706
      %739 = vst.msk [vmem:[#allocation3 + $0xd8] sm:$0xff] %vm598, %v707
      %740 = vst.msk [vmem:[#allocation3 + $0xe0] sm:$0xff] %vm598, %v708
      %741 = vst.msk [vmem:[#allocation3 + $0xe8] sm:$0xff] %vm598, %v709
      %742 = vst.msk [vmem:[#allocation3 + $0xf0] sm:$0xff] %vm598, %v710
      %743 = vst.msk [vmem:[#allocation3 + $0xf8] sm:$0xff] %vm598, %v711
      %v744 = vld [vmem:[#allocation2 + $0x1] sm:$0xff]
      %v745 = vld [vmem:[#allocation2 + $0x9] sm:$0xff]
      %v746 = vld [vmem:[#allocation2 + $0x19] sm:$0xff]
      %v747 = vld [vmem:[#allocation2 + $0x21] sm:$0xff]
      %v748 = vld [vmem:[#allocation2 + $0x31] sm:$0xff]
      %v749 = vld [vmem:[#allocation2 + $0x39] sm:$0xff]
      %v750 = vld [vmem:[#allocation2 + $0x49] sm:$0xff]
      %v751 = vld [vmem:[#allocation2 + $0x51] sm:$0xff]
      %v752 = vld [vmem:[#allocation2 + $0x61] sm:$0xff]
      %v753 = vld [vmem:[#allocation2 + $0x69] sm:$0xff]
      %v754 = vld [vmem:[#allocation2 + $0x79] sm:$0xff]
      %v755 = vld [vmem:[#allocation2 + $0x81] sm:$0xff]
      %v756 = vld [vmem:[#allocation2 + $0x91] sm:$0xff]
      %v757 = vld [vmem:[#allocation2 + $0x99] sm:$0xff]
      %v758 = vld [vmem:[#allocation2 + $0xa9] sm:$0xff]
      %v759 = vld [vmem:[#allocation2 + $0xb1] sm:$0xff]
      %v760 = vld [vmem:[#allocation2 + $0xc1] sm:$0xff]
      %v761 = vld [vmem:[#allocation2 + $0xc9] sm:$0xff]
      %v762 = vld [vmem:[#allocation2 + $0xd9] sm:$0xff]
      %v763 = vld [vmem:[#allocation2 + $0xe1] sm:$0xff]
      %v764 = vld [vmem:[#allocation2 + $0xf1] sm:$0xff]
      %v765 = vld [vmem:[#allocation2 + $0xf9] sm:$0xff]
      %v766 = vld [vmem:[#allocation2 + $0x109] sm:$0xff]
      %v767 = vld [vmem:[#allocation2 + $0x111] sm:$0xff]
      %v768 = vld [vmem:[#allocation2 + $0x121] sm:$0xff]
      %v769 = vld [vmem:[#allocation2 + $0x129] sm:$0xff]
      %v770 = vld [vmem:[#allocation2 + $0x139] sm:$0xff]
      %v771 = vld [vmem:[#allocation2 + $0x141] sm:$0xff]
      %v772 = vld [vmem:[#allocation2 + $0x151] sm:$0xff]
      %v773 = vld [vmem:[#allocation2 + $0x159] sm:$0xff]
      %v774 = vld [vmem:[#allocation2 + $0x169] sm:$0xff]
      %v775 = vld [vmem:[#allocation2 + $0x171] sm:$0xff]
      %808 = vrot.lane.b32.xlu0 %v744, 8
      %v809 = vpop.permute.xlu0 %808
      %810 = vrot.lane.b32.xlu0 %v745, 8
      %v811 = vpop.permute.xlu0 %810
      %812 = vrot.lane.b32.xlu0 %v746, 8
      %v813 = vpop.permute.xlu0 %812
      %814 = vrot.lane.b32.xlu0 %v747, 8
      %v815 = vpop.permute.xlu0 %814
      %816 = vrot.lane.b32.xlu0 %v748, 8
      %v817 = vpop.permute.xlu0 %816
      %818 = vrot.lane.b32.xlu0 %v749, 8
      %v819 = vpop.permute.xlu0 %818
      %820 = vrot.lane.b32.xlu0 %v750, 8
      %v821 = vpop.permute.xlu0 %820
      %822 = vrot.lane.b32.xlu0 %v751, 8
      %v823 = vpop.permute.xlu0 %822
      %824 = vrot.lane.b32.xlu0 %v752, 8
      %v825 = vpop.permute.xlu0 %824
      %826 = vrot.lane.b32.xlu0 %v753, 8
      %v827 = vpop.permute.xlu0 %826
      %828 = vrot.lane.b32.xlu0 %v754, 8
      %v829 = vpop.permute.xlu0 %828
      %830 = vrot.lane.b32.xlu0 %v755, 8
      %v831 = vpop.permute.xlu0 %830
      %832 = vrot.lane.b32.xlu0 %v756, 8
      %v833 = vpop.permute.xlu0 %832
      %834 = vrot.lane.b32.xlu0 %v757, 8
      %v835 = vpop.permute.xlu0 %834
      %836 = vrot.lane.b32.xlu0 %v758, 8
      %v837 = vpop.permute.xlu0 %836
      %838 = vrot.lane.b32.xlu0 %v759, 8
      %v839 = vpop.permute.xlu0 %838
      %840 = vrot.lane.b32.xlu0 %v760, 8
      %v841 = vpop.permute.xlu0 %840
      %842 = vrot.lane.b32.xlu0 %v761, 8
      %v843 = vpop.permute.xlu0 %842
      %844 = vrot.lane.b32.xlu0 %v762, 8
      %v845 = vpop.permute.xlu0 %844
      %846 = vrot.lane.b32.xlu0 %v763, 8
      %v847 = vpop.permute.xlu0 %846
      %848 = vrot.lane.b32.xlu0 %v764, 8
      %v849 = vpop.permute.xlu0 %848
      %850 = vrot.lane.b32.xlu0 %v765, 8
      %v851 = vpop.permute.xlu0 %850
      %852 = vrot.lane.b32.xlu0 %v766, 8
      %v853 = vpop.permute.xlu0 %852
      %854 = vrot.lane.b32.xlu0 %v767, 8
      %v855 = vpop.permute.xlu0 %854
      %856 = vrot.lane.b32.xlu0 %v768, 8
      %v857 = vpop.permute.xlu0 %856
      %858 = vrot.lane.b32.xlu0 %v769, 8
      %v859 = vpop.permute.xlu0 %858
      %860 = vrot.lane.b32.xlu0 %v770, 8
      %v861 = vpop.permute.xlu0 %860
      %862 = vrot.lane.b32.xlu0 %v771, 8
      %v863 = vpop.permute.xlu0 %862
      %864 = vrot.lane.b32.xlu0 %v772, 8
      %v865 = vpop.permute.xlu0 %864
      %866 = vrot.lane.b32.xlu0 %v773, 8
      %v867 = vpop.permute.xlu0 %866
      %868 = vrot.lane.b32.xlu0 %v774, 8
      %v869 = vpop.permute.xlu0 %868
      %870 = vrot.lane.b32.xlu0 %v775, 8
      %v871 = vpop.permute.xlu0 %870
      %vm904 = vcmask 130112
      %905 = vst.msk [vmem:[#allocation3] sm:$0xff] %vm904, %v809
      %906 = vst.msk [vmem:[#allocation3 + $0x8] sm:$0xff] %vm904, %v811
      %907 = vst.msk [vmem:[#allocation3 + $0x10] sm:$0xff] %vm904, %v813
      %908 = vst.msk [vmem:[#allocation3 + $0x18] sm:$0xff] %vm904, %v815
      %909 = vst.msk [vmem:[#allocation3 + $0x20] sm:$0xff] %vm904, %v817
      %910 = vst.msk [vmem:[#allocation3 + $0x28] sm:$0xff] %vm904, %v819
      %911 = vst.msk [vmem:[#allocation3 + $0x30] sm:$0xff] %vm904, %v821
      %912 = vst.msk [vmem:[#allocation3 + $0x38] sm:$0xff] %vm904, %v823
      %913 = vst.msk [vmem:[#allocation3 + $0x40] sm:$0xff] %vm904, %v825
      %914 = vst.msk [vmem:[#allocation3 + $0x48] sm:$0xff] %vm904, %v827
      %915 = vst.msk [vmem:[#allocation3 + $0x50] sm:$0xff] %vm904, %v829
      %916 = vst.msk [vmem:[#allocation3 + $0x58] sm:$0xff] %vm904, %v831
      %917 = vst.msk [vmem:[#allocation3 + $0x60] sm:$0xff] %vm904, %v833
      %918 = vst.msk [vmem:[#allocation3 + $0x68] sm:$0xff] %vm904, %v835
      %919 = vst.msk [vmem:[#allocation3 + $0x70] sm:$0xff] %vm904, %v837
      %920 = vst.msk [vmem:[#allocation3 + $0x78] sm:$0xff] %vm904, %v839
      %921 = vst.msk [vmem:[#allocation3 + $0x80] sm:$0xff] %vm904, %v841
      %922 = vst.msk [vmem:[#allocation3 + $0x88] sm:$0xff] %vm904, %v843
      %923 = vst.msk [vmem:[#allocation3 + $0x90] sm:$0xff] %vm904, %v845
      %924 = vst.msk [vmem:[#allocation3 + $0x98] sm:$0xff] %vm904, %v847
      %925 = vst.msk [vmem:[#allocation3 + $0xa0] sm:$0xff] %vm904, %v849
      %926 = vst.msk [vmem:[#allocation3 + $0xa8] sm:$0xff] %vm904, %v851
      %927 = vst.msk [vmem:[#allocation3 + $0xb0] sm:$0xff] %vm904, %v853
      %928 = vst.msk [vmem:[#allocation3 + $0xb8] sm:$0xff] %vm904, %v855
      %929 = vst.msk [vmem:[#allocation3 + $0xc0] sm:$0xff] %vm904, %v857
      %930 = vst.msk [vmem:[#allocation3 + $0xc8] sm:$0xff] %vm904, %v859
      %931 = vst.msk [vmem:[#allocation3 + $0xd0] sm:$0xff] %vm904, %v861
      %932 = vst.msk [vmem:[#allocation3 + $0xd8] sm:$0xff] %vm904, %v863
      %933 = vst.msk [vmem:[#allocation3 + $0xe0] sm:$0xff] %vm904, %v865
      %934 = vst.msk [vmem:[#allocation3 + $0xe8] sm:$0xff] %vm904, %v867
      %935 = vst.msk [vmem:[#allocation3 + $0xf0] sm:$0xff] %vm904, %v869
      %936 = vst.msk [vmem:[#allocation3 + $0xf8] sm:$0xff] %vm904, %v871
      %v937 = vld [vmem:[#allocation2 + $0x2] sm:$0xff]
      %v938 = vld [vmem:[#allocation2 + $0xa] sm:$0xff]
      %v939 = vld [vmem:[#allocation2 + $0x1a] sm:$0xff]
      %v940 = vld [vmem:[#allocation2 + $0x22] sm:$0xff]
      %v941 = vld [vmem:[#allocation2 + $0x32] sm:$0xff]
      %v942 = vld [vmem:[#allocation2 + $0x3a] sm:$0xff]
      %v943 = vld [vmem:[#allocation2 + $0x4a] sm:$0xff]
      %v944 = vld [vmem:[#allocation2 + $0x52] sm:$0xff]
      %v945 = vld [vmem:[#allocation2 + $0x62] sm:$0xff]
      %v946 = vld [vmem:[#allocation2 + $0x6a] sm:$0xff]
      %v947 = vld [vmem:[#allocation2 + $0x7a] sm:$0xff]
      %v948 = vld [vmem:[#allocation2 + $0x82] sm:$0xff]
      %v949 = vld [vmem:[#allocation2 + $0x92] sm:$0xff]
      %v950 = vld [vmem:[#allocation2 + $0x9a] sm:$0xff]
      %v951 = vld [vmem:[#allocation2 + $0xaa] sm:$0xff]
      %v952 = vld [vmem:[#allocation2 + $0xb2] sm:$0xff]
      %v953 = vld [vmem:[#allocation2 + $0xc2] sm:$0xff]
      %v954 = vld [vmem:[#allocation2 + $0xca] sm:$0xff]
      %v955 = vld [vmem:[#allocation2 + $0xda] sm:$0xff]
      %v956 = vld [vmem:[#allocation2 + $0xe2] sm:$0xff]
      %v957 = vld [vmem:[#allocation2 + $0xf2] sm:$0xff]
      %v958 = vld [vmem:[#allocation2 + $0xfa] sm:$0xff]
      %v959 = vld [vmem:[#allocation2 + $0x10a] sm:$0xff]
      %v960 = vld [vmem:[#allocation2 + $0x112] sm:$0xff]
      %v961 = vld [vmem:[#allocation2 + $0x122] sm:$0xff]
      %v962 = vld [vmem:[#allocation2 + $0x12a] sm:$0xff]
      %v963 = vld [vmem:[#allocation2 + $0x13a] sm:$0xff]
      %v964 = vld [vmem:[#allocation2 + $0x142] sm:$0xff]
      %v965 = vld [vmem:[#allocation2 + $0x152] sm:$0xff]
      %v966 = vld [vmem:[#allocation2 + $0x15a] sm:$0xff]
      %v967 = vld [vmem:[#allocation2 + $0x16a] sm:$0xff]
      %v968 = vld [vmem:[#allocation2 + $0x172] sm:$0xff]
      %1001 = vrot.lane.b32.xlu0 %v937, 16
      %v1002 = vpop.permute.xlu0 %1001
      %1003 = vrot.lane.b32.xlu0 %v938, 16
      %v1004 = vpop.permute.xlu0 %1003
      %1005 = vrot.lane.b32.xlu0 %v939, 16
      %v1006 = vpop.permute.xlu0 %1005
      %1007 = vrot.lane.b32.xlu0 %v940, 16
      %v1008 = vpop.permute.xlu0 %1007
      %1009 = vrot.lane.b32.xlu0 %v941, 16
      %v1010 = vpop.permute.xlu0 %1009
      %1011 = vrot.lane.b32.xlu0 %v942, 16
      %v1012 = vpop.permute.xlu0 %1011
      %1013 = vrot.lane.b32.xlu0 %v943, 16
      %v1014 = vpop.permute.xlu0 %1013
      %1015 = vrot.lane.b32.xlu0 %v944, 16
      %v1016 = vpop.permute.xlu0 %1015
      %1017 = vrot.lane.b32.xlu0 %v945, 16
      %v1018 = vpop.permute.xlu0 %1017
      %1019 = vrot.lane.b32.xlu0 %v946, 16
      %v1020 = vpop.permute.xlu0 %1019
      %1021 = vrot.lane.b32.xlu0 %v947, 16
      %v1022 = vpop.permute.xlu0 %1021
      %1023 = vrot.lane.b32.xlu0 %v948, 16
      %v1024 = vpop.permute.xlu0 %1023
      %1025 = vrot.lane.b32.xlu0 %v949, 16
      %v1026 = vpop.permute.xlu0 %1025
      %1027 = vrot.lane.b32.xlu0 %v950, 16
      %v1028 = vpop.permute.xlu0 %1027
      %1029 = vrot.lane.b32.xlu0 %v951, 16
      %v1030 = vpop.permute.xlu0 %1029
      %1031 = vrot.lane.b32.xlu0 %v952, 16
      %v1032 = vpop.permute.xlu0 %1031
      %1033 = vrot.lane.b32.xlu0 %v953, 16
      %v1034 = vpop.permute.xlu0 %1033
      %1035 = vrot.lane.b32.xlu0 %v954, 16
      %v1036 = vpop.permute.xlu0 %1035
      %1037 = vrot.lane.b32.xlu0 %v955, 16
      %v1038 = vpop.permute.xlu0 %1037
      %1039 = vrot.lane.b32.xlu0 %v956, 16
      %v1040 = vpop.permute.xlu0 %1039
      %1041 = vrot.lane.b32.xlu0 %v957, 16
      %v1042 = vpop.permute.xlu0 %1041
      %1043 = vrot.lane.b32.xlu0 %v958, 16
      %v1044 = vpop.permute.xlu0 %1043
      %1045 = vrot.lane.b32.xlu0 %v959, 16
      %v1046 = vpop.permute.xlu0 %1045
      %1047 = vrot.lane.b32.xlu0 %v960, 16
      %v1048 = vpop.permute.xlu0 %1047
      %1049 = vrot.lane.b32.xlu0 %v961, 16
      %v1050 = vpop.permute.xlu0 %1049
      %1051 = vrot.lane.b32.xlu0 %v962, 16
      %v1052 = vpop.permute.xlu0 %1051
      %1053 = vrot.lane.b32.xlu0 %v963, 16
      %v1054 = vpop.permute.xlu0 %1053
      %1055 = vrot.lane.b32.xlu0 %v964, 16
      %v1056 = vpop.permute.xlu0 %1055
      %1057 = vrot.lane.b32.xlu0 %v965, 16
      %v1058 = vpop.permute.xlu0 %1057
      %1059 = vrot.lane.b32.xlu0 %v966, 16
      %v1060 = vpop.permute.xlu0 %1059
      %1061 = vrot.lane.b32.xlu0 %v967, 16
      %v1062 = vpop.permute.xlu0 %1061
      %1063 = vrot.lane.b32.xlu0 %v968, 16
      %v1064 = vpop.permute.xlu0 %1063
      %vm1097 = vcmask 195712
      %1098 = vst.msk [vmem:[#allocation3] sm:$0xff] %vm1097, %v1002
      %1099 = vst.msk [vmem:[#allocation3 + $0x8] sm:$0xff] %vm1097, %v1004
      %1100 = vst.msk [vmem:[#allocation3 + $0x10] sm:$0xff] %vm1097, %v1006
      %1101 = vst.msk [vmem:[#allocation3 + $0x18] sm:$0xff] %vm1097, %v1008
      %1102 = vst.msk [vmem:[#allocation3 + $0x20] sm:$0xff] %vm1097, %v1010
      %1103 = vst.msk [vmem:[#allocation3 + $0x28] sm:$0xff] %vm1097, %v1012
      %1104 = vst.msk [vmem:[#allocation3 + $0x30] sm:$0xff] %vm1097, %v1014
      %1105 = vst.msk [vmem:[#allocation3 + $0x38] sm:$0xff] %vm1097, %v1016
      %1106 = vst.msk [vmem:[#allocation3 + $0x40] sm:$0xff] %vm1097, %v1018
      %1107 = vst.msk [vmem:[#allocation3 + $0x48] sm:$0xff] %vm1097, %v1020
      %1108 = vst.msk [vmem:[#allocation3 + $0x50] sm:$0xff] %vm1097, %v1022
      %1109 = vst.msk [vmem:[#allocation3 + $0x58] sm:$0xff] %vm1097, %v1024
      %1110 = vst.msk [vmem:[#allocation3 + $0x60] sm:$0xff] %vm1097, %v1026
      %1111 = vst.msk [vmem:[#allocation3 + $0x68] sm:$0xff] %vm1097, %v1028
      %1112 = vst.msk [vmem:[#allocation3 + $0x70] sm:$0xff] %vm1097, %v1030
      %1113 = vst.msk [vmem:[#allocation3 + $0x78] sm:$0xff] %vm1097, %v1032
      %1114 = vst.msk [vmem:[#allocation3 + $0x80] sm:$0xff] %vm1097, %v1034
      %1115 = vst.msk [vmem:[#allocation3 + $0x88] sm:$0xff] %vm1097, %v1036
      %1116 = vst.msk [vmem:[#allocation3 + $0x90] sm:$0xff] %vm1097, %v1038
      %1117 = vst.msk [vmem:[#allocation3 + $0x98] sm:$0xff] %vm1097, %v1040
      %1118 = vst.msk [vmem:[#allocation3 + $0xa0] sm:$0xff] %vm1097, %v1042
      %1119 = vst.msk [vmem:[#allocation3 + $0xa8] sm:$0xff] %vm1097, %v1044
      %1120 = vst.msk [vmem:[#allocation3 + $0xb0] sm:$0xff] %vm1097, %v1046
      %1121 = vst.msk [vmem:[#allocation3 + $0xb8] sm:$0xff] %vm1097, %v1048
      %1122 = vst.msk [vmem:[#allocation3 + $0xc0] sm:$0xff] %vm1097, %v1050
      %1123 = vst.msk [vmem:[#allocation3 + $0xc8] sm:$0xff] %vm1097, %v1052
      %1124 = vst.msk [vmem:[#allocation3 + $0xd0] sm:$0xff] %vm1097, %v1054
      %1125 = vst.msk [vmem:[#allocation3 + $0xd8] sm:$0xff] %vm1097, %v1056
      %1126 = vst.msk [vmem:[#allocation3 + $0xe0] sm:$0xff] %vm1097, %v1058
      %1127 = vst.msk [vmem:[#allocation3 + $0xe8] sm:$0xff] %vm1097, %v1060
      %1128 = vst.msk [vmem:[#allocation3 + $0xf0] sm:$0xff] %vm1097, %v1062
      %1129 = vst.msk [vmem:[#allocation3 + $0xf8] sm:$0xff] %vm1097, %v1064
      %v1130 = vld [vmem:[%s336] sm:$0xff]
      %v1131 = vld [vmem:[%s336 + $0x8] sm:$0xff]
      %v1132 = vld [vmem:[%s336 + $0x18] sm:$0xff]
      %v1133 = vld [vmem:[%s336 + $0x20] sm:$0xff]
      %v1134 = vld [vmem:[%s336 + $0x30] sm:$0xff]
      %v1135 = vld [vmem:[%s336 + $0x38] sm:$0xff]
      %v1136 = vld [vmem:[%s336 + $0x48] sm:$0xff]
      %v1137 = vld [vmem:[%s336 + $0x50] sm:$0xff]
      %v1138 = vld [vmem:[%s336 + $0x60] sm:$0xff]
      %v1139 = vld [vmem:[%s336 + $0x68] sm:$0xff]
      %v1140 = vld [vmem:[%s336 + $0x78] sm:$0xff]
      %v1141 = vld [vmem:[%s336 + $0x80] sm:$0xff]
      %v1142 = vld [vmem:[%s336 + $0x90] sm:$0xff]
      %v1143 = vld [vmem:[%s336 + $0x98] sm:$0xff]
      %v1144 = vld [vmem:[%s336 + $0xa8] sm:$0xff]
      %v1145 = vld [vmem:[%s336 + $0xb0] sm:$0xff]
      %v1146 = vld [vmem:[%s336 + $0xc0] sm:$0xff]
      %v1147 = vld [vmem:[%s336 + $0xc8] sm:$0xff]
      %v1148 = vld [vmem:[%s336 + $0xd8] sm:$0xff]
      %v1149 = vld [vmem:[%s336 + $0xe0] sm:$0xff]
      %v1150 = vld [vmem:[%s336 + $0xf0] sm:$0xff]
      %v1151 = vld [vmem:[%s336 + $0xf8] sm:$0xff]
      %v1152 = vld [vmem:[%s336 + $0x108] sm:$0xff]
      %v1153 = vld [vmem:[%s336 + $0x110] sm:$0xff]
      %v1154 = vld [vmem:[%s336 + $0x120] sm:$0xff]
      %v1155 = vld [vmem:[%s336 + $0x128] sm:$0xff]
      %v1156 = vld [vmem:[%s336 + $0x138] sm:$0xff]
      %v1157 = vld [vmem:[%s336 + $0x140] sm:$0xff]
      %v1158 = vld [vmem:[%s336 + $0x150] sm:$0xff]
      %v1159 = vld [vmem:[%s336 + $0x158] sm:$0xff]
      %v1160 = vld [vmem:[%s336 + $0x168] sm:$0xff]
      %v1161 = vld [vmem:[%s336 + $0x170] sm:$0xff]
      %1194 = vrot.lane.b32.xlu0 %v1130, 24
      %v1195 = vpop.permute.xlu0 %1194
      %1196 = vrot.lane.b32.xlu0 %v1131, 24
      %v1197 = vpop.permute.xlu0 %1196
      %1198 = vrot.lane.b32.xlu0 %v1132, 24
      %v1199 = vpop.permute.xlu0 %1198
      %1200 = vrot.lane.b32.xlu0 %v1133, 24
      %v1201 = vpop.permute.xlu0 %1200
      %1202 = vrot.lane.b32.xlu0 %v1134, 24
      %v1203 = vpop.permute.xlu0 %1202
      %1204 = vrot.lane.b32.xlu0 %v1135, 24
      %v1205 = vpop.permute.xlu0 %1204
      %1206 = vrot.lane.b32.xlu0 %v1136, 24
      %v1207 = vpop.permute.xlu0 %1206
      %1208 = vrot.lane.b32.xlu0 %v1137, 24
      %v1209 = vpop.permute.xlu0 %1208
      %1210 = vrot.lane.b32.xlu0 %v1138, 24
      %v1211 = vpop.permute.xlu0 %1210
      %1212 = vrot.lane.b32.xlu0 %v1139, 24
      %v1213 = vpop.permute.xlu0 %1212
      %1214 = vrot.lane.b32.xlu0 %v1140, 24
      %v1215 = vpop.permute.xlu0 %1214
      %1216 = vrot.lane.b32.xlu0 %v1141, 24
      %v1217 = vpop.permute.xlu0 %1216
      %1218 = vrot.lane.b32.xlu0 %v1142, 24
      %v1219 = vpop.permute.xlu0 %1218
      %1220 = vrot.lane.b32.xlu0 %v1143, 24
      %v1221 = vpop.permute.xlu0 %1220
      %1222 = vrot.lane.b32.xlu0 %v1144, 24
      %v1223 = vpop.permute.xlu0 %1222
      %1224 = vrot.lane.b32.xlu0 %v1145, 24
      %v1225 = vpop.permute.xlu0 %1224
      %1226 = vrot.lane.b32.xlu0 %v1146, 24
      %v1227 = vpop.permute.xlu0 %1226
      %1228 = vrot.lane.b32.xlu0 %v1147, 24
      %v1229 = vpop.permute.xlu0 %1228
      %1230 = vrot.lane.b32.xlu0 %v1148, 24
      %v1231 = vpop.permute.xlu0 %1230
      %1232 = vrot.lane.b32.xlu0 %v1149, 24
      %v1233 = vpop.permute.xlu0 %1232
      %1234 = vrot.lane.b32.xlu0 %v1150, 24
      %v1235 = vpop.permute.xlu0 %1234
      %1236 = vrot.lane.b32.xlu0 %v1151, 24
      %v1237 = vpop.permute.xlu0 %1236
      %1238 = vrot.lane.b32.xlu0 %v1152, 24
      %v1239 = vpop.permute.xlu0 %1238
      %1240 = vrot.lane.b32.xlu0 %v1153, 24
      %v1241 = vpop.permute.xlu0 %1240
      %1242 = vrot.lane.b32.xlu0 %v1154, 24
      %v1243 = vpop.permute.xlu0 %1242
      %1244 = vrot.lane.b32.xlu0 %v1155, 24
      %v1245 = vpop.permute.xlu0 %1244
      %1246 = vrot.lane.b32.xlu0 %v1156, 24
      %v1247 = vpop.permute.xlu0 %1246
      %1248 = vrot.lane.b32.xlu0 %v1157, 24
      %v1249 = vpop.permute.xlu0 %1248
      %1250 = vrot.lane.b32.xlu0 %v1158, 24
      %v1251 = vpop.permute.xlu0 %1250
      %1252 = vrot.lane.b32.xlu0 %v1159, 24
      %v1253 = vpop.permute.xlu0 %1252
      %1254 = vrot.lane.b32.xlu0 %v1160, 24
      %v1255 = vpop.permute.xlu0 %1254
      %1256 = vrot.lane.b32.xlu0 %v1161, 24
      %v1257 = vpop.permute.xlu0 %1256
      %vm1290 = vcmask 261312
      %1291 = vst.msk [vmem:[#allocation3] sm:$0xff] %vm1290, %v1195
      %1292 = vst.msk [vmem:[#allocation3 + $0x8] sm:$0xff] %vm1290, %v1197
      %1293 = vst.msk [vmem:[#allocation3 + $0x10] sm:$0xff] %vm1290, %v1199
      %1294 = vst.msk [vmem:[#allocation3 + $0x18] sm:$0xff] %vm1290, %v1201
      %1295 = vst.msk [vmem:[#allocation3 + $0x20] sm:$0xff] %vm1290, %v1203
      %1296 = vst.msk [vmem:[#allocation3 + $0x28] sm:$0xff] %vm1290, %v1205
      %1297 = vst.msk [vmem:[#allocation3 + $0x30] sm:$0xff] %vm1290, %v1207
      %1298 = vst.msk [vmem:[#allocation3 + $0x38] sm:$0xff] %vm1290, %v1209
      %1299 = vst.msk [vmem:[#allocation3 + $0x40] sm:$0xff] %vm1290, %v1211
      %1300 = vst.msk [vmem:[#allocation3 + $0x48] sm:$0xff] %vm1290, %v1213
      %1301 = vst.msk [vmem:[#allocation3 + $0x50] sm:$0xff] %vm1290, %v1215
      %1302 = vst.msk [vmem:[#allocation3 + $0x58] sm:$0xff] %vm1290, %v1217
      %1303 = vst.msk [vmem:[#allocation3 + $0x60] sm:$0xff] %vm1290, %v1219
      %1304 = vst.msk [vmem:[#allocation3 + $0x68] sm:$0xff] %vm1290, %v1221
      %1305 = vst.msk [vmem:[#allocation3 + $0x70] sm:$0xff] %vm1290, %v1223
      %1306 = vst.msk [vmem:[#allocation3 + $0x78] sm:$0xff] %vm1290, %v1225
      %1307 = vst.msk [vmem:[#allocation3 + $0x80] sm:$0xff] %vm1290, %v1227
      %1308 = vst.msk [vmem:[#allocation3 + $0x88] sm:$0xff] %vm1290, %v1229
      %1309 = vst.msk [vmem:[#allocation3 + $0x90] sm:$0xff] %vm1290, %v1231
      %1310 = vst.msk [vmem:[#allocation3 + $0x98] sm:$0xff] %vm1290, %v1233
      %1311 = vst.msk [vmem:[#allocation3 + $0xa0] sm:$0xff] %vm1290, %v1235
      %1312 = vst.msk [vmem:[#allocation3 + $0xa8] sm:$0xff] %vm1290, %v1237
      %1313 = vst.msk [vmem:[#allocation3 + $0xb0] sm:$0xff] %vm1290, %v1239
      %1314 = vst.msk [vmem:[#allocation3 + $0xb8] sm:$0xff] %vm1290, %v1241
      %1315 = vst.msk [vmem:[#allocation3 + $0xc0] sm:$0xff] %vm1290, %v1243
      %1316 = vst.msk [vmem:[#allocation3 + $0xc8] sm:$0xff] %vm1290, %v1245
      %1317 = vst.msk [vmem:[#allocation3 + $0xd0] sm:$0xff] %vm1290, %v1247
      %1318 = vst.msk [vmem:[#allocation3 + $0xd8] sm:$0xff] %vm1290, %v1249
      %1319 = vst.msk [vmem:[#allocation3 + $0xe0] sm:$0xff] %vm1290, %v1251
      %1320 = vst.msk [vmem:[#allocation3 + $0xe8] sm:$0xff] %vm1290, %v1253
      %1321 = vst.msk [vmem:[#allocation3 + $0xf0] sm:$0xff] %vm1290, %v1255
      %1322 = vst.msk [vmem:[#allocation3 + $0xf8] sm:$0xff] %vm1290, %v1257
      %v1323 = vld [vmem:[%s336 + $0x1] sm:$0xff]
      %v1324 = vld [vmem:[%s336 + $0x9] sm:$0xff]
      %v1325 = vld [vmem:[%s336 + $0x19] sm:$0xff]
      %v1326 = vld [vmem:[%s336 + $0x21] sm:$0xff]
      %v1327 = vld [vmem:[%s336 + $0x31] sm:$0xff]
      %v1328 = vld [vmem:[%s336 + $0x39] sm:$0xff]
      %v1329 = vld [vmem:[%s336 + $0x49] sm:$0xff]
      %v1330 = vld [vmem:[%s336 + $0x51] sm:$0xff]
      %v1331 = vld [vmem:[%s336 + $0x61] sm:$0xff]
      %v1332 = vld [vmem:[%s336 + $0x69] sm:$0xff]
      %v1333 = vld [vmem:[%s336 + $0x79] sm:$0xff]
      %v1334 = vld [vmem:[%s336 + $0x81] sm:$0xff]
      %v1335 = vld [vmem:[%s336 + $0x91] sm:$0xff]
      %v1336 = vld [vmem:[%s336 + $0x99] sm:$0xff]
      %v1337 = vld [vmem:[%s336 + $0xa9] sm:$0xff]
      %v1338 = vld [vmem:[%s336 + $0xb1] sm:$0xff]
      %v1339 = vld [vmem:[%s336 + $0xc1] sm:$0xff]
      %v1340 = vld [vmem:[%s336 + $0xc9] sm:$0xff]
      %v1341 = vld [vmem:[%s336 + $0xd9] sm:$0xff]
      %v1342 = vld [vmem:[%s336 + $0xe1] sm:$0xff]
      %v1343 = vld [vmem:[%s336 + $0xf1] sm:$0xff]
      %v1344 = vld [vmem:[%s336 + $0xf9] sm:$0xff]
      %v1345 = vld [vmem:[%s336 + $0x109] sm:$0xff]
      %v1346 = vld [vmem:[%s336 + $0x111] sm:$0xff]
      %v1347 = vld [vmem:[%s336 + $0x121] sm:$0xff]
      %v1348 = vld [vmem:[%s336 + $0x129] sm:$0xff]
      %v1349 = vld [vmem:[%s336 + $0x139] sm:$0xff]
      %v1350 = vld [vmem:[%s336 + $0x141] sm:$0xff]
      %v1351 = vld [vmem:[%s336 + $0x151] sm:$0xff]
      %v1352 = vld [vmem:[%s336 + $0x159] sm:$0xff]
      %v1353 = vld [vmem:[%s336 + $0x169] sm:$0xff]
      %v1354 = vld [vmem:[%s336 + $0x171] sm:$0xff]
      %1387 = vrot.lane.b32.xlu0 %v1323, 32
      %v1388 = vpop.permute.xlu0 %1387
      %1389 = vrot.lane.b32.xlu0 %v1324, 32
      %v1390 = vpop.permute.xlu0 %1389
      %1391 = vrot.lane.b32.xlu0 %v1325, 32
      %v1392 = vpop.permute.xlu0 %1391
      %1393 = vrot.lane.b32.xlu0 %v1326, 32
      %v1394 = vpop.permute.xlu0 %1393
      %1395 = vrot.lane.b32.xlu0 %v1327, 32
      %v1396 = vpop.permute.xlu0 %1395
      %1397 = vrot.lane.b32.xlu0 %v1328, 32
      %v1398 = vpop.permute.xlu0 %1397
      %1399 = vrot.lane.b32.xlu0 %v1329, 32
      %v1400 = vpop.permute.xlu0 %1399
      %1401 = vrot.lane.b32.xlu0 %v1330, 32
      %v1402 = vpop.permute.xlu0 %1401
      %1403 = vrot.lane.b32.xlu0 %v1331, 32
      %v1404 = vpop.permute.xlu0 %1403
      %1405 = vrot.lane.b32.xlu0 %v1332, 32
      %v1406 = vpop.permute.xlu0 %1405
      %1407 = vrot.lane.b32.xlu0 %v1333, 32
      %v1408 = vpop.permute.xlu0 %1407
      %1409 = vrot.lane.b32.xlu0 %v1334, 32
      %v1410 = vpop.permute.xlu0 %1409
      %1411 = vrot.lane.b32.xlu0 %v1335, 32
      %v1412 = vpop.permute.xlu0 %1411
      %1413 = vrot.lane.b32.xlu0 %v1336, 32
      %v1414 = vpop.permute.xlu0 %1413
      %1415 = vrot.lane.b32.xlu0 %v1337, 32
      %v1416 = vpop.permute.xlu0 %1415
      %1417 = vrot.lane.b32.xlu0 %v1338, 32
      %v1418 = vpop.permute.xlu0 %1417
      %1419 = vrot.lane.b32.xlu0 %v1339, 32
      %v1420 = vpop.permute.xlu0 %1419
      %1421 = vrot.lane.b32.xlu0 %v1340, 32
      %v1422 = vpop.permute.xlu0 %1421
      %1423 = vrot.lane.b32.xlu0 %v1341, 32
      %v1424 = vpop.permute.xlu0 %1423
      %1425 = vrot.lane.b32.xlu0 %v1342, 32
      %v1426 = vpop.permute.xlu0 %1425
      %1427 = vrot.lane.b32.xlu0 %v1343, 32
      %v1428 = vpop.permute.xlu0 %1427
      %1429 = vrot.lane.b32.xlu0 %v1344, 32
      %v1430 = vpop.permute.xlu0 %1429
      %1431 = vrot.lane.b32.xlu0 %v1345, 32
      %v1432 = vpop.permute.xlu0 %1431
      %1433 = vrot.lane.b32.xlu0 %v1346, 32
      %v1434 = vpop.permute.xlu0 %1433
      %1435 = vrot.lane.b32.xlu0 %v1347, 32
      %v1436 = vpop.permute.xlu0 %1435
      %1437 = vrot.lane.b32.xlu0 %v1348, 32
      %v1438 = vpop.permute.xlu0 %1437
      %1439 = vrot.lane.b32.xlu0 %v1349, 32
      %v1440 = vpop.permute.xlu0 %1439
      %1441 = vrot.lane.b32.xlu0 %v1350, 32
      %v1442 = vpop.permute.xlu0 %1441
      %1443 = vrot.lane.b32.xlu0 %v1351, 32
      %v1444 = vpop.permute.xlu0 %1443
      %1445 = vrot.lane.b32.xlu0 %v1352, 32
      %v1446 = vpop.permute.xlu0 %1445
      %1447 = vrot.lane.b32.xlu0 %v1353, 32
      %v1448 = vpop.permute.xlu0 %1447
      %1449 = vrot.lane.b32.xlu0 %v1354, 32
      %v1450 = vpop.permute.xlu0 %1449
      %vm1483 = vcmask 326912
      %1484 = vst.msk [vmem:[#allocation3] sm:$0xff] %vm1483, %v1388
      %1485 = vst.msk [vmem:[#allocation3 + $0x8] sm:$0xff] %vm1483, %v1390
      %1486 = vst.msk [vmem:[#allocation3 + $0x10] sm:$0xff] %vm1483, %v1392
      %1487 = vst.msk [vmem:[#allocation3 + $0x18] sm:$0xff] %vm1483, %v1394
      %1488 = vst.msk [vmem:[#allocation3 + $0x20] sm:$0xff] %vm1483, %v1396
      %1489 = vst.msk [vmem:[#allocation3 + $0x28] sm:$0xff] %vm1483, %v1398
      %1490 = vst.msk [vmem:[#allocation3 + $0x30] sm:$0xff] %vm1483, %v1400
      %1491 = vst.msk [vmem:[#allocation3 + $0x38] sm:$0xff] %vm1483, %v1402
      %1492 = vst.msk [vmem:[#allocation3 + $0x40] sm:$0xff] %vm1483, %v1404
      %1493 = vst.msk [vmem:[#allocation3 + $0x48] sm:$0xff] %vm1483, %v1406
      %1494 = vst.msk [vmem:[#allocation3 + $0x50] sm:$0xff] %vm1483, %v1408
      %1495 = vst.msk [vmem:[#allocation3 + $0x58] sm:$0xff] %vm1483, %v1410
      %1496 = vst.msk [vmem:[#allocation3 + $0x60] sm:$0xff] %vm1483, %v1412
      %1497 = vst.msk [vmem:[#allocation3 + $0x68] sm:$0xff] %vm1483, %v1414
      %1498 = vst.msk [vmem:[#allocation3 + $0x70] sm:$0xff] %vm1483, %v1416
      %1499 = vst.msk [vmem:[#allocation3 + $0x78] sm:$0xff] %vm1483, %v1418
      %1500 = vst.msk [vmem:[#allocation3 + $0x80] sm:$0xff] %vm1483, %v1420
      %1501 = vst.msk [vmem:[#allocation3 + $0x88] sm:$0xff] %vm1483, %v1422
      %1502 = vst.msk [vmem:[#allocation3 + $0x90] sm:$0xff] %vm1483, %v1424
      %1503 = vst.msk [vmem:[#allocation3 + $0x98] sm:$0xff] %vm1483, %v1426
      %1504 = vst.msk [vmem:[#allocation3 + $0xa0] sm:$0xff] %vm1483, %v1428
      %1505 = vst.msk [vmem:[#allocation3 + $0xa8] sm:$0xff] %vm1483, %v1430
      %1506 = vst.msk [vmem:[#allocation3 + $0xb0] sm:$0xff] %vm1483, %v1432
      %1507 = vst.msk [vmem:[#allocation3 + $0xb8] sm:$0xff] %vm1483, %v1434
      %1508 = vst.msk [vmem:[#allocation3 + $0xc0] sm:$0xff] %vm1483, %v1436
      %1509 = vst.msk [vmem:[#allocation3 + $0xc8] sm:$0xff] %vm1483, %v1438
      %1510 = vst.msk [vmem:[#allocation3 + $0xd0] sm:$0xff] %vm1483, %v1440
      %1511 = vst.msk [vmem:[#allocation3 + $0xd8] sm:$0xff] %vm1483, %v1442
      %1512 = vst.msk [vmem:[#allocation3 + $0xe0] sm:$0xff] %vm1483, %v1444
      %1513 = vst.msk [vmem:[#allocation3 + $0xe8] sm:$0xff] %vm1483, %v1446
      %1514 = vst.msk [vmem:[#allocation3 + $0xf0] sm:$0xff] %vm1483, %v1448
      %1515 = vst.msk [vmem:[#allocation3 + $0xf8] sm:$0xff] %vm1483, %v1450
      %v1516 = vld [vmem:[%s336 + $0x2] sm:$0xff]
      %v1517 = vld [vmem:[%s336 + $0xa] sm:$0xff]
      %v1518 = vld [vmem:[%s336 + $0x1a] sm:$0xff]
      %v1519 = vld [vmem:[%s336 + $0x22] sm:$0xff]
      %v1520 = vld [vmem:[%s336 + $0x32] sm:$0xff]
      %v1521 = vld [vmem:[%s336 + $0x3a] sm:$0xff]
      %v1522 = vld [vmem:[%s336 + $0x4a] sm:$0xff]
      %v1523 = vld [vmem:[%s336 + $0x52] sm:$0xff]
      %v1524 = vld [vmem:[%s336 + $0x62] sm:$0xff]
      %v1525 = vld [vmem:[%s336 + $0x6a] sm:$0xff]
      %v1526 = vld [vmem:[%s336 + $0x7a] sm:$0xff]
      %v1527 = vld [vmem:[%s336 + $0x82] sm:$0xff]
      %v1528 = vld [vmem:[%s336 + $0x92] sm:$0xff]
      %v1529 = vld [vmem:[%s336 + $0x9a] sm:$0xff]
      %v1530 = vld [vmem:[%s336 + $0xaa] sm:$0xff]
      %v1531 = vld [vmem:[%s336 + $0xb2] sm:$0xff]
      %v1532 = vld [vmem:[%s336 + $0xc2] sm:$0xff]
      %v1533 = vld [vmem:[%s336 + $0xca] sm:$0xff]
      %v1534 = vld [vmem:[%s336 + $0xda] sm:$0xff]
      %v1535 = vld [vmem:[%s336 + $0xe2] sm:$0xff]
      %v1536 = vld [vmem:[%s336 + $0xf2] sm:$0xff]
      %v1537 = vld [vmem:[%s336 + $0xfa] sm:$0xff]
      %v1538 = vld [vmem:[%s336 + $0x10a] sm:$0xff]
      %v1539 = vld [vmem:[%s336 + $0x112] sm:$0xff]
      %v1540 = vld [vmem:[%s336 + $0x122] sm:$0xff]
      %v1541 = vld [vmem:[%s336 + $0x12a] sm:$0xff]
      %v1542 = vld [vmem:[%s336 + $0x13a] sm:$0xff]
      %v1543 = vld [vmem:[%s336 + $0x142] sm:$0xff]
      %v1544 = vld [vmem:[%s336 + $0x152] sm:$0xff]
      %v1545 = vld [vmem:[%s336 + $0x15a] sm:$0xff]
      %v1546 = vld [vmem:[%s336 + $0x16a] sm:$0xff]
      %v1547 = vld [vmem:[%s336 + $0x172] sm:$0xff]
      %1580 = vrot.lane.b32.xlu0 %v1516, 40
      %v1581 = vpop.permute.xlu0 %1580
      %1582 = vrot.lane.b32.xlu0 %v1517, 40
      %v1583 = vpop.permute.xlu0 %1582
      %1584 = vrot.lane.b32.xlu0 %v1518, 40
      %v1585 = vpop.permute.xlu0 %1584
      %1586 = vrot.lane.b32.xlu0 %v1519, 40
      %v1587 = vpop.permute.xlu0 %1586
      %1588 = vrot.lane.b32.xlu0 %v1520, 40
      %v1589 = vpop.permute.xlu0 %1588
      %1590 = vrot.lane.b32.xlu0 %v1521, 40
      %v1591 = vpop.permute.xlu0 %1590
      %1592 = vrot.lane.b32.xlu0 %v1522, 40
      %v1593 = vpop.permute.xlu0 %1592
      %1594 = vrot.lane.b32.xlu0 %v1523, 40
      %v1595 = vpop.permute.xlu0 %1594
      %1596 = vrot.lane.b32.xlu0 %v1524, 40
      %v1597 = vpop.permute.xlu0 %1596
      %1598 = vrot.lane.b32.xlu0 %v1525, 40
      %v1599 = vpop.permute.xlu0 %1598
      %1600 = vrot.lane.b32.xlu0 %v1526, 40
      %v1601 = vpop.permute.xlu0 %1600
      %1602 = vrot.lane.b32.xlu0 %v1527, 40
      %v1603 = vpop.permute.xlu0 %1602
      %1604 = vrot.lane.b32.xlu0 %v1528, 40
      %v1605 = vpop.permute.xlu0 %1604
      %1606 = vrot.lane.b32.xlu0 %v1529, 40
      %v1607 = vpop.permute.xlu0 %1606
      %1608 = vrot.lane.b32.xlu0 %v1530, 40
      %v1609 = vpop.permute.xlu0 %1608
      %1610 = vrot.lane.b32.xlu0 %v1531, 40
      %v1611 = vpop.permute.xlu0 %1610
      %1612 = vrot.lane.b32.xlu0 %v1532, 40
      %v1613 = vpop.permute.xlu0 %1612
      %1614 = vrot.lane.b32.xlu0 %v1533, 40
      %v1615 = vpop.permute.xlu0 %1614
      %1616 = vrot.lane.b32.xlu0 %v1534, 40
      %v1617 = vpop.permute.xlu0 %1616
      %1618 = vrot.lane.b32.xlu0 %v1535, 40
      %v1619 = vpop.permute.xlu0 %1618
      %1620 = vrot.lane.b32.xlu0 %v1536, 40
      %v1621 = vpop.permute.xlu0 %1620
      %1622 = vrot.lane.b32.xlu0 %v1537, 40
      %v1623 = vpop.permute.xlu0 %1622
      %1624 = vrot.lane.b32.xlu0 %v1538, 40
      %v1625 = vpop.permute.xlu0 %1624
      %1626 = vrot.lane.b32.xlu0 %v1539, 40
      %v1627 = vpop.permute.xlu0 %1626
      %1628 = vrot.lane.b32.xlu0 %v1540, 40
      %v1629 = vpop.permute.xlu0 %1628
      %1630 = vrot.lane.b32.xlu0 %v1541, 40
      %v1631 = vpop.permute.xlu0 %1630
      %1632 = vrot.lane.b32.xlu0 %v1542, 40
      %v1633 = vpop.permute.xlu0 %1632
      %1634 = vrot.lane.b32.xlu0 %v1543, 40
      %v1635 = vpop.permute.xlu0 %1634
      %1636 = vrot.lane.b32.xlu0 %v1544, 40
      %v1637 = vpop.permute.xlu0 %1636
      %1638 = vrot.lane.b32.xlu0 %v1545, 40
      %v1639 = vpop.permute.xlu0 %1638
      %1640 = vrot.lane.b32.xlu0 %v1546, 40
      %v1641 = vpop.permute.xlu0 %1640
      %1642 = vrot.lane.b32.xlu0 %v1547, 40
      %v1643 = vpop.permute.xlu0 %1642
      %vm1676 = vcmask 392512
      %1677 = vst.msk [vmem:[#allocation3] sm:$0xff] %vm1676, %v1581
      %1678 = vst.msk [vmem:[#allocation3 + $0x8] sm:$0xff] %vm1676, %v1583
      %1679 = vst.msk [vmem:[#allocation3 + $0x10] sm:$0xff] %vm1676, %v1585
      %1680 = vst.msk [vmem:[#allocation3 + $0x18] sm:$0xff] %vm1676, %v1587
      %1681 = vst.msk [vmem:[#allocation3 + $0x20] sm:$0xff] %vm1676, %v1589
      %1682 = vst.msk [vmem:[#allocation3 + $0x28] sm:$0xff] %vm1676, %v1591
      %1683 = vst.msk [vmem:[#allocation3 + $0x30] sm:$0xff] %vm1676, %v1593
      %1684 = vst.msk [vmem:[#allocation3 + $0x38] sm:$0xff] %vm1676, %v1595
      %1685 = vst.msk [vmem:[#allocation3 + $0x40] sm:$0xff] %vm1676, %v1597
      %1686 = vst.msk [vmem:[#allocation3 + $0x48] sm:$0xff] %vm1676, %v1599
      %1687 = vst.msk [vmem:[#allocation3 + $0x50] sm:$0xff] %vm1676, %v1601
      %1688 = vst.msk [vmem:[#allocation3 + $0x58] sm:$0xff] %vm1676, %v1603
      %1689 = vst.msk [vmem:[#allocation3 + $0x60] sm:$0xff] %vm1676, %v1605
      %1690 = vst.msk [vmem:[#allocation3 + $0x68] sm:$0xff] %vm1676, %v1607
      %1691 = vst.msk [vmem:[#allocation3 + $0x70] sm:$0xff] %vm1676, %v1609
      %1692 = vst.msk [vmem:[#allocation3 + $0x78] sm:$0xff] %vm1676, %v1611
      %1693 = vst.msk [vmem:[#allocation3 + $0x80] sm:$0xff] %vm1676, %v1613
      %1694 = vst.msk [vmem:[#allocation3 + $0x88] sm:$0xff] %vm1676, %v1615
      %1695 = vst.msk [vmem:[#allocation3 + $0x90] sm:$0xff] %vm1676, %v1617
      %1696 = vst.msk [vmem:[#allocation3 + $0x98] sm:$0xff] %vm1676, %v1619
      %1697 = vst.msk [vmem:[#allocation3 + $0xa0] sm:$0xff] %vm1676, %v1621
      %1698 = vst.msk [vmem:[#allocation3 + $0xa8] sm:$0xff] %vm1676, %v1623
      %1699 = vst.msk [vmem:[#allocation3 + $0xb0] sm:$0xff] %vm1676, %v1625
      %1700 = vst.msk [vmem:[#allocation3 + $0xb8] sm:$0xff] %vm1676, %v1627
      %1701 = vst.msk [vmem:[#allocation3 + $0xc0] sm:$0xff] %vm1676, %v1629
      %1702 = vst.msk [vmem:[#allocation3 + $0xc8] sm:$0xff] %vm1676, %v1631
      %1703 = vst.msk [vmem:[#allocation3 + $0xd0] sm:$0xff] %vm1676, %v1633
      %1704 = vst.msk [vmem:[#allocation3 + $0xd8] sm:$0xff] %vm1676, %v1635
      %1705 = vst.msk [vmem:[#allocation3 + $0xe0] sm:$0xff] %vm1676, %v1637
      %1706 = vst.msk [vmem:[#allocation3 + $0xe8] sm:$0xff] %vm1676, %v1639
      %1707 = vst.msk [vmem:[#allocation3 + $0xf0] sm:$0xff] %vm1676, %v1641
      %1708 = vst.msk [vmem:[#allocation3 + $0xf8] sm:$0xff] %vm1676, %v1643
      %v1709 = vld [vmem:[%s595] sm:$0xff]
      %v1710 = vld [vmem:[%s595 + $0x8] sm:$0xff]
      %v1711 = vld [vmem:[%s595 + $0x18] sm:$0xff]
      %v1712 = vld [vmem:[%s595 + $0x20] sm:$0xff]
      %v1713 = vld [vmem:[%s595 + $0x30] sm:$0xff]
      %v1714 = vld [vmem:[%s595 + $0x38] sm:$0xff]
      %v1715 = vld [vmem:[%s595 + $0x48] sm:$0xff]
      %v1716 = vld [vmem:[%s595 + $0x50] sm:$0xff]
      %v1717 = vld [vmem:[%s595 + $0x60] sm:$0xff]
      %v1718 = vld [vmem:[%s595 + $0x68] sm:$0xff]
      %v1719 = vld [vmem:[%s595 + $0x78] sm:$0xff]
      %v1720 = vld [vmem:[%s595 + $0x80] sm:$0xff]
      %v1721 = vld [vmem:[%s595 + $0x90] sm:$0xff]
      %v1722 = vld [vmem:[%s595 + $0x98] sm:$0xff]
      %v1723 = vld [vmem:[%s595 + $0xa8] sm:$0xff]
      %v1724 = vld [vmem:[%s595 + $0xb0] sm:$0xff]
      %v1725 = vld [vmem:[%s595 + $0xc0] sm:$0xff]
      %v1726 = vld [vmem:[%s595 + $0xc8] sm:$0xff]
      %v1727 = vld [vmem:[%s595 + $0xd8] sm:$0xff]
      %v1728 = vld [vmem:[%s595 + $0xe0] sm:$0xff]
      %v1729 = vld [vmem:[%s595 + $0xf0] sm:$0xff]
      %v1730 = vld [vmem:[%s595 + $0xf8] sm:$0xff]
      %v1731 = vld [vmem:[%s595 + $0x108] sm:$0xff]
      %v1732 = vld [vmem:[%s595 + $0x110] sm:$0xff]
      %v1733 = vld [vmem:[%s595 + $0x120] sm:$0xff]
      %v1734 = vld [vmem:[%s595 + $0x128] sm:$0xff]
      %v1735 = vld [vmem:[%s595 + $0x138] sm:$0xff]
      %v1736 = vld [vmem:[%s595 + $0x140] sm:$0xff]
      %v1737 = vld [vmem:[%s595 + $0x150] sm:$0xff]
      %v1738 = vld [vmem:[%s595 + $0x158] sm:$0xff]
      %v1739 = vld [vmem:[%s595 + $0x168] sm:$0xff]
      %v1740 = vld [vmem:[%s595 + $0x170] sm:$0xff]
      %1773 = vrot.lane.b32.xlu0 %v1709, 48
      %v1774 = vpop.permute.xlu0 %1773
      %1775 = vrot.lane.b32.xlu0 %v1710, 48
      %v1776 = vpop.permute.xlu0 %1775
      %1777 = vrot.lane.b32.xlu0 %v1711, 48
      %v1778 = vpop.permute.xlu0 %1777
      %1779 = vrot.lane.b32.xlu0 %v1712, 48
      %v1780 = vpop.permute.xlu0 %1779
      %1781 = vrot.lane.b32.xlu0 %v1713, 48
      %v1782 = vpop.permute.xlu0 %1781
      %1783 = vrot.lane.b32.xlu0 %v1714, 48
      %v1784 = vpop.permute.xlu0 %1783
      %1785 = vrot.lane.b32.xlu0 %v1715, 48
      %v1786 = vpop.permute.xlu0 %1785
      %1787 = vrot.lane.b32.xlu0 %v1716, 48
      %v1788 = vpop.permute.xlu0 %1787
      %1789 = vrot.lane.b32.xlu0 %v1717, 48
      %v1790 = vpop.permute.xlu0 %1789
      %1791 = vrot.lane.b32.xlu0 %v1718, 48
      %v1792 = vpop.permute.xlu0 %1791
      %1793 = vrot.lane.b32.xlu0 %v1719, 48
      %v1794 = vpop.permute.xlu0 %1793
      %1795 = vrot.lane.b32.xlu0 %v1720, 48
      %v1796 = vpop.permute.xlu0 %1795
      %1797 = vrot.lane.b32.xlu0 %v1721, 48
      %v1798 = vpop.permute.xlu0 %1797
      %1799 = vrot.lane.b32.xlu0 %v1722, 48
      %v1800 = vpop.permute.xlu0 %1799
      %1801 = vrot.lane.b32.xlu0 %v1723, 48
      %v1802 = vpop.permute.xlu0 %1801
      %1803 = vrot.lane.b32.xlu0 %v1724, 48
      %v1804 = vpop.permute.xlu0 %1803
      %1805 = vrot.lane.b32.xlu0 %v1725, 48
      %v1806 = vpop.permute.xlu0 %1805
      %1807 = vrot.lane.b32.xlu0 %v1726, 48
      %v1808 = vpop.permute.xlu0 %1807
      %1809 = vrot.lane.b32.xlu0 %v1727, 48
      %v1810 = vpop.permute.xlu0 %1809
      %1811 = vrot.lane.b32.xlu0 %v1728, 48
      %v1812 = vpop.permute.xlu0 %1811
      %1813 = vrot.lane.b32.xlu0 %v1729, 48
      %v1814 = vpop.permute.xlu0 %1813
      %1815 = vrot.lane.b32.xlu0 %v1730, 48
      %v1816 = vpop.permute.xlu0 %1815
      %1817 = vrot.lane.b32.xlu0 %v1731, 48
      %v1818 = vpop.permute.xlu0 %1817
      %1819 = vrot.lane.b32.xlu0 %v1732, 48
      %v1820 = vpop.permute.xlu0 %1819
      %1821 = vrot.lane.b32.xlu0 %v1733, 48
      %v1822 = vpop.permute.xlu0 %1821
      %1823 = vrot.lane.b32.xlu0 %v1734, 48
      %v1824 = vpop.permute.xlu0 %1823
      %1825 = vrot.lane.b32.xlu0 %v1735, 48
      %v1826 = vpop.permute.xlu0 %1825
      %1827 = vrot.lane.b32.xlu0 %v1736, 48
      %v1828 = vpop.permute.xlu0 %1827
      %1829 = vrot.lane.b32.xlu0 %v1737, 48
      %v1830 = vpop.permute.xlu0 %1829
      %1831 = vrot.lane.b32.xlu0 %v1738, 48
      %v1832 = vpop.permute.xlu0 %1831
      %1833 = vrot.lane.b32.xlu0 %v1739, 48
      %v1834 = vpop.permute.xlu0 %1833
      %1835 = vrot.lane.b32.xlu0 %v1740, 48
      %v1836 = vpop.permute.xlu0 %1835
      %vm1869 = vcmask 458112
      %1870 = vst.msk [vmem:[#allocation3] sm:$0xff] %vm1869, %v1774
      %1871 = vst.msk [vmem:[#allocation3 + $0x8] sm:$0xff] %vm1869, %v1776
      %1872 = vst.msk [vmem:[#allocation3 + $0x10] sm:$0xff] %vm1869, %v1778
      %1873 = vst.msk [vmem:[#allocation3 + $0x18] sm:$0xff] %vm1869, %v1780
      %1874 = vst.msk [vmem:[#allocation3 + $0x20] sm:$0xff] %vm1869, %v1782
      %1875 = vst.msk [vmem:[#allocation3 + $0x28] sm:$0xff] %vm1869, %v1784
      %1876 = vst.msk [vmem:[#allocation3 + $0x30] sm:$0xff] %vm1869, %v1786
      %1877 = vst.msk [vmem:[#allocation3 + $0x38] sm:$0xff] %vm1869, %v1788
      %1878 = vst.msk [vmem:[#allocation3 + $0x40] sm:$0xff] %vm1869, %v1790
      %1879 = vst.msk [vmem:[#allocation3 + $0x48] sm:$0xff] %vm1869, %v1792
      %1880 = vst.msk [vmem:[#allocation3 + $0x50] sm:$0xff] %vm1869, %v1794
      %1881 = vst.msk [vmem:[#allocation3 + $0x58] sm:$0xff] %vm1869, %v1796
      %1882 = vst.msk [vmem:[#allocation3 + $0x60] sm:$0xff] %vm1869, %v1798
      %1883 = vst.msk [vmem:[#allocation3 + $0x68] sm:$0xff] %vm1869, %v1800
      %1884 = vst.msk [vmem:[#allocation3 + $0x70] sm:$0xff] %vm1869, %v1802
      %1885 = vst.msk [vmem:[#allocation3 + $0x78] sm:$0xff] %vm1869, %v1804
      %1886 = vst.msk [vmem:[#allocation3 + $0x80] sm:$0xff] %vm1869, %v1806
      %1887 = vst.msk [vmem:[#allocation3 + $0x88] sm:$0xff] %vm1869, %v1808
      %1888 = vst.msk [vmem:[#allocation3 + $0x90] sm:$0xff] %vm1869, %v1810
      %1889 = vst.msk [vmem:[#allocation3 + $0x98] sm:$0xff] %vm1869, %v1812
      %1890 = vst.msk [vmem:[#allocation3 + $0xa0] sm:$0xff] %vm1869, %v1814
      %1891 = vst.msk [vmem:[#allocation3 + $0xa8] sm:$0xff] %vm1869, %v1816
      %1892 = vst.msk [vmem:[#allocation3 + $0xb0] sm:$0xff] %vm1869, %v1818
      %1893 = vst.msk [vmem:[#allocation3 + $0xb8] sm:$0xff] %vm1869, %v1820
      %1894 = vst.msk [vmem:[#allocation3 + $0xc0] sm:$0xff] %vm1869, %v1822
      %1895 = vst.msk [vmem:[#allocation3 + $0xc8] sm:$0xff] %vm1869, %v1824
      %1896 = vst.msk [vmem:[#allocation3 + $0xd0] sm:$0xff] %vm1869, %v1826
      %1897 = vst.msk [vmem:[#allocation3 + $0xd8] sm:$0xff] %vm1869, %v1828
      %1898 = vst.msk [vmem:[#allocation3 + $0xe0] sm:$0xff] %vm1869, %v1830
      %1899 = vst.msk [vmem:[#allocation3 + $0xe8] sm:$0xff] %vm1869, %v1832
      %1900 = vst.msk [vmem:[#allocation3 + $0xf0] sm:$0xff] %vm1869, %v1834
      %1901 = vst.msk [vmem:[#allocation3 + $0xf8] sm:$0xff] %vm1869, %v1836
      %v1902 = vld [vmem:[%s595 + $0x1] sm:$0xff]
      %v1903 = vld [vmem:[%s595 + $0x9] sm:$0xff]
      %v1904 = vld [vmem:[%s595 + $0x19] sm:$0xff]
      %v1905 = vld [vmem:[%s595 + $0x21] sm:$0xff]
      %v1906 = vld [vmem:[%s595 + $0x31] sm:$0xff]
      %v1907 = vld [vmem:[%s595 + $0x39] sm:$0xff]
      %v1908 = vld [vmem:[%s595 + $0x49] sm:$0xff]
      %v1909 = vld [vmem:[%s595 + $0x51] sm:$0xff]
      %v1910 = vld [vmem:[%s595 + $0x61] sm:$0xff]
      %v1911 = vld [vmem:[%s595 + $0x69] sm:$0xff]
      %v1912 = vld [vmem:[%s595 + $0x79] sm:$0xff]
      %v1913 = vld [vmem:[%s595 + $0x81] sm:$0xff]
      %v1914 = vld [vmem:[%s595 + $0x91] sm:$0xff]
      %v1915 = vld [vmem:[%s595 + $0x99] sm:$0xff]
      %v1916 = vld [vmem:[%s595 + $0xa9] sm:$0xff]
      %v1917 = vld [vmem:[%s595 + $0xb1] sm:$0xff]
      %v1918 = vld [vmem:[%s595 + $0xc1] sm:$0xff]
      %v1919 = vld [vmem:[%s595 + $0xc9] sm:$0xff]
      %v1920 = vld [vmem:[%s595 + $0xd9] sm:$0xff]
      %v1921 = vld [vmem:[%s595 + $0xe1] sm:$0xff]
      %v1922 = vld [vmem:[%s595 + $0xf1] sm:$0xff]
      %v1923 = vld [vmem:[%s595 + $0xf9] sm:$0xff]
      %v1924 = vld [vmem:[%s595 + $0x109] sm:$0xff]
      %v1925 = vld [vmem:[%s595 + $0x111] sm:$0xff]
      %v1926 = vld [vmem:[%s595 + $0x121] sm:$0xff]
      %v1927 = vld [vmem:[%s595 + $0x129] sm:$0xff]
      %v1928 = vld [vmem:[%s595 + $0x139] sm:$0xff]
      %v1929 = vld [vmem:[%s595 + $0x141] sm:$0xff]
      %v1930 = vld [vmem:[%s595 + $0x151] sm:$0xff]
      %v1931 = vld [vmem:[%s595 + $0x159] sm:$0xff]
      %v1932 = vld [vmem:[%s595 + $0x169] sm:$0xff]
      %v1933 = vld [vmem:[%s595 + $0x171] sm:$0xff]
      %1966 = vrot.lane.b32.xlu0 %v1902, 56
      %v1967 = vpop.permute.xlu0 %1966
      %1968 = vrot.lane.b32.xlu0 %v1903, 56
      %v1969 = vpop.permute.xlu0 %1968
      %1970 = vrot.lane.b32.xlu0 %v1904, 56
      %v1971 = vpop.permute.xlu0 %1970
      %1972 = vrot.lane.b32.xlu0 %v1905, 56
      %v1973 = vpop.permute.xlu0 %1972
      %1974 = vrot.lane.b32.xlu0 %v1906, 56
      %v1975 = vpop.permute.xlu0 %1974
      %1976 = vrot.lane.b32.xlu0 %v1907, 56
      %v1977 = vpop.permute.xlu0 %1976
      %1978 = vrot.lane.b32.xlu0 %v1908, 56
      %v1979 = vpop.permute.xlu0 %1978
      %1980 = vrot.lane.b32.xlu0 %v1909, 56
      %v1981 = vpop.permute.xlu0 %1980
      %1982 = vrot.lane.b32.xlu0 %v1910, 56
      %v1983 = vpop.permute.xlu0 %1982
      %1984 = vrot.lane.b32.xlu0 %v1911, 56
      %v1985 = vpop.permute.xlu0 %1984
      %1986 = vrot.lane.b32.xlu0 %v1912, 56
      %v1987 = vpop.permute.xlu0 %1986
      %1988 = vrot.lane.b32.xlu0 %v1913, 56
      %v1989 = vpop.permute.xlu0 %1988
      %1990 = vrot.lane.b32.xlu0 %v1914, 56
      %v1991 = vpop.permute.xlu0 %1990
      %1992 = vrot.lane.b32.xlu0 %v1915, 56
      %v1993 = vpop.permute.xlu0 %1992
      %1994 = vrot.lane.b32.xlu0 %v1916, 56
      %v1995 = vpop.permute.xlu0 %1994
      %1996 = vrot.lane.b32.xlu0 %v1917, 56
      %v1997 = vpop.permute.xlu0 %1996
      %1998 = vrot.lane.b32.xlu0 %v1918, 56
      %v1999 = vpop.permute.xlu0 %1998
      %2000 = vrot.lane.b32.xlu0 %v1919, 56
      %v2001 = vpop.permute.xlu0 %2000
      %2002 = vrot.lane.b32.xlu0 %v1920, 56
      %v2003 = vpop.permute.xlu0 %2002
      %2004 = vrot.lane.b32.xlu0 %v1921, 56
      %v2005 = vpop.permute.xlu0 %2004
      %2006 = vrot.lane.b32.xlu0 %v1922, 56
      %v2007 = vpop.permute.xlu0 %2006
      %2008 = vrot.lane.b32.xlu0 %v1923, 56
      %v2009 = vpop.permute.xlu0 %2008
      %2010 = vrot.lane.b32.xlu0 %v1924, 56
      %v2011 = vpop.permute.xlu0 %2010
      %2012 = vrot.lane.b32.xlu0 %v1925, 56
      %v2013 = vpop.permute.xlu0 %2012
      %2014 = vrot.lane.b32.xlu0 %v1926, 56
      %v2015 = vpop.permute.xlu0 %2014
      %2016 = vrot.lane.b32.xlu0 %v1927, 56
      %v2017 = vpop.permute.xlu0 %2016
      %2018 = vrot.lane.b32.xlu0 %v1928, 56
      %v2019 = vpop.permute.xlu0 %2018
      %2020 = vrot.lane.b32.xlu0 %v1929, 56
      %v2021 = vpop.permute.xlu0 %2020
      %2022 = vrot.lane.b32.xlu0 %v1930, 56
      %v2023 = vpop.permute.xlu0 %2022
      %2024 = vrot.lane.b32.xlu0 %v1931, 56
      %v2025 = vpop.permute.xlu0 %2024
      %2026 = vrot.lane.b32.xlu0 %v1932, 56
      %v2027 = vpop.permute.xlu0 %2026
      %2028 = vrot.lane.b32.xlu0 %v1933, 56
      %v2029 = vpop.permute.xlu0 %2028
      %vm2062 = vcmask 523712
      %2063 = vst.msk [vmem:[#allocation3] sm:$0xff] %vm2062, %v1967
      %2064 = vst.msk [vmem:[#allocation3 + $0x8] sm:$0xff] %vm2062, %v1969
      %2065 = vst.msk [vmem:[#allocation3 + $0x10] sm:$0xff] %vm2062, %v1971
      %2066 = vst.msk [vmem:[#allocation3 + $0x18] sm:$0xff] %vm2062, %v1973
      %2067 = vst.msk [vmem:[#allocation3 + $0x20] sm:$0xff] %vm2062, %v1975
      %2068 = vst.msk [vmem:[#allocation3 + $0x28] sm:$0xff] %vm2062, %v1977
      %2069 = vst.msk [vmem:[#allocation3 + $0x30] sm:$0xff] %vm2062, %v1979
      %2070 = vst.msk [vmem:[#allocation3 + $0x38] sm:$0xff] %vm2062, %v1981
      %2071 = vst.msk [vmem:[#allocation3 + $0x40] sm:$0xff] %vm2062, %v1983
      %2072 = vst.msk [vmem:[#allocation3 + $0x48] sm:$0xff] %vm2062, %v1985
      %2073 = vst.msk [vmem:[#allocation3 + $0x50] sm:$0xff] %vm2062, %v1987
      %2074 = vst.msk [vmem:[#allocation3 + $0x58] sm:$0xff] %vm2062, %v1989
      %2075 = vst.msk [vmem:[#allocation3 + $0x60] sm:$0xff] %vm2062, %v1991
      %2076 = vst.msk [vmem:[#allocation3 + $0x68] sm:$0xff] %vm2062, %v1993
      %2077 = vst.msk [vmem:[#allocation3 + $0x70] sm:$0xff] %vm2062, %v1995
      %2078 = vst.msk [vmem:[#allocation3 + $0x78] sm:$0xff] %vm2062, %v1997
      %2079 = vst.msk [vmem:[#allocation3 + $0x80] sm:$0xff] %vm2062, %v1999
      %2080 = vst.msk [vmem:[#allocation3 + $0x88] sm:$0xff] %vm2062, %v2001
      %2081 = vst.msk [vmem:[#allocation3 + $0x90] sm:$0xff] %vm2062, %v2003
      %2082 = vst.msk [vmem:[#allocation3 + $0x98] sm:$0xff] %vm2062, %v2005
      %2083 = vst.msk [vmem:[#allocation3 + $0xa0] sm:$0xff] %vm2062, %v2007
      %2084 = vst.msk [vmem:[#allocation3 + $0xa8] sm:$0xff] %vm2062, %v2009
      %2085 = vst.msk [vmem:[#allocation3 + $0xb0] sm:$0xff] %vm2062, %v2011
      %2086 = vst.msk [vmem:[#allocation3 + $0xb8] sm:$0xff] %vm2062, %v2013
      %2087 = vst.msk [vmem:[#allocation3 + $0xc0] sm:$0xff] %vm2062, %v2015
      %2088 = vst.msk [vmem:[#allocation3 + $0xc8] sm:$0xff] %vm2062, %v2017
      %2089 = vst.msk [vmem:[#allocation3 + $0xd0] sm:$0xff] %vm2062, %v2019
      %2090 = vst.msk [vmem:[#allocation3 + $0xd8] sm:$0xff] %vm2062, %v2021
      %2091 = vst.msk [vmem:[#allocation3 + $0xe0] sm:$0xff] %vm2062, %v2023
      %2092 = vst.msk [vmem:[#allocation3 + $0xe8] sm:$0xff] %vm2062, %v2025
      %2093 = vst.msk [vmem:[#allocation3 + $0xf0] sm:$0xff] %vm2062, %v2027
      %2094 = vst.msk [vmem:[#allocation3 + $0xf8] sm:$0xff] %vm2062, %v2029
      %v2095 = vld [vmem:[%s595 + $0x2] sm:$0xff]
      %v2096 = vld [vmem:[%s595 + $0xa] sm:$0xff]
      %v2097 = vld [vmem:[%s595 + $0x1a] sm:$0xff]
      %v2098 = vld [vmem:[%s595 + $0x22] sm:$0xff]
      %v2099 = vld [vmem:[%s595 + $0x32] sm:$0xff]
      %v2100 = vld [vmem:[%s595 + $0x3a] sm:$0xff]
      %v2101 = vld [vmem:[%s595 + $0x4a] sm:$0xff]
      %v2102 = vld [vmem:[%s595 + $0x52] sm:$0xff]
      %v2103 = vld [vmem:[%s595 + $0x62] sm:$0xff]
      %v2104 = vld [vmem:[%s595 + $0x6a] sm:$0xff]
      %v2105 = vld [vmem:[%s595 + $0x7a] sm:$0xff]
      %v2106 = vld [vmem:[%s595 + $0x82] sm:$0xff]
      %v2107 = vld [vmem:[%s595 + $0x92] sm:$0xff]
      %v2108 = vld [vmem:[%s595 + $0x9a] sm:$0xff]
      %v2109 = vld [vmem:[%s595 + $0xaa] sm:$0xff]
      %v2110 = vld [vmem:[%s595 + $0xb2] sm:$0xff]
      %v2111 = vld [vmem:[%s595 + $0xc2] sm:$0xff]
      %v2112 = vld [vmem:[%s595 + $0xca] sm:$0xff]
      %v2113 = vld [vmem:[%s595 + $0xda] sm:$0xff]
      %v2114 = vld [vmem:[%s595 + $0xe2] sm:$0xff]
      %v2115 = vld [vmem:[%s595 + $0xf2] sm:$0xff]
      %v2116 = vld [vmem:[%s595 + $0xfa] sm:$0xff]
      %v2117 = vld [vmem:[%s595 + $0x10a] sm:$0xff]
      %v2118 = vld [vmem:[%s595 + $0x112] sm:$0xff]
      %v2119 = vld [vmem:[%s595 + $0x122] sm:$0xff]
      %v2120 = vld [vmem:[%s595 + $0x12a] sm:$0xff]
      %v2121 = vld [vmem:[%s595 + $0x13a] sm:$0xff]
      %v2122 = vld [vmem:[%s595 + $0x142] sm:$0xff]
      %v2123 = vld [vmem:[%s595 + $0x152] sm:$0xff]
      %v2124 = vld [vmem:[%s595 + $0x15a] sm:$0xff]
      %v2125 = vld [vmem:[%s595 + $0x16a] sm:$0xff]
      %v2126 = vld [vmem:[%s595 + $0x172] sm:$0xff]
      %2159 = vrot.lane.b32.xlu0 %v2095, 64
      %v2160 = vpop.permute.xlu0 %2159
      %2161 = vrot.lane.b32.xlu0 %v2096, 64
      %v2162 = vpop.permute.xlu0 %2161
      %2163 = vrot.lane.b32.xlu0 %v2097, 64
      %v2164 = vpop.permute.xlu0 %2163
      %2165 = vrot.lane.b32.xlu0 %v2098, 64
      %v2166 = vpop.permute.xlu0 %2165
      %2167 = vrot.lane.b32.xlu0 %v2099, 64
      %v2168 = vpop.permute.xlu0 %2167
      %2169 = vrot.lane.b32.xlu0 %v2100, 64
      %v2170 = vpop.permute.xlu0 %2169
      %2171 = vrot.lane.b32.xlu0 %v2101, 64
      %v2172 = vpop.permute.xlu0 %2171
      %2173 = vrot.lane.b32.xlu0 %v2102, 64
      %v2174 = vpop.permute.xlu0 %2173
      %2175 = vrot.lane.b32.xlu0 %v2103, 64
      %v2176 = vpop.permute.xlu0 %2175
      %2177 = vrot.lane.b32.xlu0 %v2104, 64
      %v2178 = vpop.permute.xlu0 %2177
      %2179 = vrot.lane.b32.xlu0 %v2105, 64
      %v2180 = vpop.permute.xlu0 %2179
      %2181 = vrot.lane.b32.xlu0 %v2106, 64
      %v2182 = vpop.permute.xlu0 %2181
      %2183 = vrot.lane.b32.xlu0 %v2107, 64
      %v2184 = vpop.permute.xlu0 %2183
      %2185 = vrot.lane.b32.xlu0 %v2108, 64
      %v2186 = vpop.permute.xlu0 %2185
      %2187 = vrot.lane.b32.xlu0 %v2109, 64
      %v2188 = vpop.permute.xlu0 %2187
      %2189 = vrot.lane.b32.xlu0 %v2110, 64
      %v2190 = vpop.permute.xlu0 %2189
      %2191 = vrot.lane.b32.xlu0 %v2111, 64
      %v2192 = vpop.permute.xlu0 %2191
      %2193 = vrot.lane.b32.xlu0 %v2112, 64
      %v2194 = vpop.permute.xlu0 %2193
      %2195 = vrot.lane.b32.xlu0 %v2113, 64
      %v2196 = vpop.permute.xlu0 %2195
      %2197 = vrot.lane.b32.xlu0 %v2114, 64
      %v2198 = vpop.permute.xlu0 %2197
      %2199 = vrot.lane.b32.xlu0 %v2115, 64
      %v2200 = vpop.permute.xlu0 %2199
      %2201 = vrot.lane.b32.xlu0 %v2116, 64
      %v2202 = vpop.permute.xlu0 %2201
      %2203 = vrot.lane.b32.xlu0 %v2117, 64
      %v2204 = vpop.permute.xlu0 %2203
      %2205 = vrot.lane.b32.xlu0 %v2118, 64
      %v2206 = vpop.permute.xlu0 %2205
      %2207 = vrot.lane.b32.xlu0 %v2119, 64
      %v2208 = vpop.permute.xlu0 %2207
      %2209 = vrot.lane.b32.xlu0 %v2120, 64
      %v2210 = vpop.permute.xlu0 %2209
      %2211 = vrot.lane.b32.xlu0 %v2121, 64
      %v2212 = vpop.permute.xlu0 %2211
      %2213 = vrot.lane.b32.xlu0 %v2122, 64
      %v2214 = vpop.permute.xlu0 %2213
      %2215 = vrot.lane.b32.xlu0 %v2123, 64
      %v2216 = vpop.permute.xlu0 %2215
      %2217 = vrot.lane.b32.xlu0 %v2124, 64
      %v2218 = vpop.permute.xlu0 %2217
      %2219 = vrot.lane.b32.xlu0 %v2125, 64
      %v2220 = vpop.permute.xlu0 %2219
      %2221 = vrot.lane.b32.xlu0 %v2126, 64
      %v2222 = vpop.permute.xlu0 %2221
      %vm2255 = vcmask 589312
      %2256 = vst.msk [vmem:[#allocation3] sm:$0xff] %vm2255, %v2160
      %2257 = vst.msk [vmem:[#allocation3 + $0x8] sm:$0xff] %vm2255, %v2162
      %2258 = vst.msk [vmem:[#allocation3 + $0x10] sm:$0xff] %vm2255, %v2164
      %2259 = vst.msk [vmem:[#allocation3 + $0x18] sm:$0xff] %vm2255, %v2166
      %2260 = vst.msk [vmem:[#allocation3 + $0x20] sm:$0xff] %vm2255, %v2168
      %2261 = vst.msk [vmem:[#allocation3 + $0x28] sm:$0xff] %vm2255, %v2170
      %2262 = vst.msk [vmem:[#allocation3 + $0x30] sm:$0xff] %vm2255, %v2172
      %2263 = vst.msk [vmem:[#allocation3 + $0x38] sm:$0xff] %vm2255, %v2174
      %2264 = vst.msk [vmem:[#allocation3 + $0x40] sm:$0xff] %vm2255, %v2176
      %2265 = vst.msk [vmem:[#allocation3 + $0x48] sm:$0xff] %vm2255, %v2178
      %2266 = vst.msk [vmem:[#allocation3 + $0x50] sm:$0xff] %vm2255, %v2180
      %2267 = vst.msk [vmem:[#allocation3 + $0x58] sm:$0xff] %vm2255, %v2182
      %2268 = vst.msk [vmem:[#allocation3 + $0x60] sm:$0xff] %vm2255, %v2184
      %2269 = vst.msk [vmem:[#allocation3 + $0x68] sm:$0xff] %vm2255, %v2186
      %2270 = vst.msk [vmem:[#allocation3 + $0x70] sm:$0xff] %vm2255, %v2188
      %2271 = vst.msk [vmem:[#allocation3 + $0x78] sm:$0xff] %vm2255, %v2190
      %2272 = vst.msk [vmem:[#allocation3 + $0x80] sm:$0xff] %vm2255, %v2192
      %2273 = vst.msk [vmem:[#allocation3 + $0x88] sm:$0xff] %vm2255, %v2194
      %2274 = vst.msk [vmem:[#allocation3 + $0x90] sm:$0xff] %vm2255, %v2196
      %2275 = vst.msk [vmem:[#allocation3 + $0x98] sm:$0xff] %vm2255, %v2198
      %2276 = vst.msk [vmem:[#allocation3 + $0xa0] sm:$0xff] %vm2255, %v2200
      %2277 = vst.msk [vmem:[#allocation3 + $0xa8] sm:$0xff] %vm2255, %v2202
      %2278 = vst.msk [vmem:[#allocation3 + $0xb0] sm:$0xff] %vm2255, %v2204
      %2279 = vst.msk [vmem:[#allocation3 + $0xb8] sm:$0xff] %vm2255, %v2206
      %2280 = vst.msk [vmem:[#allocation3 + $0xc0] sm:$0xff] %vm2255, %v2208
      %2281 = vst.msk [vmem:[#allocation3 + $0xc8] sm:$0xff] %vm2255, %v2210
      %2282 = vst.msk [vmem:[#allocation3 + $0xd0] sm:$0xff] %vm2255, %v2212
      %2283 = vst.msk [vmem:[#allocation3 + $0xd8] sm:$0xff] %vm2255, %v2214
      %2284 = vst.msk [vmem:[#allocation3 + $0xe0] sm:$0xff] %vm2255, %v2216
      %2285 = vst.msk [vmem:[#allocation3 + $0xe8] sm:$0xff] %vm2255, %v2218
      %2286 = vst.msk [vmem:[#allocation3 + $0xf0] sm:$0xff] %vm2255, %v2220
      %2287 = vst.msk [vmem:[#allocation3 + $0xf8] sm:$0xff] %vm2255, %v2222
      %v2288 = vld [vmem:[#allocation3] sm:$0xff]
      %v2289 = vld [vmem:[#allocation3 + $0x8] sm:$0xff]
      %v2290 = vld [vmem:[#allocation3 + $0x10] sm:$0xff]
      %v2291 = vld [vmem:[#allocation3 + $0x18] sm:$0xff]
      %v2292 = vld [vmem:[#allocation3 + $0x20] sm:$0xff]
      %v2293 = vld [vmem:[#allocation3 + $0x28] sm:$0xff]
      %v2294 = vld [vmem:[#allocation3 + $0x30] sm:$0xff]
      %v2295 = vld [vmem:[#allocation3 + $0x38] sm:$0xff]
      %v2296 = vld [vmem:[#allocation3 + $0x40] sm:$0xff]
      %v2297 = vld [vmem:[#allocation3 + $0x48] sm:$0xff]
      %v2298 = vld [vmem:[#allocation3 + $0x50] sm:$0xff]
      %v2299 = vld [vmem:[#allocation3 + $0x58] sm:$0xff]
      %v2300 = vld [vmem:[#allocation3 + $0x60] sm:$0xff]
      %v2301 = vld [vmem:[#allocation3 + $0x68] sm:$0xff]
      %v2302 = vld [vmem:[#allocation3 + $0x70] sm:$0xff]
      %v2303 = vld [vmem:[#allocation3 + $0x78] sm:$0xff]
      %v2304 = vld [vmem:[#allocation3 + $0x80] sm:$0xff]
      %v2305 = vld [vmem:[#allocation3 + $0x88] sm:$0xff]
      %v2306 = vld [vmem:[#allocation3 + $0x90] sm:$0xff]
      %v2307 = vld [vmem:[#allocation3 + $0x98] sm:$0xff]
      %v2308 = vld [vmem:[#allocation3 + $0xa0] sm:$0xff]
      %v2309 = vld [vmem:[#allocation3 + $0xa8] sm:$0xff]
      %v2310 = vld [vmem:[#allocation3 + $0xb0] sm:$0xff]
      %v2311 = vld [vmem:[#allocation3 + $0xb8] sm:$0xff]
      %v2312 = vld [vmem:[#allocation3 + $0xc0] sm:$0xff]
      %v2313 = vld [vmem:[#allocation3 + $0xc8] sm:$0xff]
      %v2314 = vld [vmem:[#allocation3 + $0xd0] sm:$0xff]
      %v2315 = vld [vmem:[#allocation3 + $0xd8] sm:$0xff]
      %v2316 = vld [vmem:[#allocation3 + $0xe0] sm:$0xff]
      %v2317 = vld [vmem:[#allocation3 + $0xe8] sm:$0xff]
      %v2318 = vld [vmem:[#allocation3 + $0xf0] sm:$0xff]
      %v2319 = vld [vmem:[#allocation3 + $0xf8] sm:$0xff]
      %v2320 = vld [vmem:[%s2] sm:$0xff]
      %v2321 = vld [vmem:[%s2 + $0x8] sm:$0xff]
      %v2322 = vld [vmem:[%s2 + $0x10] sm:$0xff]
      %v2323 = vld [vmem:[%s2 + $0x18] sm:$0xff]
      %v2324 = vld [vmem:[%s2 + $0x20] sm:$0xff]
      %v2325 = vld [vmem:[%s2 + $0x28] sm:$0xff]
      %v2326 = vld [vmem:[%s2 + $0x30] sm:$0xff]
      %v2327 = vld [vmem:[%s2 + $0x38] sm:$0xff]
      %v2328 = vld [vmem:[%s2 + $0x40] sm:$0xff]
      %v2329 = vld [vmem:[%s3] sm:$0x1]
      %v2331 = vlaneseq
      %v2332 = vshrl.u32 %v2331, 7
      %v2333 = vsub.s32 0, %v2332
      %v2334 = vrot.slane %v2329, %v2333
      %vm2336 = vcmask 588800
      %v2338 = vsel %vm2336, %v2288, 0
      %v2341 = vsel %vm2336, %v2289, 0
      %v2344 = vsel %vm2336, %v2290, 0
      %v2347 = vsel %vm2336, %v2291, 0
      %v2350 = vsel %vm2336, %v2292, 0
      %v2353 = vsel %vm2336, %v2293, 0
      %v2356 = vsel %vm2336, %v2294, 0
      %v2359 = vsel %vm2336, %v2295, 0
      %v2362 = vsel %vm2336, %v2296, 0
      %v2365 = vsel %vm2336, %v2297, 0
      %v2368 = vsel %vm2336, %v2298, 0
      %v2371 = vsel %vm2336, %v2299, 0
      %v2374 = vsel %vm2336, %v2300, 0
      %v2377 = vsel %vm2336, %v2301, 0
      %v2380 = vsel %vm2336, %v2302, 0
      %v2383 = vsel %vm2336, %v2303, 0
      %v2386 = vsel %vm2336, %v2304, 0
      %v2389 = vsel %vm2336, %v2305, 0
      %v2392 = vsel %vm2336, %v2306, 0
      %v2395 = vsel %vm2336, %v2307, 0
      %v2398 = vsel %vm2336, %v2308, 0
      %v2401 = vsel %vm2336, %v2309, 0
      %v2404 = vsel %vm2336, %v2310, 0
      %v2407 = vsel %vm2336, %v2311, 0
      %v2410 = vsel %vm2336, %v2312, 0
      %v2413 = vsel %vm2336, %v2313, 0
      %v2416 = vsel %vm2336, %v2314, 0
      %v2419 = vsel %vm2336, %v2315, 0
      %v2422 = vsel %vm2336, %v2316, 0
      %v2425 = vsel %vm2336, %v2317, 0
      %v2428 = vsel %vm2336, %v2318, 0
      %v2431 = vsel %vm2336, %v2319, 0
      %2433 = vmatprep.subr.mxu0 0.0
      %2434 = vmatpush1.msra.mxu0 0.0
      %2435 = vmatprep.subr.mxu0 0.0
      %2436 = vmatpush1.msra.mxu0 0.0
      %2437 = vmatprep.subr.mxu0 0.0
      %2438 = vmatpush1.msra.mxu0 0.0
      %2439 = vmatprep.subr.mxu0 0.0
      %2440 = vmatpush1.msra.mxu0 0.0
      %2441 = vmatprep.subr.mxu0 0.0
      %2442 = vmatpush1.msra.mxu0 0.0
      %2443 = vmatprep.subr.mxu0 0.0
      %2444 = vmatpush1.msra.mxu0 0.0
      %2445 = vmatprep.subr.mxu0 0.0
      %2446 = vmatpush1.msra.mxu0 0.0
      %2447 = vmatprep.subr.mxu0 0.0
      %2448 = vmatpush1.msra.mxu0 %v2328
      %2449 = vmatprep.subr.mxu0 0.0
      %2450 = vmatpush1.msra.mxu0 %v2327
      %2451 = vmatprep.subr.mxu0 0.0
      %2452 = vmatpush1.msra.mxu0 %v2326
      %2453 = vmatprep.subr.mxu0 0.0
      %2454 = vmatpush1.msra.mxu0 %v2325
      %2455 = vmatprep.subr.mxu0 0.0
      %2456 = vmatpush1.msra.mxu0 %v2324
      %2457 = vmatprep.subr.mxu0 0.0
      %2458 = vmatpush1.msra.mxu0 %v2323
      %2459 = vmatprep.subr.mxu0 0.0
      %2460 = vmatpush1.msra.mxu0 %v2322
      %2461 = vmatprep.subr.mxu0 0.0
      %2462 = vmatpush1.msra.mxu0 %v2321
      %2463 = vmatprep.subr.mxu0 0.0
      %2464 = vmatpush1.msra.mxu0 %v2320
      %2465 = vmatprep.subr.mxu0 0.0
      %2466 = vmatpush2.msra.mxu0 0.0
      %2467 = vmatprep.subr.mxu0 0.0
      %2468 = vmatpush2.msra.mxu0 0.0
      %2469 = vmatprep.subr.mxu0 0.0
      %2470 = vmatpush2.msra.mxu0 0.0
      %2471 = vmatprep.subr.mxu0 0.0
      %2472 = vmatpush2.msra.mxu0 0.0
      %2473 = vmatprep.subr.mxu0 0.0
      %2474 = vmatpush2.msra.mxu0 0.0
      %2475 = vmatprep.subr.mxu0 0.0
      %2476 = vmatpush2.msra.mxu0 0.0
      %2477 = vmatprep.subr.mxu0 0.0
      %2478 = vmatpush2.msra.mxu0 0.0
      %2479 = vmatprep.subr.mxu0 0.0
      %2480 = vmatpush2.msra.mxu0 0.0
      %2481 = vmatprep.subr.mxu0 0.0
      %2482 = vmatpush2.msra.mxu0 0.0
      %2483 = vmatprep.subr.mxu0 0.0
      %2484 = vmatpush2.msra.mxu0 0.0
      %2485 = vmatprep.subr.mxu0 0.0
      %2486 = vmatpush2.msra.mxu0 0.0
      %2487 = vmatprep.subr.mxu0 0.0
      %2488 = vmatpush2.msra.mxu0 0.0
      %2489 = vmatprep.subr.mxu0 0.0
      %2490 = vmatpush2.msra.mxu0 0.0
      %2491 = vmatprep.subr.mxu0 0.0
      %2492 = vmatpush2.msra.mxu0 0.0
      %2493 = vmatprep.subr.mxu0 0.0
      %2494 = vmatpush2.msra.mxu0 0.0
      %2495 = vmatprep.subr.mxu0 0.0
      %2496 = vmatpush2.msra.mxu0 0.0
      %2497 = vmatprep.mubr.f32.mxu0 0.0
      %2498 = vmatmul.mubr.f32.gmra.mxu0 %v2338
      %v2499 = vpop.f32.mrf.mxu0
      %v2500 = vadd.f32 %v2334, %v2499
      %v2501 = vpop.f32.mrf.mxu0
      %2502 = vmatprep.mubr.f32.mxu0 0.0
      %2503 = vmatmul.mubr.f32.gmra.mxu0 %v2341
      %v2504 = vpop.f32.mrf.mxu0
      %v2505 = vadd.f32 %v2334, %v2504
      %v2506 = vpop.f32.mrf.mxu0
      %2507 = vmatprep.mubr.f32.mxu0 0.0
      %2508 = vmatmul.mubr.f32.gmra.mxu0 %v2344
      %v2509 = vpop.f32.mrf.mxu0
      %v2510 = vadd.f32 %v2334, %v2509
      %v2511 = vpop.f32.mrf.mxu0
      %2512 = vmatprep.mubr.f32.mxu0 0.0
      %2513 = vmatmul.mubr.f32.gmra.mxu0 %v2347
      %v2514 = vpop.f32.mrf.mxu0
      %v2515 = vadd.f32 %v2334, %v2514
      %v2516 = vpop.f32.mrf.mxu0
      %2517 = vmatprep.mubr.f32.mxu0 0.0
      %2518 = vmatmul.mubr.f32.gmra.mxu0 %v2350
      %v2519 = vpop.f32.mrf.mxu0
      %v2520 = vadd.f32 %v2334, %v2519
      %v2521 = vpop.f32.mrf.mxu0
      %2522 = vmatprep.mubr.f32.mxu0 0.0
      %2523 = vmatmul.mubr.f32.gmra.mxu0 %v2353
      %v2524 = vpop.f32.mrf.mxu0
      %v2525 = vadd.f32 %v2334, %v2524
      %v2526 = vpop.f32.mrf.mxu0
      %2527 = vmatprep.mubr.f32.mxu0 0.0
      %2528 = vmatmul.mubr.f32.gmra.mxu0 %v2356
      %v2529 = vpop.f32.mrf.mxu0
      %v2530 = vadd.f32 %v2334, %v2529
      %v2531 = vpop.f32.mrf.mxu0
      %2532 = vmatprep.mubr.f32.mxu0 0.0
      %2533 = vmatmul.mubr.f32.gmra.mxu0 %v2359
      %v2534 = vpop.f32.mrf.mxu0
      %v2535 = vadd.f32 %v2334, %v2534
      %v2536 = vpop.f32.mrf.mxu0
      %2537 = vmatprep.mubr.f32.mxu0 0.0
      %2538 = vmatmul.mubr.f32.gmra.mxu0 %v2362
      %v2539 = vpop.f32.mrf.mxu0
      %v2540 = vadd.f32 %v2334, %v2539
      %v2541 = vpop.f32.mrf.mxu0
      %2542 = vmatprep.mubr.f32.mxu0 0.0
      %2543 = vmatmul.mubr.f32.gmra.mxu0 %v2365
      %v2544 = vpop.f32.mrf.mxu0
      %v2545 = vadd.f32 %v2334, %v2544
      %v2546 = vpop.f32.mrf.mxu0
      %2547 = vmatprep.mubr.f32.mxu0 0.0
      %2548 = vmatmul.mubr.f32.gmra.mxu0 %v2368
      %v2549 = vpop.f32.mrf.mxu0
      %v2550 = vadd.f32 %v2334, %v2549
      %v2551 = vpop.f32.mrf.mxu0
      %2552 = vmatprep.mubr.f32.mxu0 0.0
      %2553 = vmatmul.mubr.f32.gmra.mxu0 %v2371
      %v2554 = vpop.f32.mrf.mxu0
      %v2555 = vadd.f32 %v2334, %v2554
      %v2556 = vpop.f32.mrf.mxu0
      %2557 = vmatprep.mubr.f32.mxu0 0.0
      %2558 = vmatmul.mubr.f32.gmra.mxu0 %v2374
      %v2559 = vpop.f32.mrf.mxu0
      %v2560 = vadd.f32 %v2334, %v2559
      %v2561 = vpop.f32.mrf.mxu0
      %2562 = vmatprep.mubr.f32.mxu0 0.0
      %2563 = vmatmul.mubr.f32.gmra.mxu0 %v2377
      %v2564 = vpop.f32.mrf.mxu0
      %v2565 = vadd.f32 %v2334, %v2564
      %v2566 = vpop.f32.mrf.mxu0
      %2567 = vmatprep.mubr.f32.mxu0 0.0
      %2568 = vmatmul.mubr.f32.gmra.mxu0 %v2380
      %v2569 = vpop.f32.mrf.mxu0
      %v2570 = vadd.f32 %v2334, %v2569
      %v2571 = vpop.f32.mrf.mxu0
      %2572 = vmatprep.mubr.f32.mxu0 0.0
      %2573 = vmatmul.mubr.f32.gmra.mxu0 %v2383
      %v2574 = vpop.f32.mrf.mxu0
      %v2575 = vadd.f32 %v2334, %v2574
      %v2576 = vpop.f32.mrf.mxu0
      %2577 = vmatprep.mubr.f32.mxu0 0.0
      %2578 = vmatmul.mubr.f32.gmra.mxu0 %v2386
      %v2579 = vpop.f32.mrf.mxu0
      %v2580 = vadd.f32 %v2334, %v2579
      %v2581 = vpop.f32.mrf.mxu0
      %2582 = vmatprep.mubr.f32.mxu0 0.0
      %2583 = vmatmul.mubr.f32.gmra.mxu0 %v2389
      %v2584 = vpop.f32.mrf.mxu0
      %v2585 = vadd.f32 %v2334, %v2584
      %v2586 = vpop.f32.mrf.mxu0
      %2587 = vmatprep.mubr.f32.mxu0 0.0
      %2588 = vmatmul.mubr.f32.gmra.mxu0 %v2392
      %v2589 = vpop.f32.mrf.mxu0
      %v2590 = vadd.f32 %v2334, %v2589
      %v2591 = vpop.f32.mrf.mxu0
      %2592 = vmatprep.mubr.f32.mxu0 0.0
      %2593 = vmatmul.mubr.f32.gmra.mxu0 %v2395
      %v2594 = vpop.f32.mrf.mxu0
      %v2595 = vadd.f32 %v2334, %v2594
      %v2596 = vpop.f32.mrf.mxu0
      %2597 = vmatprep.mubr.f32.mxu0 0.0
      %2598 = vmatmul.mubr.f32.gmra.mxu0 %v2398
      %v2599 = vpop.f32.mrf.mxu0
      %v2600 = vadd.f32 %v2334, %v2599
      %v2601 = vpop.f32.mrf.mxu0
      %2602 = vmatprep.mubr.f32.mxu0 0.0
      %2603 = vmatmul.mubr.f32.gmra.mxu0 %v2401
      %v2604 = vpop.f32.mrf.mxu0
      %v2605 = vadd.f32 %v2334, %v2604
      %v2606 = vpop.f32.mrf.mxu0
      %2607 = vmatprep.mubr.f32.mxu0 0.0
      %2608 = vmatmul.mubr.f32.gmra.mxu0 %v2404
      %v2609 = vpop.f32.mrf.mxu0
      %v2610 = vadd.f32 %v2334, %v2609
      %v2611 = vpop.f32.mrf.mxu0
      %2612 = vmatprep.mubr.f32.mxu0 0.0
      %2613 = vmatmul.mubr.f32.gmra.mxu0 %v2407
      %v2614 = vpop.f32.mrf.mxu0
      %v2615 = vadd.f32 %v2334, %v2614
      %v2616 = vpop.f32.mrf.mxu0
      %2617 = vmatprep.mubr.f32.mxu0 0.0
      %2618 = vmatmul.mubr.f32.gmra.mxu0 %v2410
      %v2619 = vpop.f32.mrf.mxu0
      %v2620 = vadd.f32 %v2334, %v2619
      %v2621 = vpop.f32.mrf.mxu0
      %2622 = vmatprep.mubr.f32.mxu0 0.0
      %2623 = vmatmul.mubr.f32.gmra.mxu0 %v2413
      %v2624 = vpop.f32.mrf.mxu0
      %v2625 = vadd.f32 %v2334, %v2624
      %v2626 = vpop.f32.mrf.mxu0
      %2627 = vmatprep.mubr.f32.mxu0 0.0
      %2628 = vmatmul.mubr.f32.gmra.mxu0 %v2416
      %v2629 = vpop.f32.mrf.mxu0
      %v2630 = vadd.f32 %v2334, %v2629
      %v2631 = vpop.f32.mrf.mxu0
      %2632 = vmatprep.mubr.f32.mxu0 0.0
      %2633 = vmatmul.mubr.f32.gmra.mxu0 %v2419
      %v2634 = vpop.f32.mrf.mxu0
      %v2635 = vadd.f32 %v2334, %v2634
      %v2636 = vpop.f32.mrf.mxu0
      %2637 = vmatprep.mubr.f32.mxu0 0.0
      %2638 = vmatmul.mubr.f32.gmra.mxu0 %v2422
      %v2639 = vpop.f32.mrf.mxu0
      %v2640 = vadd.f32 %v2334, %v2639
      %v2641 = vpop.f32.mrf.mxu0
      %2642 = vmatprep.mubr.f32.mxu0 0.0
      %2643 = vmatmul.mubr.f32.gmra.mxu0 %v2425
      %v2644 = vpop.f32.mrf.mxu0
      %v2645 = vadd.f32 %v2334, %v2644
      %v2646 = vpop.f32.mrf.mxu0
      %2647 = vmatprep.mubr.f32.mxu0 0.0
      %2648 = vmatmul.mubr.f32.gmra.mxu0 %v2428
      %v2649 = vpop.f32.mrf.mxu0
      %v2650 = vadd.f32 %v2334, %v2649
      %v2651 = vpop.f32.mrf.mxu0
      %2652 = vmatprep.mubr.f32.mxu0 0.0
      %2653 = vmatmul.mubr.f32.gmra.mxu0 %v2431
      %v2654 = vpop.f32.mrf.mxu0
      %v2655 = vadd.f32 %v2334, %v2654
      %v2656 = vpop.f32.mrf.mxu0
      %2657 = vdwg.mxu0
      %v2658 = vmax.f32 %v2500, 0.0
      %v2659 = vmax.f32 %v2505, 0.0
      %v2660 = vmax.f32 %v2510, 0.0
      %v2661 = vmax.f32 %v2515, 0.0
      %v2662 = vmax.f32 %v2520, 0.0
      %v2663 = vmax.f32 %v2525, 0.0
      %v2664 = vmax.f32 %v2530, 0.0
      %v2665 = vmax.f32 %v2535, 0.0
      %v2666 = vmax.f32 %v2540, 0.0
      %v2667 = vmax.f32 %v2545, 0.0
      %v2668 = vmax.f32 %v2550, 0.0
      %v2669 = vmax.f32 %v2555, 0.0
      %v2670 = vmax.f32 %v2560, 0.0
      %v2671 = vmax.f32 %v2565, 0.0
      %v2672 = vmax.f32 %v2570, 0.0
      %v2673 = vmax.f32 %v2575, 0.0
      %v2674 = vmax.f32 %v2580, 0.0
      %v2675 = vmax.f32 %v2585, 0.0
      %v2676 = vmax.f32 %v2590, 0.0
      %v2677 = vmax.f32 %v2595, 0.0
      %v2678 = vmax.f32 %v2600, 0.0
      %v2679 = vmax.f32 %v2605, 0.0
      %v2680 = vmax.f32 %v2610, 0.0
      %v2681 = vmax.f32 %v2615, 0.0
      %v2682 = vmax.f32 %v2620, 0.0
      %v2683 = vmax.f32 %v2625, 0.0
      %v2684 = vmax.f32 %v2630, 0.0
      %v2685 = vmax.f32 %v2635, 0.0
      %v2686 = vmax.f32 %v2640, 0.0
      %v2687 = vmax.f32 %v2645, 0.0
      %v2688 = vmax.f32 %v2650, 0.0
      %v2689 = vmax.f32 %v2655, 0.0
      %s2690 = scalar_lea.vmem [#allocation4], 24
      %vm2691 = vcmask 130048
      %2692 = vst.msk [vmem:[%s2690 + $0x1] sm:$0xff] %vm2691, %v2658
      %2693 = vst.msk [vmem:[%s2690 + $0x9] sm:$0xff] %vm2691, %v2659
      %2694 = vst.msk [vmem:[%s2690 + $0x19] sm:$0xff] %vm2691, %v2660
      %2695 = vst.msk [vmem:[%s2690 + $0x21] sm:$0xff] %vm2691, %v2661
      %2696 = vst.msk [vmem:[%s2690 + $0x31] sm:$0xff] %vm2691, %v2662
      %2697 = vst.msk [vmem:[%s2690 + $0x39] sm:$0xff] %vm2691, %v2663
      %2698 = vst.msk [vmem:[%s2690 + $0x49] sm:$0xff] %vm2691, %v2664
      %2699 = vst.msk [vmem:[%s2690 + $0x51] sm:$0xff] %vm2691, %v2665
      %2700 = vst.msk [vmem:[%s2690 + $0x61] sm:$0xff] %vm2691, %v2666
      %2701 = vst.msk [vmem:[%s2690 + $0x69] sm:$0xff] %vm2691, %v2667
      %2702 = vst.msk [vmem:[%s2690 + $0x79] sm:$0xff] %vm2691, %v2668
      %2703 = vst.msk [vmem:[%s2690 + $0x81] sm:$0xff] %vm2691, %v2669
      %2704 = vst.msk [vmem:[%s2690 + $0x91] sm:$0xff] %vm2691, %v2670
      %2705 = vst.msk [vmem:[%s2690 + $0x99] sm:$0xff] %vm2691, %v2671
      %2706 = vst.msk [vmem:[%s2690 + $0xa9] sm:$0xff] %vm2691, %v2672
      %2707 = vst.msk [vmem:[%s2690 + $0xb1] sm:$0xff] %vm2691, %v2673
      %2708 = vst.msk [vmem:[%s2690 + $0xc1] sm:$0xff] %vm2691, %v2674
      %2709 = vst.msk [vmem:[%s2690 + $0xc9] sm:$0xff] %vm2691, %v2675
      %2710 = vst.msk [vmem:[%s2690 + $0xd9] sm:$0xff] %vm2691, %v2676
      %2711 = vst.msk [vmem:[%s2690 + $0xe1] sm:$0xff] %vm2691, %v2677
      %2712 = vst.msk [vmem:[%s2690 + $0xf1] sm:$0xff] %vm2691, %v2678
      %2713 = vst.msk [vmem:[%s2690 + $0xf9] sm:$0xff] %vm2691, %v2679
      %2714 = vst.msk [vmem:[%s2690 + $0x109] sm:$0xff] %vm2691, %v2680
      %2715 = vst.msk [vmem:[%s2690 + $0x111] sm:$0xff] %vm2691, %v2681
      %2716 = vst.msk [vmem:[%s2690 + $0x121] sm:$0xff] %vm2691, %v2682
      %2717 = vst.msk [vmem:[%s2690 + $0x129] sm:$0xff] %vm2691, %v2683
      %2718 = vst.msk [vmem:[%s2690 + $0x139] sm:$0xff] %vm2691, %v2684
      %2719 = vst.msk [vmem:[%s2690 + $0x141] sm:$0xff] %vm2691, %v2685
      %2720 = vst.msk [vmem:[%s2690 + $0x151] sm:$0xff] %vm2691, %v2686
      %2721 = vst.msk [vmem:[%s2690 + $0x159] sm:$0xff] %vm2691, %v2687
      %2722 = vst.msk [vmem:[%s2690 + $0x169] sm:$0xff] %vm2691, %v2688
      %2723 = vst.msk [vmem:[%s2690 + $0x171] sm:$0xff] %vm2691, %v2689
      %s2724 = scalar_lea.vmem [#allocation4], 48
      %v2725 = vld [vmem:[%s2724 + $0x1] sm:$0xff]
      %v2726 = vld [vmem:[%s2724 + $0x9] sm:$0xff]
      %2727 = vst.msk [vmem:[#allocation4 + $0x1] sm:$0xff] %vm2691, %v2725
      %2728 = vst.msk [vmem:[#allocation4 + $0x9] sm:$0xff] %vm2691, %v2726
      %v2729 = vld [vmem:[#allocation4 + $0x2] sm:$0x1]
      %v2730 = vld [vmem:[#allocation4 + $0x1a] sm:$0x1]
      %v2731 = vld [vmem:[#allocation4 + $0x32] sm:$0x1]
      %v2732 = vld [vmem:[#allocation4 + $0x4a] sm:$0x1]
      %v2733 = vld [vmem:[#allocation4 + $0x62] sm:$0x1]
      %v2734 = vld [vmem:[#allocation4 + $0x7a] sm:$0x1]
      %v2735 = vld [vmem:[#allocation4 + $0x92] sm:$0x1]
      %v2736 = vld [vmem:[#allocation4 + $0xaa] sm:$0x1]
      %v2737 = vld [vmem:[#allocation4 + $0xc2] sm:$0x1]
      %v2738 = vld [vmem:[#allocation4 + $0xda] sm:$0x1]
      %v2739 = vld [vmem:[#allocation4 + $0xf2] sm:$0x1]
      %v2740 = vld [vmem:[#allocation4 + $0x10a] sm:$0x1]
      %v2741 = vld [vmem:[#allocation4 + $0x122] sm:$0x1]
      %v2742 = vld [vmem:[#allocation4 + $0x13a] sm:$0x1]
      %v2743 = vld [vmem:[#allocation4 + $0x152] sm:$0x1]
      %v2744 = vld [vmem:[#allocation4 + $0x16a] sm:$0x1]
      %v2745 = vld [vmem:[#allocation4 + $0x182] sm:$0x1]
      %vm2746 = vcmask 122880
      %2747 = vst.msk [vmem:[#allocation4] sm:$0x1] %vm2746, %v2729
      %2748 = vst.msk [vmem:[#allocation4 + $0x18] sm:$0x1] %vm2746, %v2730
      %2749 = vst.msk [vmem:[#allocation4 + $0x30] sm:$0x1] %vm2746, %v2731
      %2750 = vst.msk [vmem:[#allocation4 + $0x48] sm:$0x1] %vm2746, %v2732
      %2751 = vst.msk [vmem:[#allocation4 + $0x60] sm:$0x1] %vm2746, %v2733
      %2752 = vst.msk [vmem:[#allocation4 + $0x78] sm:$0x1] %vm2746, %v2734
      %2753 = vst.msk [vmem:[#allocation4 + $0x90] sm:$0x1] %vm2746, %v2735
      %2754 = vst.msk [vmem:[#allocation4 + $0xa8] sm:$0x1] %vm2746, %v2736
      %2755 = vst.msk [vmem:[#allocation4 + $0xc0] sm:$0x1] %vm2746, %v2737
      %2756 = vst.msk [vmem:[#allocation4 + $0xd8] sm:$0x1] %vm2746, %v2738
      %2757 = vst.msk [vmem:[#allocation4 + $0xf0] sm:$0x1] %vm2746, %v2739
      %2758 = vst.msk [vmem:[#allocation4 + $0x108] sm:$0x1] %vm2746, %v2740
      %2759 = vst.msk [vmem:[#allocation4 + $0x120] sm:$0x1] %vm2746, %v2741
      %2760 = vst.msk [vmem:[#allocation4 + $0x138] sm:$0x1] %vm2746, %v2742
      %2761 = vst.msk [vmem:[#allocation4 + $0x150] sm:$0x1] %vm2746, %v2743
      %2762 = vst.msk [vmem:[#allocation4 + $0x168] sm:$0x1] %vm2746, %v2744
      %2763 = vst.msk [vmem:[#allocation4 + $0x180] sm:$0x1] %vm2746, %v2745
      %v2764 = vld [vmem:[#allocation4] sm:$0xff]
      %v2765 = vld [vmem:[#allocation4 + $0x8] sm:$0xff]
      %v2766 = vld [vmem:[#allocation4 + $0x18] sm:$0xff]
      %v2767 = vld [vmem:[#allocation4 + $0x20] sm:$0xff]
      %v2768 = vld [vmem:[#allocation4 + $0x30] sm:$0xff]
      %v2769 = vld [vmem:[#allocation4 + $0x38] sm:$0xff]
      %v2770 = vld [vmem:[#allocation4 + $0x48] sm:$0xff]
      %v2771 = vld [vmem:[#allocation4 + $0x50] sm:$0xff]
      %v2772 = vld [vmem:[#allocation4 + $0x60] sm:$0xff]
      %v2773 = vld [vmem:[#allocation4 + $0x68] sm:$0xff]
      %v2774 = vld [vmem:[#allocation4 + $0x78] sm:$0xff]
      %v2775 = vld [vmem:[#allocation4 + $0x80] sm:$0xff]
      %v2776 = vld [vmem:[#allocation4 + $0x90] sm:$0xff]
      %v2777 = vld [vmem:[#allocation4 + $0x98] sm:$0xff]
      %v2778 = vld [vmem:[#allocation4 + $0xa8] sm:$0xff]
      %v2779 = vld [vmem:[#allocation4 + $0xb0] sm:$0xff]
      %v2780 = vld [vmem:[#allocation4 + $0xc0] sm:$0xff]
      %v2781 = vld [vmem:[#allocation4 + $0xc8] sm:$0xff]
      %v2782 = vld [vmem:[#allocation4 + $0xd8] sm:$0xff]
      %v2783 = vld [vmem:[#allocation4 + $0xe0] sm:$0xff]
      %v2784 = vld [vmem:[#allocation4 + $0xf0] sm:$0xff]
      %v2785 = vld [vmem:[#allocation4 + $0xf8] sm:$0xff]
      %v2786 = vld [vmem:[#allocation4 + $0x108] sm:$0xff]
      %v2787 = vld [vmem:[#allocation4 + $0x110] sm:$0xff]
      %v2788 = vld [vmem:[#allocation4 + $0x120] sm:$0xff]
      %v2789 = vld [vmem:[#allocation4 + $0x128] sm:$0xff]
      %v2790 = vld [vmem:[#allocation4 + $0x138] sm:$0xff]
      %v2791 = vld [vmem:[#allocation4 + $0x140] sm:$0xff]
      %v2792 = vld [vmem:[#allocation4 + $0x150] sm:$0xff]
      %v2793 = vld [vmem:[#allocation4 + $0x158] sm:$0xff]
      %v2794 = vld [vmem:[#allocation4 + $0x168] sm:$0xff]
      %v2795 = vld [vmem:[#allocation4 + $0x170] sm:$0xff]
      %2796 = vst.msk [vmem:[#allocation5] sm:$0xff] %vm2691, %v2764
      %2797 = vst.msk [vmem:[#allocation5 + $0x8] sm:$0xff] %vm2691, %v2765
      %2798 = vst.msk [vmem:[#allocation5 + $0x10] sm:$0xff] %vm2691, %v2766
      %2799 = vst.msk [vmem:[#allocation5 + $0x18] sm:$0xff] %vm2691, %v2767
      %2800 = vst.msk [vmem:[#allocation5 + $0x20] sm:$0xff] %vm2691, %v2768
      %2801 = vst.msk [vmem:[#allocation5 + $0x28] sm:$0xff] %vm2691, %v2769
      %2802 = vst.msk [vmem:[#allocation5 + $0x30] sm:$0xff] %vm2691, %v2770
      %2803 = vst.msk [vmem:[#allocation5 + $0x38] sm:$0xff] %vm2691, %v2771
      %2804 = vst.msk [vmem:[#allocation5 + $0x40] sm:$0xff] %vm2691, %v2772
      %2805 = vst.msk [vmem:[#allocation5 + $0x48] sm:$0xff] %vm2691, %v2773
      %2806 = vst.msk [vmem:[#allocation5 + $0x50] sm:$0xff] %vm2691, %v2774
      %2807 = vst.msk [vmem:[#allocation5 + $0x58] sm:$0xff] %vm2691, %v2775
      %2808 = vst.msk [vmem:[#allocation5 + $0x60] sm:$0xff] %vm2691, %v2776
      %2809 = vst.msk [vmem:[#allocation5 + $0x68] sm:$0xff] %vm2691, %v2777
      %2810 = vst.msk [vmem:[#allocation5 + $0x70] sm:$0xff] %vm2691, %v2778
      %2811 = vst.msk [vmem:[#allocation5 + $0x78] sm:$0xff] %vm2691, %v2779
      %2812 = vst.msk [vmem:[#allocation5 + $0x80] sm:$0xff] %vm2691, %v2780
      %2813 = vst.msk [vmem:[#allocation5 + $0x88] sm:$0xff] %vm2691, %v2781
      %2814 = vst.msk [vmem:[#allocation5 + $0x90] sm:$0xff] %vm2691, %v2782
      %2815 = vst.msk [vmem:[#allocation5 + $0x98] sm:$0xff] %vm2691, %v2783
      %2816 = vst.msk [vmem:[#allocation5 + $0xa0] sm:$0xff] %vm2691, %v2784
      %2817 = vst.msk [vmem:[#allocation5 + $0xa8] sm:$0xff] %vm2691, %v2785
      %2818 = vst.msk [vmem:[#allocation5 + $0xb0] sm:$0xff] %vm2691, %v2786
      %2819 = vst.msk [vmem:[#allocation5 + $0xb8] sm:$0xff] %vm2691, %v2787
      %2820 = vst.msk [vmem:[#allocation5 + $0xc0] sm:$0xff] %vm2691, %v2788
      %2821 = vst.msk [vmem:[#allocation5 + $0xc8] sm:$0xff] %vm2691, %v2789
      %2822 = vst.msk [vmem:[#allocation5 + $0xd0] sm:$0xff] %vm2691, %v2790
      %2823 = vst.msk [vmem:[#allocation5 + $0xd8] sm:$0xff] %vm2691, %v2791
      %2824 = vst.msk [vmem:[#allocation5 + $0xe0] sm:$0xff] %vm2691, %v2792
      %2825 = vst.msk [vmem:[#allocation5 + $0xe8] sm:$0xff] %vm2691, %v2793
      %2826 = vst.msk [vmem:[#allocation5 + $0xf0] sm:$0xff] %vm2691, %v2794
      %2827 = vst.msk [vmem:[#allocation5 + $0xf8] sm:$0xff] %vm2691, %v2795
      %v2828 = vld [vmem:[#allocation4 + $0x1] sm:$0xff]
      %v2829 = vld [vmem:[#allocation4 + $0x9] sm:$0xff]
      %v2830 = vld [vmem:[#allocation4 + $0x19] sm:$0xff]
      %v2831 = vld [vmem:[#allocation4 + $0x21] sm:$0xff]
      %v2832 = vld [vmem:[#allocation4 + $0x31] sm:$0xff]
      %v2833 = vld [vmem:[#allocation4 + $0x39] sm:$0xff]
      %v2834 = vld [vmem:[#allocation4 + $0x49] sm:$0xff]
      %v2835 = vld [vmem:[#allocation4 + $0x51] sm:$0xff]
      %v2836 = vld [vmem:[#allocation4 + $0x61] sm:$0xff]
      %v2837 = vld [vmem:[#allocation4 + $0x69] sm:$0xff]
      %v2838 = vld [vmem:[#allocation4 + $0x79] sm:$0xff]
      %v2839 = vld [vmem:[#allocation4 + $0x81] sm:$0xff]
      %v2840 = vld [vmem:[#allocation4 + $0x91] sm:$0xff]
      %v2841 = vld [vmem:[#allocation4 + $0x99] sm:$0xff]
      %v2842 = vld [vmem:[#allocation4 + $0xa9] sm:$0xff]
      %v2843 = vld [vmem:[#allocation4 + $0xb1] sm:$0xff]
      %v2844 = vld [vmem:[#allocation4 + $0xc1] sm:$0xff]
      %v2845 = vld [vmem:[#allocation4 + $0xc9] sm:$0xff]
      %v2846 = vld [vmem:[#allocation4 + $0xd9] sm:$0xff]
      %v2847 = vld [vmem:[#allocation4 + $0xe1] sm:$0xff]
      %v2848 = vld [vmem:[#allocation4 + $0xf1] sm:$0xff]
      %v2849 = vld [vmem:[#allocation4 + $0xf9] sm:$0xff]
      %v2850 = vld [vmem:[#allocation4 + $0x109] sm:$0xff]
      %v2851 = vld [vmem:[#allocation4 + $0x111] sm:$0xff]
      %v2852 = vld [vmem:[#allocation4 + $0x121] sm:$0xff]
      %v2853 = vld [vmem:[#allocation4 + $0x129] sm:$0xff]
      %v2854 = vld [vmem:[#allocation4 + $0x139] sm:$0xff]
      %v2855 = vld [vmem:[#allocation4 + $0x141] sm:$0xff]
      %v2856 = vld [vmem:[#allocation4 + $0x151] sm:$0xff]
      %v2857 = vld [vmem:[#allocation4 + $0x159] sm:$0xff]
      %v2858 = vld [vmem:[#allocation4 + $0x169] sm:$0xff]
      %v2859 = vld [vmem:[#allocation4 + $0x171] sm:$0xff]
      %2892 = vrot.lane.b32.xlu0 %v2828, 16
      %v2893 = vpop.permute.xlu0 %2892
      %2894 = vrot.lane.b32.xlu0 %v2829, 16
      %v2895 = vpop.permute.xlu0 %2894
      %2896 = vrot.lane.b32.xlu0 %v2830, 16
      %v2897 = vpop.permute.xlu0 %2896
      %2898 = vrot.lane.b32.xlu0 %v2831, 16
      %v2899 = vpop.permute.xlu0 %2898
      %2900 = vrot.lane.b32.xlu0 %v2832, 16
      %v2901 = vpop.permute.xlu0 %2900
      %2902 = vrot.lane.b32.xlu0 %v2833, 16
      %v2903 = vpop.permute.xlu0 %2902
      %2904 = vrot.lane.b32.xlu0 %v2834, 16
      %v2905 = vpop.permute.xlu0 %2904
      %2906 = vrot.lane.b32.xlu0 %v2835, 16
      %v2907 = vpop.permute.xlu0 %2906
      %2908 = vrot.lane.b32.xlu0 %v2836, 16
      %v2909 = vpop.permute.xlu0 %2908
      %2910 = vrot.lane.b32.xlu0 %v2837, 16
      %v2911 = vpop.permute.xlu0 %2910
      %2912 = vrot.lane.b32.xlu0 %v2838, 16
      %v2913 = vpop.permute.xlu0 %2912
      %2914 = vrot.lane.b32.xlu0 %v2839, 16
      %v2915 = vpop.permute.xlu0 %2914
      %2916 = vrot.lane.b32.xlu0 %v2840, 16
      %v2917 = vpop.permute.xlu0 %2916
      %2918 = vrot.lane.b32.xlu0 %v2841, 16
      %v2919 = vpop.permute.xlu0 %2918
      %2920 = vrot.lane.b32.xlu0 %v2842, 16
      %v2921 = vpop.permute.xlu0 %2920
      %2922 = vrot.lane.b32.xlu0 %v2843, 16
      %v2923 = vpop.permute.xlu0 %2922
      %2924 = vrot.lane.b32.xlu0 %v2844, 16
      %v2925 = vpop.permute.xlu0 %2924
      %2926 = vrot.lane.b32.xlu0 %v2845, 16
      %v2927 = vpop.permute.xlu0 %2926
      %2928 = vrot.lane.b32.xlu0 %v2846, 16
      %v2929 = vpop.permute.xlu0 %2928
      %2930 = vrot.lane.b32.xlu0 %v2847, 16
      %v2931 = vpop.permute.xlu0 %2930
      %2932 = vrot.lane.b32.xlu0 %v2848, 16
      %v2933 = vpop.permute.xlu0 %2932
      %2934 = vrot.lane.b32.xlu0 %v2849, 16
      %v2935 = vpop.permute.xlu0 %2934
      %2936 = vrot.lane.b32.xlu0 %v2850, 16
      %v2937 = vpop.permute.xlu0 %2936
      %2938 = vrot.lane.b32.xlu0 %v2851, 16
      %v2939 = vpop.permute.xlu0 %2938
      %2940 = vrot.lane.b32.xlu0 %v2852, 16
      %v2941 = vpop.permute.xlu0 %2940
      %2942 = vrot.lane.b32.xlu0 %v2853, 16
      %v2943 = vpop.permute.xlu0 %2942
      %2944 = vrot.lane.b32.xlu0 %v2854, 16
      %v2945 = vpop.permute.xlu0 %2944
      %2946 = vrot.lane.b32.xlu0 %v2855, 16
      %v2947 = vpop.permute.xlu0 %2946
      %2948 = vrot.lane.b32.xlu0 %v2856, 16
      %v2949 = vpop.permute.xlu0 %2948
      %2950 = vrot.lane.b32.xlu0 %v2857, 16
      %v2951 = vpop.permute.xlu0 %2950
      %2952 = vrot.lane.b32.xlu0 %v2858, 16
      %v2953 = vpop.permute.xlu0 %2952
      %2954 = vrot.lane.b32.xlu0 %v2859, 16
      %v2955 = vpop.permute.xlu0 %2954
      %vm2988 = vcmask 261248
      %2989 = vst.msk [vmem:[#allocation5] sm:$0xff] %vm2988, %v2893
      %2990 = vst.msk [vmem:[#allocation5 + $0x8] sm:$0xff] %vm2988, %v2895
      %2991 = vst.msk [vmem:[#allocation5 + $0x10] sm:$0xff] %vm2988, %v2897
      %2992 = vst.msk [vmem:[#allocation5 + $0x18] sm:$0xff] %vm2988, %v2899
      %2993 = vst.msk [vmem:[#allocation5 + $0x20] sm:$0xff] %vm2988, %v2901
      %2994 = vst.msk [vmem:[#allocation5 + $0x28] sm:$0xff] %vm2988, %v2903
      %2995 = vst.msk [vmem:[#allocation5 + $0x30] sm:$0xff] %vm2988, %v2905
      %2996 = vst.msk [vmem:[#allocation5 + $0x38] sm:$0xff] %vm2988, %v2907
      %2997 = vst.msk [vmem:[#allocation5 + $0x40] sm:$0xff] %vm2988, %v2909
      %2998 = vst.msk [vmem:[#allocation5 + $0x48] sm:$0xff] %vm2988, %v2911
      %2999 = vst.msk [vmem:[#allocation5 + $0x50] sm:$0xff] %vm2988, %v2913
      %3000 = vst.msk [vmem:[#allocation5 + $0x58] sm:$0xff] %vm2988, %v2915
      %3001 = vst.msk [vmem:[#allocation5 + $0x60] sm:$0xff] %vm2988, %v2917
      %3002 = vst.msk [vmem:[#allocation5 + $0x68] sm:$0xff] %vm2988, %v2919
      %3003 = vst.msk [vmem:[#allocation5 + $0x70] sm:$0xff] %vm2988, %v2921
      %3004 = vst.msk [vmem:[#allocation5 + $0x78] sm:$0xff] %vm2988, %v2923
      %3005 = vst.msk [vmem:[#allocation5 + $0x80] sm:$0xff] %vm2988, %v2925
      %3006 = vst.msk [vmem:[#allocation5 + $0x88] sm:$0xff] %vm2988, %v2927
      %3007 = vst.msk [vmem:[#allocation5 + $0x90] sm:$0xff] %vm2988, %v2929
      %3008 = vst.msk [vmem:[#allocation5 + $0x98] sm:$0xff] %vm2988, %v2931
      %3009 = vst.msk [vmem:[#allocation5 + $0xa0] sm:$0xff] %vm2988, %v2933
      %3010 = vst.msk [vmem:[#allocation5 + $0xa8] sm:$0xff] %vm2988, %v2935
      %3011 = vst.msk [vmem:[#allocation5 + $0xb0] sm:$0xff] %vm2988, %v2937
      %3012 = vst.msk [vmem:[#allocation5 + $0xb8] sm:$0xff] %vm2988, %v2939
      %3013 = vst.msk [vmem:[#allocation5 + $0xc0] sm:$0xff] %vm2988, %v2941
      %3014 = vst.msk [vmem:[#allocation5 + $0xc8] sm:$0xff] %vm2988, %v2943
      %3015 = vst.msk [vmem:[#allocation5 + $0xd0] sm:$0xff] %vm2988, %v2945
      %3016 = vst.msk [vmem:[#allocation5 + $0xd8] sm:$0xff] %vm2988, %v2947
      %3017 = vst.msk [vmem:[#allocation5 + $0xe0] sm:$0xff] %vm2988, %v2949
      %3018 = vst.msk [vmem:[#allocation5 + $0xe8] sm:$0xff] %vm2988, %v2951
      %3019 = vst.msk [vmem:[#allocation5 + $0xf0] sm:$0xff] %vm2988, %v2953
      %3020 = vst.msk [vmem:[#allocation5 + $0xf8] sm:$0xff] %vm2988, %v2955
      %v3021 = vld [vmem:[%s2690] sm:$0xff]
      %v3022 = vld [vmem:[%s2690 + $0x8] sm:$0xff]
      %v3023 = vld [vmem:[%s2690 + $0x18] sm:$0xff]
      %v3024 = vld [vmem:[%s2690 + $0x20] sm:$0xff]
      %v3025 = vld [vmem:[%s2690 + $0x30] sm:$0xff]
      %v3026 = vld [vmem:[%s2690 + $0x38] sm:$0xff]
      %v3027 = vld [vmem:[%s2690 + $0x48] sm:$0xff]
      %v3028 = vld [vmem:[%s2690 + $0x50] sm:$0xff]
      %v3029 = vld [vmem:[%s2690 + $0x60] sm:$0xff]
      %v3030 = vld [vmem:[%s2690 + $0x68] sm:$0xff]
      %v3031 = vld [vmem:[%s2690 + $0x78] sm:$0xff]
      %v3032 = vld [vmem:[%s2690 + $0x80] sm:$0xff]
      %v3033 = vld [vmem:[%s2690 + $0x90] sm:$0xff]
      %v3034 = vld [vmem:[%s2690 + $0x98] sm:$0xff]
      %v3035 = vld [vmem:[%s2690 + $0xa8] sm:$0xff]
      %v3036 = vld [vmem:[%s2690 + $0xb0] sm:$0xff]
      %v3037 = vld [vmem:[%s2690 + $0xc0] sm:$0xff]
      %v3038 = vld [vmem:[%s2690 + $0xc8] sm:$0xff]
      %v3039 = vld [vmem:[%s2690 + $0xd8] sm:$0xff]
      %v3040 = vld [vmem:[%s2690 + $0xe0] sm:$0xff]
      %v3041 = vld [vmem:[%s2690 + $0xf0] sm:$0xff]
      %v3042 = vld [vmem:[%s2690 + $0xf8] sm:$0xff]
      %v3043 = vld [vmem:[%s2690 + $0x108] sm:$0xff]
      %v3044 = vld [vmem:[%s2690 + $0x110] sm:$0xff]
      %v3045 = vld [vmem:[%s2690 + $0x120] sm:$0xff]
      %v3046 = vld [vmem:[%s2690 + $0x128] sm:$0xff]
      %v3047 = vld [vmem:[%s2690 + $0x138] sm:$0xff]
      %v3048 = vld [vmem:[%s2690 + $0x140] sm:$0xff]
      %v3049 = vld [vmem:[%s2690 + $0x150] sm:$0xff]
      %v3050 = vld [vmem:[%s2690 + $0x158] sm:$0xff]
      %v3051 = vld [vmem:[%s2690 + $0x168] sm:$0xff]
      %v3052 = vld [vmem:[%s2690 + $0x170] sm:$0xff]
      %3085 = vrot.lane.b32.xlu0 %v3021, 32
      %v3086 = vpop.permute.xlu0 %3085
      %3087 = vrot.lane.b32.xlu0 %v3022, 32
      %v3088 = vpop.permute.xlu0 %3087
      %3089 = vrot.lane.b32.xlu0 %v3023, 32
      %v3090 = vpop.permute.xlu0 %3089
      %3091 = vrot.lane.b32.xlu0 %v3024, 32
      %v3092 = vpop.permute.xlu0 %3091
      %3093 = vrot.lane.b32.xlu0 %v3025, 32
      %v3094 = vpop.permute.xlu0 %3093
      %3095 = vrot.lane.b32.xlu0 %v3026, 32
      %v3096 = vpop.permute.xlu0 %3095
      %3097 = vrot.lane.b32.xlu0 %v3027, 32
      %v3098 = vpop.permute.xlu0 %3097
      %3099 = vrot.lane.b32.xlu0 %v3028, 32
      %v3100 = vpop.permute.xlu0 %3099
      %3101 = vrot.lane.b32.xlu0 %v3029, 32
      %v3102 = vpop.permute.xlu0 %3101
      %3103 = vrot.lane.b32.xlu0 %v3030, 32
      %v3104 = vpop.permute.xlu0 %3103
      %3105 = vrot.lane.b32.xlu0 %v3031, 32
      %v3106 = vpop.permute.xlu0 %3105
      %3107 = vrot.lane.b32.xlu0 %v3032, 32
      %v3108 = vpop.permute.xlu0 %3107
      %3109 = vrot.lane.b32.xlu0 %v3033, 32
      %v3110 = vpop.permute.xlu0 %3109
      %3111 = vrot.lane.b32.xlu0 %v3034, 32
      %v3112 = vpop.permute.xlu0 %3111
      %3113 = vrot.lane.b32.xlu0 %v3035, 32
      %v3114 = vpop.permute.xlu0 %3113
      %3115 = vrot.lane.b32.xlu0 %v3036, 32
      %v3116 = vpop.permute.xlu0 %3115
      %3117 = vrot.lane.b32.xlu0 %v3037, 32
      %v3118 = vpop.permute.xlu0 %3117
      %3119 = vrot.lane.b32.xlu0 %v3038, 32
      %v3120 = vpop.permute.xlu0 %3119
      %3121 = vrot.lane.b32.xlu0 %v3039, 32
      %v3122 = vpop.permute.xlu0 %3121
      %3123 = vrot.lane.b32.xlu0 %v3040, 32
      %v3124 = vpop.permute.xlu0 %3123
      %3125 = vrot.lane.b32.xlu0 %v3041, 32
      %v3126 = vpop.permute.xlu0 %3125
      %3127 = vrot.lane.b32.xlu0 %v3042, 32
      %v3128 = vpop.permute.xlu0 %3127
      %3129 = vrot.lane.b32.xlu0 %v3043, 32
      %v3130 = vpop.permute.xlu0 %3129
      %3131 = vrot.lane.b32.xlu0 %v3044, 32
      %v3132 = vpop.permute.xlu0 %3131
      %3133 = vrot.lane.b32.xlu0 %v3045, 32
      %v3134 = vpop.permute.xlu0 %3133
      %3135 = vrot.lane.b32.xlu0 %v3046, 32
      %v3136 = vpop.permute.xlu0 %3135
      %3137 = vrot.lane.b32.xlu0 %v3047, 32
      %v3138 = vpop.permute.xlu0 %3137
      %3139 = vrot.lane.b32.xlu0 %v3048, 32
      %v3140 = vpop.permute.xlu0 %3139
      %3141 = vrot.lane.b32.xlu0 %v3049, 32
      %v3142 = vpop.permute.xlu0 %3141
      %3143 = vrot.lane.b32.xlu0 %v3050, 32
      %v3144 = vpop.permute.xlu0 %3143
      %3145 = vrot.lane.b32.xlu0 %v3051, 32
      %v3146 = vpop.permute.xlu0 %3145
      %3147 = vrot.lane.b32.xlu0 %v3052, 32
      %v3148 = vpop.permute.xlu0 %3147
      %vm3181 = vcmask 392448
      %3182 = vst.msk [vmem:[#allocation5] sm:$0xff] %vm3181, %v3086
      %3183 = vst.msk [vmem:[#allocation5 + $0x8] sm:$0xff] %vm3181, %v3088
      %3184 = vst.msk [vmem:[#allocation5 + $0x10] sm:$0xff] %vm3181, %v3090
      %3185 = vst.msk [vmem:[#allocation5 + $0x18] sm:$0xff] %vm3181, %v3092
      %3186 = vst.msk [vmem:[#allocation5 + $0x20] sm:$0xff] %vm3181, %v3094
      %3187 = vst.msk [vmem:[#allocation5 + $0x28] sm:$0xff] %vm3181, %v3096
      %3188 = vst.msk [vmem:[#allocation5 + $0x30] sm:$0xff] %vm3181, %v3098
      %3189 = vst.msk [vmem:[#allocation5 + $0x38] sm:$0xff] %vm3181, %v3100
      %3190 = vst.msk [vmem:[#allocation5 + $0x40] sm:$0xff] %vm3181, %v3102
      %3191 = vst.msk [vmem:[#allocation5 + $0x48] sm:$0xff] %vm3181, %v3104
      %3192 = vst.msk [vmem:[#allocation5 + $0x50] sm:$0xff] %vm3181, %v3106
      %3193 = vst.msk [vmem:[#allocation5 + $0x58] sm:$0xff] %vm3181, %v3108
      %3194 = vst.msk [vmem:[#allocation5 + $0x60] sm:$0xff] %vm3181, %v3110
      %3195 = vst.msk [vmem:[#allocation5 + $0x68] sm:$0xff] %vm3181, %v3112
      %3196 = vst.msk [vmem:[#allocation5 + $0x70] sm:$0xff] %vm3181, %v3114
      %3197 = vst.msk [vmem:[#allocation5 + $0x78] sm:$0xff] %vm3181, %v3116
      %3198 = vst.msk [vmem:[#allocation5 + $0x80] sm:$0xff] %vm3181, %v3118
      %3199 = vst.msk [vmem:[#allocation5 + $0x88] sm:$0xff] %vm3181, %v3120
      %3200 = vst.msk [vmem:[#allocation5 + $0x90] sm:$0xff] %vm3181, %v3122
      %3201 = vst.msk [vmem:[#allocation5 + $0x98] sm:$0xff] %vm3181, %v3124
      %3202 = vst.msk [vmem:[#allocation5 + $0xa0] sm:$0xff] %vm3181, %v3126
      %3203 = vst.msk [vmem:[#allocation5 + $0xa8] sm:$0xff] %vm3181, %v3128
      %3204 = vst.msk [vmem:[#allocation5 + $0xb0] sm:$0xff] %vm3181, %v3130
      %3205 = vst.msk [vmem:[#allocation5 + $0xb8] sm:$0xff] %vm3181, %v3132
      %3206 = vst.msk [vmem:[#allocation5 + $0xc0] sm:$0xff] %vm3181, %v3134
      %3207 = vst.msk [vmem:[#allocation5 + $0xc8] sm:$0xff] %vm3181, %v3136
      %3208 = vst.msk [vmem:[#allocation5 + $0xd0] sm:$0xff] %vm3181, %v3138
      %3209 = vst.msk [vmem:[#allocation5 + $0xd8] sm:$0xff] %vm3181, %v3140
      %3210 = vst.msk [vmem:[#allocation5 + $0xe0] sm:$0xff] %vm3181, %v3142
      %3211 = vst.msk [vmem:[#allocation5 + $0xe8] sm:$0xff] %vm3181, %v3144
      %3212 = vst.msk [vmem:[#allocation5 + $0xf0] sm:$0xff] %vm3181, %v3146
      %3213 = vst.msk [vmem:[#allocation5 + $0xf8] sm:$0xff] %vm3181, %v3148
      %v3214 = vld [vmem:[%s2690 + $0x1] sm:$0xff]
      %v3215 = vld [vmem:[%s2690 + $0x9] sm:$0xff]
      %v3216 = vld [vmem:[%s2690 + $0x19] sm:$0xff]
      %v3217 = vld [vmem:[%s2690 + $0x21] sm:$0xff]
      %v3218 = vld [vmem:[%s2690 + $0x31] sm:$0xff]
      %v3219 = vld [vmem:[%s2690 + $0x39] sm:$0xff]
      %v3220 = vld [vmem:[%s2690 + $0x49] sm:$0xff]
      %v3221 = vld [vmem:[%s2690 + $0x51] sm:$0xff]
      %v3222 = vld [vmem:[%s2690 + $0x61] sm:$0xff]
      %v3223 = vld [vmem:[%s2690 + $0x69] sm:$0xff]
      %v3224 = vld [vmem:[%s2690 + $0x79] sm:$0xff]
      %v3225 = vld [vmem:[%s2690 + $0x81] sm:$0xff]
      %v3226 = vld [vmem:[%s2690 + $0x91] sm:$0xff]
      %v3227 = vld [vmem:[%s2690 + $0x99] sm:$0xff]
      %v3228 = vld [vmem:[%s2690 + $0xa9] sm:$0xff]
      %v3229 = vld [vmem:[%s2690 + $0xb1] sm:$0xff]
      %v3230 = vld [vmem:[%s2690 + $0xc1] sm:$0xff]
      %v3231 = vld [vmem:[%s2690 + $0xc9] sm:$0xff]
      %v3232 = vld [vmem:[%s2690 + $0xd9] sm:$0xff]
      %v3233 = vld [vmem:[%s2690 + $0xe1] sm:$0xff]
      %v3234 = vld [vmem:[%s2690 + $0xf1] sm:$0xff]
      %v3235 = vld [vmem:[%s2690 + $0xf9] sm:$0xff]
      %v3236 = vld [vmem:[%s2690 + $0x109] sm:$0xff]
      %v3237 = vld [vmem:[%s2690 + $0x111] sm:$0xff]
      %v3238 = vld [vmem:[%s2690 + $0x121] sm:$0xff]
      %v3239 = vld [vmem:[%s2690 + $0x129] sm:$0xff]
      %v3240 = vld [vmem:[%s2690 + $0x139] sm:$0xff]
      %v3241 = vld [vmem:[%s2690 + $0x141] sm:$0xff]
      %v3242 = vld [vmem:[%s2690 + $0x151] sm:$0xff]
      %v3243 = vld [vmem:[%s2690 + $0x159] sm:$0xff]
      %v3244 = vld [vmem:[%s2690 + $0x169] sm:$0xff]
      %v3245 = vld [vmem:[%s2690 + $0x171] sm:$0xff]
      %3278 = vrot.lane.b32.xlu0 %v3214, 48
      %v3279 = vpop.permute.xlu0 %3278
      %3280 = vrot.lane.b32.xlu0 %v3215, 48
      %v3281 = vpop.permute.xlu0 %3280
      %3282 = vrot.lane.b32.xlu0 %v3216, 48
      %v3283 = vpop.permute.xlu0 %3282
      %3284 = vrot.lane.b32.xlu0 %v3217, 48
      %v3285 = vpop.permute.xlu0 %3284
      %3286 = vrot.lane.b32.xlu0 %v3218, 48
      %v3287 = vpop.permute.xlu0 %3286
      %3288 = vrot.lane.b32.xlu0 %v3219, 48
      %v3289 = vpop.permute.xlu0 %3288
      %3290 = vrot.lane.b32.xlu0 %v3220, 48
      %v3291 = vpop.permute.xlu0 %3290
      %3292 = vrot.lane.b32.xlu0 %v3221, 48
      %v3293 = vpop.permute.xlu0 %3292
      %3294 = vrot.lane.b32.xlu0 %v3222, 48
      %v3295 = vpop.permute.xlu0 %3294
      %3296 = vrot.lane.b32.xlu0 %v3223, 48
      %v3297 = vpop.permute.xlu0 %3296
      %3298 = vrot.lane.b32.xlu0 %v3224, 48
      %v3299 = vpop.permute.xlu0 %3298
      %3300 = vrot.lane.b32.xlu0 %v3225, 48
      %v3301 = vpop.permute.xlu0 %3300
      %3302 = vrot.lane.b32.xlu0 %v3226, 48
      %v3303 = vpop.permute.xlu0 %3302
      %3304 = vrot.lane.b32.xlu0 %v3227, 48
      %v3305 = vpop.permute.xlu0 %3304
      %3306 = vrot.lane.b32.xlu0 %v3228, 48
      %v3307 = vpop.permute.xlu0 %3306
      %3308 = vrot.lane.b32.xlu0 %v3229, 48
      %v3309 = vpop.permute.xlu0 %3308
      %3310 = vrot.lane.b32.xlu0 %v3230, 48
      %v3311 = vpop.permute.xlu0 %3310
      %3312 = vrot.lane.b32.xlu0 %v3231, 48
      %v3313 = vpop.permute.xlu0 %3312
      %3314 = vrot.lane.b32.xlu0 %v3232, 48
      %v3315 = vpop.permute.xlu0 %3314
      %3316 = vrot.lane.b32.xlu0 %v3233, 48
      %v3317 = vpop.permute.xlu0 %3316
      %3318 = vrot.lane.b32.xlu0 %v3234, 48
      %v3319 = vpop.permute.xlu0 %3318
      %3320 = vrot.lane.b32.xlu0 %v3235, 48
      %v3321 = vpop.permute.xlu0 %3320
      %3322 = vrot.lane.b32.xlu0 %v3236, 48
      %v3323 = vpop.permute.xlu0 %3322
      %3324 = vrot.lane.b32.xlu0 %v3237, 48
      %v3325 = vpop.permute.xlu0 %3324
      %3326 = vrot.lane.b32.xlu0 %v3238, 48
      %v3327 = vpop.permute.xlu0 %3326
      %3328 = vrot.lane.b32.xlu0 %v3239, 48
      %v3329 = vpop.permute.xlu0 %3328
      %3330 = vrot.lane.b32.xlu0 %v3240, 48
      %v3331 = vpop.permute.xlu0 %3330
      %3332 = vrot.lane.b32.xlu0 %v3241, 48
      %v3333 = vpop.permute.xlu0 %3332
      %3334 = vrot.lane.b32.xlu0 %v3242, 48
      %v3335 = vpop.permute.xlu0 %3334
      %3336 = vrot.lane.b32.xlu0 %v3243, 48
      %v3337 = vpop.permute.xlu0 %3336
      %3338 = vrot.lane.b32.xlu0 %v3244, 48
      %v3339 = vpop.permute.xlu0 %3338
      %3340 = vrot.lane.b32.xlu0 %v3245, 48
      %v3341 = vpop.permute.xlu0 %3340
      %vm3374 = vcmask 523648
      %3375 = vst.msk [vmem:[#allocation5] sm:$0xff] %vm3374, %v3279
      %3376 = vst.msk [vmem:[#allocation5 + $0x8] sm:$0xff] %vm3374, %v3281
      %3377 = vst.msk [vmem:[#allocation5 + $0x10] sm:$0xff] %vm3374, %v3283
      %3378 = vst.msk [vmem:[#allocation5 + $0x18] sm:$0xff] %vm3374, %v3285
      %3379 = vst.msk [vmem:[#allocation5 + $0x20] sm:$0xff] %vm3374, %v3287
      %3380 = vst.msk [vmem:[#allocation5 + $0x28] sm:$0xff] %vm3374, %v3289
      %3381 = vst.msk [vmem:[#allocation5 + $0x30] sm:$0xff] %vm3374, %v3291
      %3382 = vst.msk [vmem:[#allocation5 + $0x38] sm:$0xff] %vm3374, %v3293
      %3383 = vst.msk [vmem:[#allocation5 + $0x40] sm:$0xff] %vm3374, %v3295
      %3384 = vst.msk [vmem:[#allocation5 + $0x48] sm:$0xff] %vm3374, %v3297
      %3385 = vst.msk [vmem:[#allocation5 + $0x50] sm:$0xff] %vm3374, %v3299
      %3386 = vst.msk [vmem:[#allocation5 + $0x58] sm:$0xff] %vm3374, %v3301
      %3387 = vst.msk [vmem:[#allocation5 + $0x60] sm:$0xff] %vm3374, %v3303
      %3388 = vst.msk [vmem:[#allocation5 + $0x68] sm:$0xff] %vm3374, %v3305
      %3389 = vst.msk [vmem:[#allocation5 + $0x70] sm:$0xff] %vm3374, %v3307
      %3390 = vst.msk [vmem:[#allocation5 + $0x78] sm:$0xff] %vm3374, %v3309
      %3391 = vst.msk [vmem:[#allocation5 + $0x80] sm:$0xff] %vm3374, %v3311
      %3392 = vst.msk [vmem:[#allocation5 + $0x88] sm:$0xff] %vm3374, %v3313
      %3393 = vst.msk [vmem:[#allocation5 + $0x90] sm:$0xff] %vm3374, %v3315
      %3394 = vst.msk [vmem:[#allocation5 + $0x98] sm:$0xff] %vm3374, %v3317
      %3395 = vst.msk [vmem:[#allocation5 + $0xa0] sm:$0xff] %vm3374, %v3319
      %3396 = vst.msk [vmem:[#allocation5 + $0xa8] sm:$0xff] %vm3374, %v3321
      %3397 = vst.msk [vmem:[#allocation5 + $0xb0] sm:$0xff] %vm3374, %v3323
      %3398 = vst.msk [vmem:[#allocation5 + $0xb8] sm:$0xff] %vm3374, %v3325
      %3399 = vst.msk [vmem:[#allocation5 + $0xc0] sm:$0xff] %vm3374, %v3327
      %3400 = vst.msk [vmem:[#allocation5 + $0xc8] sm:$0xff] %vm3374, %v3329
      %3401 = vst.msk [vmem:[#allocation5 + $0xd0] sm:$0xff] %vm3374, %v3331
      %3402 = vst.msk [vmem:[#allocation5 + $0xd8] sm:$0xff] %vm3374, %v3333
      %3403 = vst.msk [vmem:[#allocation5 + $0xe0] sm:$0xff] %vm3374, %v3335
      %3404 = vst.msk [vmem:[#allocation5 + $0xe8] sm:$0xff] %vm3374, %v3337
      %3405 = vst.msk [vmem:[#allocation5 + $0xf0] sm:$0xff] %vm3374, %v3339
      %3406 = vst.msk [vmem:[#allocation5 + $0xf8] sm:$0xff] %vm3374, %v3341
      %v3407 = vld [vmem:[#allocation5] sm:$0xff]
      %v3408 = vld [vmem:[#allocation5 + $0x8] sm:$0xff]
      %v3409 = vld [vmem:[#allocation5 + $0x10] sm:$0xff]
      %v3410 = vld [vmem:[#allocation5 + $0x18] sm:$0xff]
      %v3411 = vld [vmem:[#allocation5 + $0x20] sm:$0xff]
      %v3412 = vld [vmem:[#allocation5 + $0x28] sm:$0xff]
      %v3413 = vld [vmem:[#allocation5 + $0x30] sm:$0xff]
      %v3414 = vld [vmem:[#allocation5 + $0x38] sm:$0xff]
      %v3415 = vld [vmem:[#allocation5 + $0x40] sm:$0xff]
      %v3416 = vld [vmem:[#allocation5 + $0x48] sm:$0xff]
      %v3417 = vld [vmem:[#allocation5 + $0x50] sm:$0xff]
      %v3418 = vld [vmem:[#allocation5 + $0x58] sm:$0xff]
      %v3419 = vld [vmem:[#allocation5 + $0x60] sm:$0xff]
      %v3420 = vld [vmem:[#allocation5 + $0x68] sm:$0xff]
      %v3421 = vld [vmem:[#allocation5 + $0x70] sm:$0xff]
      %v3422 = vld [vmem:[#allocation5 + $0x78] sm:$0xff]
      %v3423 = vld [vmem:[#allocation5 + $0x80] sm:$0xff]
      %v3424 = vld [vmem:[#allocation5 + $0x88] sm:$0xff]
      %v3425 = vld [vmem:[#allocation5 + $0x90] sm:$0xff]
      %v3426 = vld [vmem:[#allocation5 + $0x98] sm:$0xff]
      %v3427 = vld [vmem:[#allocation5 + $0xa0] sm:$0xff]
      %v3428 = vld [vmem:[#allocation5 + $0xa8] sm:$0xff]
      %v3429 = vld [vmem:[#allocation5 + $0xb0] sm:$0xff]
      %v3430 = vld [vmem:[#allocation5 + $0xb8] sm:$0xff]
      %v3431 = vld [vmem:[#allocation5 + $0xc0] sm:$0xff]
      %v3432 = vld [vmem:[#allocation5 + $0xc8] sm:$0xff]
      %v3433 = vld [vmem:[#allocation5 + $0xd0] sm:$0xff]
      %v3434 = vld [vmem:[#allocation5 + $0xd8] sm:$0xff]
      %v3435 = vld [vmem:[#allocation5 + $0xe0] sm:$0xff]
      %v3436 = vld [vmem:[#allocation5 + $0xe8] sm:$0xff]
      %v3437 = vld [vmem:[#allocation5 + $0xf0] sm:$0xff]
      %v3438 = vld [vmem:[#allocation5 + $0xf8] sm:$0xff]
      %v3439 = vld [vmem:[%s4] sm:$0xff]
      %v3440 = vld [vmem:[%s4 + $0x8] sm:$0xff]
      %v3441 = vld [vmem:[%s4 + $0x10] sm:$0xff]
      %v3442 = vld [vmem:[%s4 + $0x18] sm:$0xff]
      %v3443 = vld [vmem:[%s4 + $0x20] sm:$0xff]
      %v3444 = vld [vmem:[%s4 + $0x28] sm:$0xff]
      %v3445 = vld [vmem:[%s4 + $0x30] sm:$0xff]
      %v3446 = vld [vmem:[%s4 + $0x38] sm:$0xff]
      %v3447 = vld [vmem:[%s5] sm:$0x1]
      %v3449 = vlaneseq
      %v3450 = vshrl.u32 %v3449, 7
      %v3451 = vsub.s32 0, %v3450
      %v3452 = vrot.slane %v3447, %v3451
      %vm3454 = vcmask 523264
      %v3456 = vsel %vm3454, %v3407, 0
      %v3459 = vsel %vm3454, %v3408, 0
      %v3462 = vsel %vm3454, %v3409, 0
      %v3465 = vsel %vm3454, %v3410, 0
      %v3468 = vsel %vm3454, %v3411, 0
      %v3471 = vsel %vm3454, %v3412, 0
      %v3474 = vsel %vm3454, %v3413, 0
      %v3477 = vsel %vm3454, %v3414, 0
      %v3480 = vsel %vm3454, %v3415, 0
      %v3483 = vsel %vm3454, %v3416, 0
      %v3486 = vsel %vm3454, %v3417, 0
      %v3489 = vsel %vm3454, %v3418, 0
      %v3492 = vsel %vm3454, %v3419, 0
      %v3495 = vsel %vm3454, %v3420, 0
      %v3498 = vsel %vm3454, %v3421, 0
      %v3501 = vsel %vm3454, %v3422, 0
      %v3504 = vsel %vm3454, %v3423, 0
      %v3507 = vsel %vm3454, %v3424, 0
      %v3510 = vsel %vm3454, %v3425, 0
      %v3513 = vsel %vm3454, %v3426, 0
      %v3516 = vsel %vm3454, %v3427, 0
      %v3519 = vsel %vm3454, %v3428, 0
      %v3522 = vsel %vm3454, %v3429, 0
      %v3525 = vsel %vm3454, %v3430, 0
      %v3528 = vsel %vm3454, %v3431, 0
      %v3531 = vsel %vm3454, %v3432, 0
      %v3534 = vsel %vm3454, %v3433, 0
      %v3537 = vsel %vm3454, %v3434, 0
      %v3540 = vsel %vm3454, %v3435, 0
      %v3543 = vsel %vm3454, %v3436, 0
      %v3546 = vsel %vm3454, %v3437, 0
      %v3549 = vsel %vm3454, %v3438, 0
      %3551 = vmatprep.subr.mxu0 0.0
      %3552 = vmatpush1.msra.mxu0 0.0
      %3553 = vmatprep.subr.mxu0 0.0
      %3554 = vmatpush1.msra.mxu0 0.0
      %3555 = vmatprep.subr.mxu0 0.0
      %3556 = vmatpush1.msra.mxu0 0.0
      %3557 = vmatprep.subr.mxu0 0.0
      %3558 = vmatpush1.msra.mxu0 0.0
      %3559 = vmatprep.subr.mxu0 0.0
      %3560 = vmatpush1.msra.mxu0 0.0
      %3561 = vmatprep.subr.mxu0 0.0
      %3562 = vmatpush1.msra.mxu0 0.0
      %3563 = vmatprep.subr.mxu0 0.0
      %3564 = vmatpush1.msra.mxu0 0.0
      %3565 = vmatprep.subr.mxu0 0.0
      %3566 = vmatpush1.msra.mxu0 0.0
      %3567 = vmatprep.subr.mxu0 0.0
      %3568 = vmatpush1.msra.mxu0 %v3446
      %3569 = vmatprep.subr.mxu0 0.0
      %3570 = vmatpush1.msra.mxu0 %v3445
      %3571 = vmatprep.subr.mxu0 0.0
      %3572 = vmatpush1.msra.mxu0 %v3444
      %3573 = vmatprep.subr.mxu0 0.0
      %3574 = vmatpush1.msra.mxu0 %v3443
      %3575 = vmatprep.subr.mxu0 0.0
      %3576 = vmatpush1.msra.mxu0 %v3442
      %3577 = vmatprep.subr.mxu0 0.0
      %3578 = vmatpush1.msra.mxu0 %v3441
      %3579 = vmatprep.subr.mxu0 0.0
      %3580 = vmatpush1.msra.mxu0 %v3440
      %3581 = vmatprep.subr.mxu0 0.0
      %3582 = vmatpush1.msra.mxu0 %v3439
      %3583 = vmatprep.subr.mxu0 0.0
      %3584 = vmatpush2.msra.mxu0 0.0
      %3585 = vmatprep.subr.mxu0 0.0
      %3586 = vmatpush2.msra.mxu0 0.0
      %3587 = vmatprep.subr.mxu0 0.0
      %3588 = vmatpush2.msra.mxu0 0.0
      %3589 = vmatprep.subr.mxu0 0.0
      %3590 = vmatpush2.msra.mxu0 0.0
      %3591 = vmatprep.subr.mxu0 0.0
      %3592 = vmatpush2.msra.mxu0 0.0
      %3593 = vmatprep.subr.mxu0 0.0
      %3594 = vmatpush2.msra.mxu0 0.0
      %3595 = vmatprep.subr.mxu0 0.0
      %3596 = vmatpush2.msra.mxu0 0.0
      %3597 = vmatprep.subr.mxu0 0.0
      %3598 = vmatpush2.msra.mxu0 0.0
      %3599 = vmatprep.subr.mxu0 0.0
      %3600 = vmatpush2.msra.mxu0 0.0
      %3601 = vmatprep.subr.mxu0 0.0
      %3602 = vmatpush2.msra.mxu0 0.0
      %3603 = vmatprep.subr.mxu0 0.0
      %3604 = vmatpush2.msra.mxu0 0.0
      %3605 = vmatprep.subr.mxu0 0.0
      %3606 = vmatpush2.msra.mxu0 0.0
      %3607 = vmatprep.subr.mxu0 0.0
      %3608 = vmatpush2.msra.mxu0 0.0
      %3609 = vmatprep.subr.mxu0 0.0
      %3610 = vmatpush2.msra.mxu0 0.0
      %3611 = vmatprep.subr.mxu0 0.0
      %3612 = vmatpush2.msra.mxu0 0.0
      %3613 = vmatprep.subr.mxu0 0.0
      %3614 = vmatpush2.msra.mxu0 0.0
      %3615 = vmatprep.mubr.f32.mxu0 0.0
      %3616 = vmatmul.mubr.f32.gmra.mxu0 %v3456
      %v3617 = vpop.f32.mrf.mxu0
      %v3618 = vadd.f32 %v3452, %v3617
      %v3619 = vpop.f32.mrf.mxu0
      %3620 = vmatprep.mubr.f32.mxu0 0.0
      %3621 = vmatmul.mubr.f32.gmra.mxu0 %v3459
      %v3622 = vpop.f32.mrf.mxu0
      %v3623 = vadd.f32 %v3452, %v3622
      %v3624 = vpop.f32.mrf.mxu0
      %3625 = vmatprep.mubr.f32.mxu0 0.0
      %3626 = vmatmul.mubr.f32.gmra.mxu0 %v3462
      %v3627 = vpop.f32.mrf.mxu0
      %v3628 = vadd.f32 %v3452, %v3627
      %v3629 = vpop.f32.mrf.mxu0
      %3630 = vmatprep.mubr.f32.mxu0 0.0
      %3631 = vmatmul.mubr.f32.gmra.mxu0 %v3465
      %v3632 = vpop.f32.mrf.mxu0
      %v3633 = vadd.f32 %v3452, %v3632
      %v3634 = vpop.f32.mrf.mxu0
      %3635 = vmatprep.mubr.f32.mxu0 0.0
      %3636 = vmatmul.mubr.f32.gmra.mxu0 %v3468
      %v3637 = vpop.f32.mrf.mxu0
      %v3638 = vadd.f32 %v3452, %v3637
      %v3639 = vpop.f32.mrf.mxu0
      %3640 = vmatprep.mubr.f32.mxu0 0.0
      %3641 = vmatmul.mubr.f32.gmra.mxu0 %v3471
      %v3642 = vpop.f32.mrf.mxu0
      %v3643 = vadd.f32 %v3452, %v3642
      %v3644 = vpop.f32.mrf.mxu0
      %3645 = vmatprep.mubr.f32.mxu0 0.0
      %3646 = vmatmul.mubr.f32.gmra.mxu0 %v3474
      %v3647 = vpop.f32.mrf.mxu0
      %v3648 = vadd.f32 %v3452, %v3647
      %v3649 = vpop.f32.mrf.mxu0
      %3650 = vmatprep.mubr.f32.mxu0 0.0
      %3651 = vmatmul.mubr.f32.gmra.mxu0 %v3477
      %v3652 = vpop.f32.mrf.mxu0
      %v3653 = vadd.f32 %v3452, %v3652
      %v3654 = vpop.f32.mrf.mxu0
      %3655 = vmatprep.mubr.f32.mxu0 0.0
      %3656 = vmatmul.mubr.f32.gmra.mxu0 %v3480
      %v3657 = vpop.f32.mrf.mxu0
      %v3658 = vadd.f32 %v3452, %v3657
      %v3659 = vpop.f32.mrf.mxu0
      %3660 = vmatprep.mubr.f32.mxu0 0.0
      %3661 = vmatmul.mubr.f32.gmra.mxu0 %v3483
      %v3662 = vpop.f32.mrf.mxu0
      %v3663 = vadd.f32 %v3452, %v3662
      %v3664 = vpop.f32.mrf.mxu0
      %3665 = vmatprep.mubr.f32.mxu0 0.0
      %3666 = vmatmul.mubr.f32.gmra.mxu0 %v3486
      %v3667 = vpop.f32.mrf.mxu0
      %v3668 = vadd.f32 %v3452, %v3667
      %v3669 = vpop.f32.mrf.mxu0
      %3670 = vmatprep.mubr.f32.mxu0 0.0
      %3671 = vmatmul.mubr.f32.gmra.mxu0 %v3489
      %v3672 = vpop.f32.mrf.mxu0
      %v3673 = vadd.f32 %v3452, %v3672
      %v3674 = vpop.f32.mrf.mxu0
      %3675 = vmatprep.mubr.f32.mxu0 0.0
      %3676 = vmatmul.mubr.f32.gmra.mxu0 %v3492
      %v3677 = vpop.f32.mrf.mxu0
      %v3678 = vadd.f32 %v3452, %v3677
      %v3679 = vpop.f32.mrf.mxu0
      %3680 = vmatprep.mubr.f32.mxu0 0.0
      %3681 = vmatmul.mubr.f32.gmra.mxu0 %v3495
      %v3682 = vpop.f32.mrf.mxu0
      %v3683 = vadd.f32 %v3452, %v3682
      %v3684 = vpop.f32.mrf.mxu0
      %3685 = vmatprep.mubr.f32.mxu0 0.0
      %3686 = vmatmul.mubr.f32.gmra.mxu0 %v3498
      %v3687 = vpop.f32.mrf.mxu0
      %v3688 = vadd.f32 %v3452, %v3687
      %v3689 = vpop.f32.mrf.mxu0
      %3690 = vmatprep.mubr.f32.mxu0 0.0
      %3691 = vmatmul.mubr.f32.gmra.mxu0 %v3501
      %v3692 = vpop.f32.mrf.mxu0
      %v3693 = vadd.f32 %v3452, %v3692
      %v3694 = vpop.f32.mrf.mxu0
      %3695 = vmatprep.mubr.f32.mxu0 0.0
      %3696 = vmatmul.mubr.f32.gmra.mxu0 %v3504
      %v3697 = vpop.f32.mrf.mxu0
      %v3698 = vadd.f32 %v3452, %v3697
      %v3699 = vpop.f32.mrf.mxu0
      %3700 = vmatprep.mubr.f32.mxu0 0.0
      %3701 = vmatmul.mubr.f32.gmra.mxu0 %v3507
      %v3702 = vpop.f32.mrf.mxu0
      %v3703 = vadd.f32 %v3452, %v3702
      %v3704 = vpop.f32.mrf.mxu0
      %3705 = vmatprep.mubr.f32.mxu0 0.0
      %3706 = vmatmul.mubr.f32.gmra.mxu0 %v3510
      %v3707 = vpop.f32.mrf.mxu0
      %v3708 = vadd.f32 %v3452, %v3707
      %v3709 = vpop.f32.mrf.mxu0
      %3710 = vmatprep.mubr.f32.mxu0 0.0
      %3711 = vmatmul.mubr.f32.gmra.mxu0 %v3513
      %v3712 = vpop.f32.mrf.mxu0
      %v3713 = vadd.f32 %v3452, %v3712
      %v3714 = vpop.f32.mrf.mxu0
      %3715 = vmatprep.mubr.f32.mxu0 0.0
      %3716 = vmatmul.mubr.f32.gmra.mxu0 %v3516
      %v3717 = vpop.f32.mrf.mxu0
      %v3718 = vadd.f32 %v3452, %v3717
      %v3719 = vpop.f32.mrf.mxu0
      %3720 = vmatprep.mubr.f32.mxu0 0.0
      %3721 = vmatmul.mubr.f32.gmra.mxu0 %v3519
      %v3722 = vpop.f32.mrf.mxu0
      %v3723 = vadd.f32 %v3452, %v3722
      %v3724 = vpop.f32.mrf.mxu0
      %3725 = vmatprep.mubr.f32.mxu0 0.0
      %3726 = vmatmul.mubr.f32.gmra.mxu0 %v3522
      %v3727 = vpop.f32.mrf.mxu0
      %v3728 = vadd.f32 %v3452, %v3727
      %v3729 = vpop.f32.mrf.mxu0
      %3730 = vmatprep.mubr.f32.mxu0 0.0
      %3731 = vmatmul.mubr.f32.gmra.mxu0 %v3525
      %v3732 = vpop.f32.mrf.mxu0
      %v3733 = vadd.f32 %v3452, %v3732
      %v3734 = vpop.f32.mrf.mxu0
      %3735 = vmatprep.mubr.f32.mxu0 0.0
      %3736 = vmatmul.mubr.f32.gmra.mxu0 %v3528
      %v3737 = vpop.f32.mrf.mxu0
      %v3738 = vadd.f32 %v3452, %v3737
      %v3739 = vpop.f32.mrf.mxu0
      %3740 = vmatprep.mubr.f32.mxu0 0.0
      %3741 = vmatmul.mubr.f32.gmra.mxu0 %v3531
      %v3742 = vpop.f32.mrf.mxu0
      %v3743 = vadd.f32 %v3452, %v3742
      %v3744 = vpop.f32.mrf.mxu0
      %3745 = vmatprep.mubr.f32.mxu0 0.0
      %3746 = vmatmul.mubr.f32.gmra.mxu0 %v3534
      %v3747 = vpop.f32.mrf.mxu0
      %v3748 = vadd.f32 %v3452, %v3747
      %v3749 = vpop.f32.mrf.mxu0
      %3750 = vmatprep.mubr.f32.mxu0 0.0
      %3751 = vmatmul.mubr.f32.gmra.mxu0 %v3537
      %v3752 = vpop.f32.mrf.mxu0
      %v3753 = vadd.f32 %v3452, %v3752
      %v3754 = vpop.f32.mrf.mxu0
      %3755 = vmatprep.mubr.f32.mxu0 0.0
      %3756 = vmatmul.mubr.f32.gmra.mxu0 %v3540
      %v3757 = vpop.f32.mrf.mxu0
      %v3758 = vadd.f32 %v3452, %v3757
      %v3759 = vpop.f32.mrf.mxu0
      %3760 = vmatprep.mubr.f32.mxu0 0.0
      %3761 = vmatmul.mubr.f32.gmra.mxu0 %v3543
      %v3762 = vpop.f32.mrf.mxu0
      %v3763 = vadd.f32 %v3452, %v3762
      %v3764 = vpop.f32.mrf.mxu0
      %3765 = vmatprep.mubr.f32.mxu0 0.0
      %3766 = vmatmul.mubr.f32.gmra.mxu0 %v3546
      %v3767 = vpop.f32.mrf.mxu0
      %v3768 = vadd.f32 %v3452, %v3767
      %v3769 = vpop.f32.mrf.mxu0
      %3770 = vmatprep.mubr.f32.mxu0 0.0
      %3771 = vmatmul.mubr.f32.gmra.mxu0 %v3549
      %v3772 = vpop.f32.mrf.mxu0
      %v3773 = vadd.f32 %v3452, %v3772
      %v3774 = vpop.f32.mrf.mxu0
      %3775 = vdwg.mxu0
      %v3776 = vadd.f32 %v3618, %v272
      %v3777 = vadd.f32 %v3623, %v273
      %v3778 = vadd.f32 %v3628, %v274
      %v3779 = vadd.f32 %v3633, %v275
      %v3780 = vadd.f32 %v3638, %v276
      %v3781 = vadd.f32 %v3643, %v277
      %v3782 = vadd.f32 %v3648, %v278
      %v3783 = vadd.f32 %v3653, %v279
      %v3784 = vadd.f32 %v3658, %v280
      %v3785 = vadd.f32 %v3663, %v281
      %v3786 = vadd.f32 %v3668, %v282
      %v3787 = vadd.f32 %v3673, %v283
      %v3788 = vadd.f32 %v3678, %v284
      %v3789 = vadd.f32 %v3683, %v285
      %v3790 = vadd.f32 %v3688, %v286
      %v3791 = vadd.f32 %v3693, %v287
      %v3792 = vadd.f32 %v3698, %v288
      %v3793 = vadd.f32 %v3703, %v289
      %v3794 = vadd.f32 %v3708, %v290
      %v3795 = vadd.f32 %v3713, %v291
      %v3796 = vadd.f32 %v3718, %v292
      %v3797 = vadd.f32 %v3723, %v293
      %v3798 = vadd.f32 %v3728, %v294
      %v3799 = vadd.f32 %v3733, %v295
      %v3800 = vadd.f32 %v3738, %v296
      %v3801 = vadd.f32 %v3743, %v297
      %v3802 = vadd.f32 %v3748, %v298
      %v3803 = vadd.f32 %v3753, %v299
      %v3804 = vadd.f32 %v3758, %v300
      %v3805 = vadd.f32 %v3763, %v301
      %v3806 = vadd.f32 %v3768, %v302
      %v3807 = vadd.f32 %v3773, %v303
      %3808 = vst.msk [vmem:[%s271] sm:$0xff] %vm337, %v3776
      %3809 = vst.msk [vmem:[%s271 + $0x8] sm:$0xff] %vm337, %v3777
      %3810 = vst.msk [vmem:[%s271 + $0x10] sm:$0xff] %vm337, %v3778
      %3811 = vst.msk [vmem:[%s271 + $0x18] sm:$0xff] %vm337, %v3779
      %3812 = vst.msk [vmem:[%s271 + $0x20] sm:$0xff] %vm337, %v3780
      %3813 = vst.msk [vmem:[%s271 + $0x28] sm:$0xff] %vm337, %v3781
      %3814 = vst.msk [vmem:[%s271 + $0x30] sm:$0xff] %vm337, %v3782
      %3815 = vst.msk [vmem:[%s271 + $0x38] sm:$0xff] %vm337, %v3783
      %3816 = vst.msk [vmem:[%s271 + $0x40] sm:$0xff] %vm337, %v3784
      %3817 = vst.msk [vmem:[%s271 + $0x48] sm:$0xff] %vm337, %v3785
      %3818 = vst.msk [vmem:[%s271 + $0x50] sm:$0xff] %vm337, %v3786
      %3819 = vst.msk [vmem:[%s271 + $0x58] sm:$0xff] %vm337, %v3787
      %3820 = vst.msk [vmem:[%s271 + $0x60] sm:$0xff] %vm337, %v3788
      %3821 = vst.msk [vmem:[%s271 + $0x68] sm:$0xff] %vm337, %v3789
      %3822 = vst.msk [vmem:[%s271 + $0x70] sm:$0xff] %vm337, %v3790
      %3823 = vst.msk [vmem:[%s271 + $0x78] sm:$0xff] %vm337, %v3791
      %3824 = vst.msk [vmem:[%s271 + $0x80] sm:$0xff] %vm337, %v3792
      %3825 = vst.msk [vmem:[%s271 + $0x88] sm:$0xff] %vm337, %v3793
      %3826 = vst.msk [vmem:[%s271 + $0x90] sm:$0xff] %vm337, %v3794
      %3827 = vst.msk [vmem:[%s271 + $0x98] sm:$0xff] %vm337, %v3795
      %3828 = vst.msk [vmem:[%s271 + $0xa0] sm:$0xff] %vm337, %v3796
      %3829 = vst.msk [vmem:[%s271 + $0xa8] sm:$0xff] %vm337, %v3797
      %3830 = vst.msk [vmem:[%s271 + $0xb0] sm:$0xff] %vm337, %v3798
      %3831 = vst.msk [vmem:[%s271 + $0xb8] sm:$0xff] %vm337, %v3799
      %3832 = vst.msk [vmem:[%s271 + $0xc0] sm:$0xff] %vm337, %v3800
      %3833 = vst.msk [vmem:[%s271 + $0xc8] sm:$0xff] %vm337, %v3801
      %3834 = vst.msk [vmem:[%s271 + $0xd0] sm:$0xff] %vm337, %v3802
      %3835 = vst.msk [vmem:[%s271 + $0xd8] sm:$0xff] %vm337, %v3803
      %3836 = vst.msk [vmem:[%s271 + $0xe0] sm:$0xff] %vm337, %v3804
      %3837 = vst.msk [vmem:[%s271 + $0xe8] sm:$0xff] %vm337, %v3805
      %3838 = vst.msk [vmem:[%s271 + $0xf0] sm:$0xff] %vm337, %v3806
      %3839 = vst.msk [vmem:[%s271 + $0xf8] sm:$0xff] %vm337, %v3807
      %p3840 = scmp.lt.s32.totalorder %s17, 1
      %s3841 = scalar_select %p3840, %s17, 1
      %s3842 = smul.addr %s3841, 32
      %s3843 = smul.addr %s3842, 8
      %s3844 = scalar_lea.vmem %s6, %s3843
      // Predicated region
      $region45: #{tpu_custom_call.1} parent=43 // pred_check
        %p3845 = pneg %p171
      $region46: #{tpu_custom_call.1} parent=43 // pred_check_branch
        %3847 = sbr.rel (%p3845) target = $region48
      $region47: #{tpu_custom_call.1} parent=43 // pred_region
        _
      $region48: #{tpu_custom_call.1} parent=43 // pred_fallthru
        _
    $region44: #{tpu_custom_call.1} parent=5 // pred_fallthru
      _
    %p3848 = scmp.le.s32.totalorder 2, %s12
    // Predicated region
    $region49: #{tpu_custom_call.1} parent=5 // pred_check
      %p3849 = pneg %p3848
    $region50: #{tpu_custom_call.1} parent=5 // pred_check_branch
      %3851 = sbr.rel (%p3849) target = $region52
    $region51: #{tpu_custom_call.1} parent=5 // pred_region
      %s3852 = ssub.s32 %s12, 2
      // Predicated region
      $region53: #{tpu_custom_call.1} parent=51 // pred_check
        %p3853 = pneg %p177
      $region54: #{tpu_custom_call.1} parent=51 // pred_check_branch
        %3855 = sbr.rel (%p3853) target = $region56
      $region55: #{tpu_custom_call.1} parent=51 // pred_region
        %p3856 = scmp.lt.s32.totalorder %s18, 1
        %s3857 = scalar_select %p3856, %s18, 1
        %s3858 = smul.addr %s3857, 32
        %s3859 = smul.addr %s3858, 8
        %s3860 = scalar_lea.vmem %s6, %s3859
      $region56: #{tpu_custom_call.1} parent=51 // pred_fallthru
        _
    $region52: #{tpu_custom_call.1} parent=5 // pred_fallthru
      _
  $region6: #{tpu_custom_call.1} parent=0 // loop_footer
    %s16 = sadd.s32 1, %s12
  $region7: #{tpu_custom_call.1} parent=0 // loop_footer_branch
    %11 = sbr.rel target = $region3
  $region8: #{tpu_custom_call.1} parent=0 // loop_exit
    _

</llo_original>
